<compile_context>
chip_gen: v5e
topology: v5e:2x2
jax: 0.10.0
libtpu: 0.0.40
codegen_flags: <defaults>
</compile_context>

<pallas_src>
import functools

import jax
import jax.numpy as jnp
from jax.experimental import pallas as pl
from jax.experimental.pallas import tpu as pltpu

KW = 4            # conv kernel size (kw in the PyTorch module)
PADW = 1          # padding
NEG_SLOPE = 0.2   # LeakyReLU negative slope
BN_EPS = 1e-5     # BatchNorm2d default eps
VMEM_LIMIT = 32 * 1024 * 1024   # explicit scoped-VMEM budget (safe on v5e/v6e/v7x)


def _round_up(x, m):
    return (x + m - 1) // m * m


def _pick_tiles(M, K, cout):
    """MXU/lane-friendly tile sizes; blocks obey the (8,128) constraint."""
    tm = min(512, _round_up(M, 8))
    m_pad = _round_up(M, tm)
    c_pad = _round_up(cout, 128)
    tn = 256 if c_pad % 256 == 0 else 128
    if K % 128 == 0:
        tk = next(t for t in (512, 384, 256, 128) if K % t == 0)
    else:
        tk = K   # small first-layer K (= kh*kw*input_nc); single reduction step
    return tm, tk, tn, m_pad, c_pad


# ---------------------------------------------------------------------------
# Pallas kernels
# ---------------------------------------------------------------------------
def _conv_kernel(p_ref, w_ref, b_ref, *rest, apply_lrelu, n_k):
    """Tiled (tm,tk)@(tk,tn) conv-as-matmul with VMEM f32 accumulator.

    Epilogue (last K step): add bias, optionally LeakyReLU, and — for BN
    layers — emit per-tile (sum, sum_of_squares) over the M rows so the
    BatchNorm stats pass does not have to re-read the activation from HBM.
    """
    if len(rest) == 3:
        o_ref, stats_ref, acc_ref = rest
    else:
        o_ref, acc_ref = rest
        stats_ref = None

    k = pl.program_id(2)

    @pl.when(k == 0)
    def _init():
        acc_ref[...] = jnp.zeros_like(acc_ref)

    acc_ref[...] += jnp.dot(p_ref[...], w_ref[...],
                            preferred_element_type=jnp.float32)

    @pl.when(k == n_k - 1)
    def _epilogue():
        y = acc_ref[...] + b_ref[...]                 # (tm, tn) + (1, tn)
        if stats_ref is not None:
            s1 = jnp.sum(y, axis=0, keepdims=True)    # (1, tn)
            s2 = jnp.sum(y * y, axis=0, keepdims=True)
            stats_ref[...] = jnp.concatenate([s1, s2], axis=0)[None]  # (1,2,tn)
        if apply_lrelu:
            y = jnp.where(y >= 0, y, NEG_SLOPE * y)
        o_ref[...] = y.astype(o_ref.dtype)


def _bn_apply_kernel(x_ref, stat_ref, g_ref, b_ref, o_ref, *, inv_m):
    """BatchNorm2d (batch stats, biased variance) + LeakyReLU(0.2), per tile."""
    mean = stat_ref[0:1, :] * inv_m
    ex2 = stat_ref[1:2, :] * inv_m
    var = jnp.maximum(ex2 - mean * mean, 0.0)
    scale = jax.lax.rsqrt(var + BN_EPS) * g_ref[...]
    y = (x_ref[...] - mean) * scale + b_ref[...]
    o_ref[...] = jnp.where(y >= 0, y, NEG_SLOPE * y).astype(o_ref.dtype)


# ---------------------------------------------------------------------------
# pallas_call wrappers
# ---------------------------------------------------------------------------
def conv_matmul(patches, w_mat, b_row, *, apply_lrelu, emit_stats, tm, tk, tn):
    m_pad, K = patches.shape
    c_pad = w_mat.shape[1]
    gm, gn, gk = m_pad // tm, c_pad // tn, K // tk

    out_shape = [jax.ShapeDtypeStruct((m_pad, c_pad), jnp.float32)]
    out_specs = [pl.BlockSpec((tm, tn), lambda i, j, k: (i, j))]
    if emit_stats:
        out_shape.append(jax.ShapeDtypeStruct((gm, 2, c_pad), jnp.float32))
        out_specs.append(pl.BlockSpec((1, 2, tn), lambda i, j, k: (i, 0, j)))

    kernel = functools.partial(_conv_kernel, apply_lrelu=apply_lrelu, n_k=gk)
    outs = pl.pallas_call(
        kernel,
        out_shape=out_shape,
        grid=(gm, gn, gk),
        in_specs=[
            pl.BlockSpec((tm, tk), lambda i, j, k: (i, k)),   # patches
            pl.BlockSpec((tk, tn), lambda i, j, k: (k, j)),   # weights
            pl.BlockSpec((1, tn), lambda i, j, k: (0, j)),    # bias row
        ],
        out_specs=out_specs,
        scratch_shapes=[pltpu.VMEM((tm, tn), jnp.float32)],
        compiler_params=pltpu.CompilerParams(
            dimension_semantics=("parallel", "parallel", "arbitrary"),
            vmem_limit_bytes=VMEM_LIMIT),
    )(patches, w_mat, b_row)
    if emit_stats:
        return outs[0], outs[1]
    return outs[0], None


def bn_apply(y_pad, stats, gamma_row, beta_row, *, inv_m, tm, tn):
    m_pad, c_pad = y_pad.shape
    kernel = functools.partial(_bn_apply_kernel, inv_m=inv_m)
    return pl.pallas_call(
        kernel,
        out_shape=jax.ShapeDtypeStruct((m_pad, c_pad), jnp.float32),
        grid=(m_pad // tm, c_pad // tn),
        in_specs=[
            pl.BlockSpec((tm, tn), lambda i, j: (i, j)),      # activation tile
            pl.BlockSpec((2, tn), lambda i, j: (0, j)),       # (sum, sumsq)
            pl.BlockSpec((1, tn), lambda i, j: (0, j)),       # gamma
            pl.BlockSpec((1, tn), lambda i, j: (0, j)),       # beta
        ],
        out_specs=pl.BlockSpec((tm, tn), lambda i, j: (i, j)),
        compiler_params=pltpu.CompilerParams(
            dimension_semantics=("parallel", "parallel"),
            vmem_limit_bytes=VMEM_LIMIT),
    )(y_pad, stats, gamma_row, beta_row)


# ---------------------------------------------------------------------------
# Glue: im2col, parameter init, full forward
# ---------------------------------------------------------------------------
def _im2col(x_nhwc, kh, kw, stride, pad):
    N, H, W, C = x_nhwc.shape
    xp = jnp.pad(x_nhwc, ((0, 0), (pad, pad), (pad, pad), (0, 0)))
    Ho = (H + 2 * pad - kh) // stride + 1
    Wo = (W + 2 * pad - kw) // stride + 1
    cols = []
    for i in range(kh):
        for j in range(kw):
            cols.append(
                xp[:,
                   i:i + stride * (Ho - 1) + 1:stride,
                   j:j + stride * (Wo - 1) + 1:stride,
                   :])
    p = jnp.stack(cols, axis=3)                 # (N, Ho, Wo, kh*kw, C)
    return p.reshape(N * Ho * Wo, kh * kw * C), N, Ho, Wo


def init_params(key, input_nc, ndf=64, n_layers=3):
    """Deterministic synthetic parameters matching the module's conv shapes.

    norm_layer = nn.BatchNorm2d  =>  use_bias = False for the inner convs.
    """
    keys = jax.random.split(key, 4 + 3 * n_layers + 4)
    ki = [0]

    def nk():
        k = keys[ki[0]]
        ki[0] += 1
        return k

    layers = []
    # model0: Conv(input_nc -> ndf, stride 2, bias) + LeakyReLU
    layers.append(dict(
        w=0.05 * jax.random.normal(nk(), (ndf, input_nc, KW, KW), jnp.float32),
        b=0.05 * jax.random.normal(nk(), (ndf,), jnp.float32),
        stride=2))

    nf_mult = 1
    for n in range(1, n_layers):
        nf_mult_prev = nf_mult
        nf_mult = min(2 ** n, 8)
        cin, cout = ndf * nf_mult_prev, ndf * nf_mult
        layers.append(dict(
            w=0.05 * jax.random.normal(nk(), (cout, cin, KW, KW), jnp.float32),
            b=jnp.zeros((cout,), jnp.float32),          # use_bias=False
            gamma=1.0 + 0.1 * jax.random.normal(nk(), (cout,), jnp.float32),
            beta=0.1 * jax.random.normal(nk(), (cout,), jnp.float32),
            stride=2))

    nf_mult_prev = nf_mult
    nf_mult = min(2 ** n_layers, 8)
    cin, cout = ndf * nf_mult_prev, ndf * nf_mult
    layers.append(dict(
        w=0.05 * jax.random.normal(nk(), (cout, cin, KW, KW), jnp.float32),
        b=jnp.zeros((cout,), jnp.float32),
        gamma=1.0 + 0.1 * jax.random.normal(nk(), (cout,), jnp.float32),
        beta=0.1 * jax.random.normal(nk(), (cout,), jnp.float32),
        stride=1))

    # final: Conv(ndf*nf_mult -> 1, stride 1, bias), no norm, no activation
    layers.append(dict(
        w=0.05 * jax.random.normal(nk(), (1, cout, KW, KW), jnp.float32),
        b=0.05 * jax.random.normal(nk(), (1,), jnp.float32),
        stride=1))
    return layers


def nlayer_discriminator_forward(x_nchw, params):
    """Returns (res[1:], out) exactly like the PyTorch module."""
    x = jnp.transpose(x_nchw, (0, 2, 3, 1))   # NCHW -> NHWC, once
    feats = []
    final = None
    n_total = len(params)
    for idx, layer in enumerate(params):
        w, b, stride = layer["w"], layer["b"], layer["stride"]
        cout, cin, kh, kw = w.shape
        has_bn = "gamma" in layer

        # TODO(synk): build the (tm, kh*kw*cin) patch tiles inside the Pallas
        # kernel (windowed input BlockSpec / manual DMA of padded NHWC rows)
        # instead of this XLA im2col, to avoid the kh*kw HBM blow-up.
        patches, N, Ho, Wo = _im2col(x, kh, kw, stride, PADW)
        M, K = patches.shape

        tm, tk, tn, m_pad, c_pad = _pick_tiles(M, K, cout)
        if m_pad != M:
            # Zero rows contribute exactly 0 to the BN sums (BN layers have
            # zero bias), so fused statistics stay exact; rows are sliced off.
            patches = jnp.pad(patches, ((0, m_pad - M), (0, 0)))

        w_mat = jnp.transpose(w, (2, 3, 1, 0)).reshape(K, cout)
        w_mat = jnp.pad(w_mat, ((0, 0), (0, c_pad - cout)))      # lane-dense Cout
        b_row = jnp.pad(b.reshape(1, cout), ((0, 0), (0, c_pad - cout)))

        y_pad, stats_part = conv_matmul(
            patches, w_mat, b_row,
            apply_lrelu=(idx == 0), emit_stats=has_bn, tm=tm, tk=tk, tn=tn)

        if has_bn:
            stats = jnp.sum(stats_part, axis=0)    # (2, c_pad) — tiny reduction
            g_row = jnp.pad(layer["gamma"].reshape(1, cout),
                            ((0, 0), (0, c_pad - cout)))
            be_row = jnp.pad(layer["beta"].reshape(1, cout),
                             ((0, 0), (0, c_pad - cout)))
            y_pad = bn_apply(y_pad, stats, g_row, be_row,
                             inv_m=1.0 / M, tm=tm, tn=tn)

        y = y_pad[:M, :cout]
        x = y.reshape(N, Ho, Wo, cout)
        out_nchw = jnp.transpose(x, (0, 3, 1, 2))   # one transpose per returned map
        if idx == n_total - 1:
            final = out_nchw
        else:
            feats.append(out_nchw)
    return feats, final


# ---------------------------------------------------------------------------
# Pure-JAX reference (for correctness check only)
# ---------------------------------------------------------------------------
def reference_forward(x_nchw, params):
    x = x_nchw
    feats = []
    final = None
    for idx, layer in enumerate(params):
        w, b, s = layer["w"], layer["b"], layer["stride"]
        y = jax.lax.conv_general_dilated(
            x, w, (s, s), ((PADW, PADW), (PADW, PADW)),
            dimension_numbers=("NCHW", "OIHW", "NCHW"),
            precision=jax.lax.Precision.HIGHEST)
        y = y + b[None, :, None, None]
        if "gamma" in layer:
            mean = jnp.mean(y, axis=(0, 2, 3), keepdims=True)
            var = jnp.mean((y - mean) ** 2, axis=(0, 2, 3), keepdims=True)
            y = (y - mean) * jax.lax.rsqrt(var + BN_EPS)
            y = y * layer["gamma"][None, :, None, None] + layer["beta"][None, :, None, None]
            y = jnp.where(y >= 0, y, NEG_SLOPE * y)
        elif idx == 0:
            y = jnp.where(y >= 0, y, NEG_SLOPE * y)
        x = y
        if idx == len(params) - 1:
            final = y
        else:
            feats.append(y)
    return feats, final


if __name__ == "__main__":
    # Small but valid shapes: spatial 32 so the 4x4 / stride pattern stays >= 1.
    batch, input_nc, ndf, n_layers, H, W = 2, 3, 8, 3, 32, 32

    key = jax.random.PRNGKey(0)
    kx, kp = jax.random.split(key)
    x = jax.random.normal(kx, (batch, input_nc, H, W), jnp.float32)
    params = init_params(kp, input_nc, ndf=ndf, n_layers=n_layers)

    fwd = jax.jit(lambda inp: nlayer_discriminator_forward(inp, params))
    feats, out = fwd(x)
    jax.block_until_ready(out)
    for f in feats:
        jax.block_until_ready(f)

    # Correctness check against plain-JAX reference (loose tol: MXU rounding).
    feats_ref, out_ref = reference_forward(x, params)
    for a, r in zip(feats + [out], feats_ref + [out_ref]):
        assert a.shape == r.shape, (a.shape, r.shape)
        err = float(jnp.max(jnp.abs(a - r)))
        assert err < 2e-2, err

    print("KERNEL_OK")
</pallas_src>

<mosaic_0001>
module attributes {stable_mosaic.version = 11 : i64} {
  func.func @_conv_kernel(%arg0: i32, %arg1: i32, %arg2: i32, %arg3: memref<512x48xf32, #tpu.memory_space<vmem>>, %arg4: memref<48x128xf32, #tpu.memory_space<vmem>>, %arg5: memref<1x128xf32, #tpu.memory_space<vmem>>, %arg6: memref<512x128xf32, #tpu.memory_space<vmem>>, %arg7: memref<512x128xf32, #tpu.memory_space<vmem>>) attributes {dimension_semantics = [#tpu.dimension_semantics<parallel>, #tpu.dimension_semantics<parallel>, #tpu.dimension_semantics<arbitrary>], iteration_bounds = array<i64: 1, 1, 1>, scalar_prefetch = 0 : i64, scratch_operands = 1 : i64, tpu.core_type = #tpu.core_type<tc>, window_params = [{transform_indices = @transform_0, window_bounds = array<i64: 512, 48>}, {transform_indices = @transform_1, window_bounds = array<i64: 48, 128>}, {transform_indices = @transform_2, window_bounds = array<i64: 1, 128>}, {transform_indices = @transform_3, window_bounds = array<i64: 512, 128>}]} {
    %c0_i32 = arith.constant 0 : i32
    %0 = arith.cmpi eq, %arg2, %c0_i32 : i32
    %1 = arith.extui %0 : i1 to i32
    %c0_i32_0 = arith.constant 0 : i32
    %2 = arith.cmpi ne, %1, %c0_i32_0 : i32
    scf.if %2 {
      %cst_10 = arith.constant 0.000000e+00 : f32
      %12 = vector.broadcast %cst_10 : f32 to vector<512x128xf32>
      %c0_11 = arith.constant 0 : index
      %c0_12 = arith.constant 0 : index
      %13 = vector.load %arg7[%c0_11, %c0_12] : memref<512x128xf32, #tpu.memory_space<vmem>>, vector<512x128xf32>
      tpu.vector_store %arg7[%c0_11, %c0_12], %12 {strides = array<i32>} : memref<512x128xf32, #tpu.memory_space<vmem>>, vector<512x128xf32>,
    } else {
    }
    %c0 = arith.constant 0 : index
    %c0_1 = arith.constant 0 : index
    %3 = vector.load %arg7[%c0, %c0_1] : memref<512x128xf32, #tpu.memory_space<vmem>>, vector<512x128xf32>
    %c0_2 = arith.constant 0 : index
    %c0_3 = arith.constant 0 : index
    %4 = vector.load %arg3[%c0_2, %c0_3] : memref<512x48xf32, #tpu.memory_space<vmem>>, vector<512x48xf32>
    %c0_4 = arith.constant 0 : index
    %c0_5 = arith.constant 0 : index
    %5 = vector.load %arg4[%c0_4, %c0_5] : memref<48x128xf32, #tpu.memory_space<vmem>>, vector<48x128xf32>
    %cst = arith.constant dense<0.000000e+00> : vector<512x128xf32>
    %6 = tpu.matmul %4, %5, %cst {dimension_numbers = #tpu.dot_dimension_numbers<[1], [0], [0], [1], [0, 0, 1, 1], [], []>} : vector<512x48xf32>, vector<48x128xf32>, vector<512x128xf32> -> vector<512x128xf32>
    %7 = arith.addf %3, %6 : vector<512x128xf32>
    %c0_6 = arith.constant 0 : index
    %c0_7 = arith.constant 0 : index
    %8 = vector.load %arg7[%c0_6, %c0_7] : memref<512x128xf32, #tpu.memory_space<vmem>>, vector<512x128xf32>
    tpu.vector_store %arg7[%c0_6, %c0_7], %7 {strides = array<i32>} : memref<512x128xf32, #tpu.memory_space<vmem>>, vector<512x128xf32>,
    %c0_i32_8 = arith.constant 0 : i32
    %9 = arith.cmpi eq, %arg2, %c0_i32_8 : i32
    %10 = arith.extui %9 : i1 to i32
    %c0_i32_9 = arith.constant 0 : i32
    %11 = arith.cmpi ne, %10, %c0_i32_9 : i32
    scf.if %11 {
      %c0_10 = arith.constant 0 : index
      %c0_11 = arith.constant 0 : index
      %12 = vector.load %arg7[%c0_10, %c0_11] : memref<512x128xf32, #tpu.memory_space<vmem>>, vector<512x128xf32>
      %c0_12 = arith.constant 0 : index
      %c0_13 = arith.constant 0 : index
      %13 = vector.load %arg5[%c0_12, %c0_13] : memref<1x128xf32, #tpu.memory_space<vmem>>, vector<1x128xf32>
      %14 = vector.broadcast %13 : vector<1x128xf32> to vector<512x128xf32>
      %15 = arith.addf %12, %14 : vector<512x128xf32>
      %cst_14 = arith.constant 0.000000e+00 : f32
      %16 = vector.broadcast %cst_14 : f32 to vector<512x128xf32>
      %17 = arith.cmpf oge, %15, %16 : vector<512x128xf32>
      %cst_15 = arith.constant 2.000000e-01 : f32
      %18 = vector.broadcast %cst_15 : f32 to vector<512x128xf32>
      %19 = arith.mulf %18, %15 : vector<512x128xf32>
      %20 = arith.select %17, %15, %19 : vector<512x128xi1>, vector<512x128xf32>
      %c0_16 = arith.constant 0 : index
      %c0_17 = arith.constant 0 : index
      %21 = vector.load %arg6[%c0_16, %c0_17] : memref<512x128xf32, #tpu.memory_space<vmem>>, vector<512x128xf32>
      tpu.vector_store %arg6[%c0_16, %c0_17], %20 {strides = array<i32>} : memref<512x128xf32, #tpu.memory_space<vmem>>, vector<512x128xf32>,
    } else {
    }
    return
  }
  func.func @transform_0(%arg0: i32, %arg1: i32, %arg2: i32) -> (i32, i32) {
    %c0_i32 = arith.constant 0 : i32
    return %arg0, %arg2 : i32, i32
  }
  func.func @transform_1(%arg0: i32, %arg1: i32, %arg2: i32) -> (i32, i32) {
    %c0_i32 = arith.constant 0 : i32
    return %arg2, %arg1 : i32, i32
  }
  func.func @transform_2(%arg0: i32, %arg1: i32, %arg2: i32) -> (i32, i32) {
    %c0_i32 = arith.constant 0 : i32
    %c0_i32_0 = arith.constant 0 : i32
    return %c0_i32, %arg1 : i32, i32
  }
  func.func @transform_3(%arg0: i32, %arg1: i32, %arg2: i32) -> (i32, i32) {
    %c0_i32 = arith.constant 0 : i32
    return %arg0, %arg1 : i32, i32
  }
}

module attributes {stable_mosaic.version = 11 : i64} {
  func.func @_conv_kernel(%arg0: i32, %arg1: i32, %arg2: i32, %arg3: memref<128x128xf32, #tpu.memory_space<vmem>>, %arg4: memref<128x128xf32, #tpu.memory_space<vmem>>, %arg5: memref<1x128xf32, #tpu.memory_space<vmem>>, %arg6: memref<128x128xf32, #tpu.memory_space<vmem>>, %arg7: memref<1x2x128xf32, #tpu.memory_space<vmem>>, %arg8: memref<128x128xf32, #tpu.memory_space<vmem>>) attributes {dimension_semantics = [#tpu.dimension_semantics<parallel>, #tpu.dimension_semantics<parallel>, #tpu.dimension_semantics<arbitrary>], iteration_bounds = array<i64: 1, 1, 1>, scalar_prefetch = 0 : i64, scratch_operands = 1 : i64, tpu.core_type = #tpu.core_type<tc>, window_params = [{transform_indices = @transform_0, window_bounds = array<i64: 128, 128>}, {transform_indices = @transform_1, window_bounds = array<i64: 128, 128>}, {transform_indices = @transform_2, window_bounds = array<i64: 1, 128>}, {transform_indices = @transform_3, window_bounds = array<i64: 128, 128>}, {transform_indices = @transform_4, window_bounds = array<i64: 1, 2, 128>}]} {
    %c0_i32 = arith.constant 0 : i32
    %0 = arith.cmpi eq, %arg2, %c0_i32 : i32
    %1 = arith.extui %0 : i1 to i32
    %c0_i32_0 = arith.constant 0 : i32
    %2 = arith.cmpi ne, %1, %c0_i32_0 : i32
    scf.if %2 {
      %cst_10 = arith.constant 0.000000e+00 : f32
      %12 = vector.broadcast %cst_10 : f32 to vector<128x128xf32>
      %c0_11 = arith.constant 0 : index
      %c0_12 = arith.constant 0 : index
      %13 = vector.load %arg8[%c0_11, %c0_12] : memref<128x128xf32, #tpu.memory_space<vmem>>, vector<128x128xf32>
      tpu.vector_store %arg8[%c0_11, %c0_12], %12 {strides = array<i32>} : memref<128x128xf32, #tpu.memory_space<vmem>>, vector<128x128xf32>,
    } else {
    }
    %c0 = arith.constant 0 : index
    %c0_1 = arith.constant 0 : index
    %3 = vector.load %arg8[%c0, %c0_1] : memref<128x128xf32, #tpu.memory_space<vmem>>, vector<128x128xf32>
    %c0_2 = arith.constant 0 : index
    %c0_3 = arith.constant 0 : index
    %4 = vector.load %arg3[%c0_2, %c0_3] : memref<128x128xf32, #tpu.memory_space<vmem>>, vector<128x128xf32>
    %c0_4 = arith.constant 0 : index
    %c0_5 = arith.constant 0 : index
    %5 = vector.load %arg4[%c0_4, %c0_5] : memref<128x128xf32, #tpu.memory_space<vmem>>, vector<128x128xf32>
    %cst = arith.constant dense<0.000000e+00> : vector<128x128xf32>
    %6 = tpu.matmul %4, %5, %cst {dimension_numbers = #tpu.dot_dimension_numbers<[1], [0], [0], [1], [0, 0, 1, 1], [], []>} : vector<128x128xf32>, vector<128x128xf32>, vector<128x128xf32> -> vector<128x128xf32>
    %7 = arith.addf %3, %6 : vector<128x128xf32>
    %c0_6 = arith.constant 0 : index
    %c0_7 = arith.constant 0 : index
    %8 = vector.load %arg8[%c0_6, %c0_7] : memref<128x128xf32, #tpu.memory_space<vmem>>, vector<128x128xf32>
    tpu.vector_store %arg8[%c0_6, %c0_7], %7 {strides = array<i32>} : memref<128x128xf32, #tpu.memory_space<vmem>>, vector<128x128xf32>,
    %c0_i32_8 = arith.constant 0 : i32
    %9 = arith.cmpi eq, %arg2, %c0_i32_8 : i32
    %10 = arith.extui %9 : i1 to i32
    %c0_i32_9 = arith.constant 0 : i32
    %11 = arith.cmpi ne, %10, %c0_i32_9 : i32
    scf.if %11 {
      %c0_10 = arith.constant 0 : index
      %c0_11 = arith.constant 0 : index
      %12 = vector.load %arg8[%c0_10, %c0_11] : memref<128x128xf32, #tpu.memory_space<vmem>>, vector<128x128xf32>
      %c0_12 = arith.constant 0 : index
      %c0_13 = arith.constant 0 : index
      %13 = vector.load %arg5[%c0_12, %c0_13] : memref<1x128xf32, #tpu.memory_space<vmem>>, vector<1x128xf32>
      %14 = vector.broadcast %13 : vector<1x128xf32> to vector<128x128xf32>
      %15 = arith.addf %12, %14 : vector<128x128xf32>
      %cst_14 = arith.constant dense<0.000000e+00> : vector<128xf32>
      %16 = vector.multi_reduction <add>, %15, %cst_14 [0] : vector<128x128xf32> to vector<128xf32>
      %17 = vector.shape_cast %16 : vector<128xf32> to vector<1x128xf32>
      %18 = arith.mulf %15, %15 : vector<128x128xf32>
      %cst_15 = arith.constant dense<0.000000e+00> : vector<128xf32>
      %19 = vector.multi_reduction <add>, %18, %cst_15 [0] : vector<128x128xf32> to vector<128xf32>
      %20 = vector.shape_cast %19 : vector<128xf32> to vector<1x128xf32>
      %21 = tpu.concatenate %17, %20 in 0 : vector<1x128xf32>, vector<1x128xf32> -> vector<2x128xf32>
      %22 = vector.shape_cast %21 : vector<2x128xf32> to vector<1x2x128xf32>
      %c0_16 = arith.constant 0 : index
      %c0_17 = arith.constant 0 : index
      %c0_18 = arith.constant 0 : index
      %23 = vector.load %arg7[%c0_16, %c0_17, %c0_18] : memref<1x2x128xf32, #tpu.memory_space<vmem>>, vector<1x2x128xf32>
      tpu.vector_store %arg7[%c0_16, %c0_17, %c0_18], %22 {strides = array<i32>} : memref<1x2x128xf32, #tpu.memory_space<vmem>>, vector<1x2x128xf32>,
      %c0_19 = arith.constant 0 : index
      %c0_20 = arith.constant 0 : index
      %24 = vector.load %arg6[%c0_19, %c0_20] : memref<128x128xf32, #tpu.memory_space<vmem>>, vector<128x128xf32>
      tpu.vector_store %arg6[%c0_19, %c0_20], %15 {strides = array<i32>} : memref<128x128xf32, #tpu.memory_space<vmem>>, vector<128x128xf32>,
    } else {
    }
    return
  }
  func.func @transform_0(%arg0: i32, %arg1: i32, %arg2: i32) -> (i32, i32) {
    %c0_i32 = arith.constant 0 : i32
    return %arg0, %arg2 : i32, i32
  }
  func.func @transform_1(%arg0: i32, %arg1: i32, %arg2: i32) -> (i32, i32) {
    %c0_i32 = arith.constant 0 : i32
    return %arg2, %arg1 : i32, i32
  }
  func.func @transform_2(%arg0: i32, %arg1: i32, %arg2: i32) -> (i32, i32) {
    %c0_i32 = arith.constant 0 : i32
    %c0_i32_0 = arith.constant 0 : i32
    return %c0_i32, %arg1 : i32, i32
  }
  func.func @transform_3(%arg0: i32, %arg1: i32, %arg2: i32) -> (i32, i32) {
    %c0_i32 = arith.constant 0 : i32
    return %arg0, %arg1 : i32, i32
  }
  func.func @transform_4(%arg0: i32, %arg1: i32, %arg2: i32) -> (i32, i32, i32) {
    %c0_i32 = arith.constant 0 : i32
    %c0_i32_0 = arith.constant 0 : i32
    return %arg0, %c0_i32, %arg1 : i32, i32, i32
  }
}

module attributes {stable_mosaic.version = 11 : i64} {
  func.func @_bn_apply_kernel(%arg0: i32, %arg1: i32, %arg2: memref<128x128xf32, #tpu.memory_space<vmem>>, %arg3: memref<2x128xf32, #tpu.memory_space<vmem>>, %arg4: memref<1x128xf32, #tpu.memory_space<vmem>>, %arg5: memref<1x128xf32, #tpu.memory_space<vmem>>, %arg6: memref<128x128xf32, #tpu.memory_space<vmem>>) attributes {dimension_semantics = [#tpu.dimension_semantics<parallel>, #tpu.dimension_semantics<parallel>], iteration_bounds = array<i64: 1, 1>, scalar_prefetch = 0 : i64, scratch_operands = 0 : i64, tpu.core_type = #tpu.core_type<tc>, window_params = [{transform_indices = @transform_0, window_bounds = array<i64: 128, 128>}, {transform_indices = @transform_1, window_bounds = array<i64: 2, 128>}, {transform_indices = @transform_2, window_bounds = array<i64: 1, 128>}, {transform_indices = @transform_3, window_bounds = array<i64: 1, 128>}, {transform_indices = @transform_4, window_bounds = array<i64: 128, 128>}]} {
    %c0 = arith.constant 0 : index
    %c0_0 = arith.constant 0 : index
    %0 = vector.load %arg3[%c0, %c0_0] : memref<2x128xf32, #tpu.memory_space<vmem>>, vector<1x128xf32>
    %cst = arith.constant 7.812500e-03 : f32
    %1 = vector.broadcast %cst : f32 to vector<1x128xf32>
    %2 = arith.mulf %0, %1 : vector<1x128xf32>
    %c1 = arith.constant 1 : index
    %c0_1 = arith.constant 0 : index
    %3 = vector.load %arg3[%c1, %c0_1] : memref<2x128xf32, #tpu.memory_space<vmem>>, vector<1x128xf32>
    %cst_2 = arith.constant 7.812500e-03 : f32
    %4 = vector.broadcast %cst_2 : f32 to vector<1x128xf32>
    %5 = arith.mulf %3, %4 : vector<1x128xf32>
    %6 = arith.mulf %2, %2 : vector<1x128xf32>
    %7 = arith.subf %5, %6 : vector<1x128xf32>
    %cst_3 = arith.constant 0.000000e+00 : f32
    %8 = vector.broadcast %cst_3 : f32 to vector<1x128xf32>
    %9 = arith.maximumf %7, %8 : vector<1x128xf32>
    %cst_4 = arith.constant 9.99999974E-6 : f32
    %10 = vector.broadcast %cst_4 : f32 to vector<1x128xf32>
    %11 = arith.addf %9, %10 : vector<1x128xf32>
    %12 = math.rsqrt %11 : vector<1x128xf32>
    %c0_5 = arith.constant 0 : index
    %c0_6 = arith.constant 0 : index
    %13 = vector.load %arg4[%c0_5, %c0_6] : memref<1x128xf32, #tpu.memory_space<vmem>>, vector<1x128xf32>
    %14 = arith.mulf %12, %13 : vector<1x128xf32>
    %c0_7 = arith.constant 0 : index
    %c0_8 = arith.constant 0 : index
    %15 = vector.load %arg2[%c0_7, %c0_8] : memref<128x128xf32, #tpu.memory_space<vmem>>, vector<128x128xf32>
    %16 = vector.broadcast %2 : vector<1x128xf32> to vector<128x128xf32>
    %17 = arith.subf %15, %16 : vector<128x128xf32>
    %18 = vector.broadcast %14 : vector<1x128xf32> to vector<128x128xf32>
    %19 = arith.mulf %17, %18 : vector<128x128xf32>
    %c0_9 = arith.constant 0 : index
    %c0_10 = arith.constant 0 : index
    %20 = vector.load %arg5[%c0_9, %c0_10] : memref<1x128xf32, #tpu.memory_space<vmem>>, vector<1x128xf32>
    %21 = vector.broadcast %20 : vector<1x128xf32> to vector<128x128xf32>
    %22 = arith.addf %19, %21 : vector<128x128xf32>
    %cst_11 = arith.constant 0.000000e+00 : f32
    %23 = vector.broadcast %cst_11 : f32 to vector<128x128xf32>
    %24 = arith.cmpf oge, %22, %23 : vector<128x128xf32>
    %cst_12 = arith.constant 2.000000e-01 : f32
    %25 = vector.broadcast %cst_12 : f32 to vector<128x128xf32>
    %26 = arith.mulf %25, %22 : vector<128x128xf32>
    %27 = arith.select %24, %22, %26 : vector<128x128xi1>, vector<128x128xf32>
    %c0_13 = arith.constant 0 : index
    %c0_14 = arith.constant 0 : index
    %28 = vector.load %arg6[%c0_13, %c0_14] : memref<128x128xf32, #tpu.memory_space<vmem>>, vector<128x128xf32>
    tpu.vector_store %arg6[%c0_13, %c0_14], %27 {strides = array<i32>} : memref<128x128xf32, #tpu.memory_space<vmem>>, vector<128x128xf32>,
    return
  }
  func.func @transform_0(%arg0: i32, %arg1: i32) -> (i32, i32) {
    %c0_i32 = arith.constant 0 : i32
    return %arg0, %arg1 : i32, i32
  }
  func.func @transform_1(%arg0: i32, %arg1: i32) -> (i32, i32) {
    %c0_i32 = arith.constant 0 : i32
    %c0_i32_0 = arith.constant 0 : i32
    return %c0_i32, %arg1 : i32, i32
  }
  func.func @transform_2(%arg0: i32, %arg1: i32) -> (i32, i32) {
    %c0_i32 = arith.constant 0 : i32
    %c0_i32_0 = arith.constant 0 : i32
    return %c0_i32, %arg1 : i32, i32
  }
  func.func @transform_3(%arg0: i32, %arg1: i32) -> (i32, i32) {
    %c0_i32 = arith.constant 0 : i32
    %c0_i32_0 = arith.constant 0 : i32
    return %c0_i32, %arg1 : i32, i32
  }
  func.func @transform_4(%arg0: i32, %arg1: i32) -> (i32, i32) {
    %c0_i32 = arith.constant 0 : i32
    return %arg0, %arg1 : i32, i32
  }
}

module attributes {stable_mosaic.version = 11 : i64} {
  func.func @_conv_kernel(%arg0: i32, %arg1: i32, %arg2: i32, %arg3: memref<32x256xf32, #tpu.memory_space<vmem>>, %arg4: memref<256x128xf32, #tpu.memory_space<vmem>>, %arg5: memref<1x128xf32, #tpu.memory_space<vmem>>, %arg6: memref<32x128xf32, #tpu.memory_space<vmem>>, %arg7: memref<1x2x128xf32, #tpu.memory_space<vmem>>, %arg8: memref<32x128xf32, #tpu.memory_space<vmem>>) attributes {dimension_semantics = [#tpu.dimension_semantics<parallel>, #tpu.dimension_semantics<parallel>, #tpu.dimension_semantics<arbitrary>], iteration_bounds = array<i64: 1, 1, 1>, scalar_prefetch = 0 : i64, scratch_operands = 1 : i64, tpu.core_type = #tpu.core_type<tc>, window_params = [{transform_indices = @transform_0, window_bounds = array<i64: 32, 256>}, {transform_indices = @transform_1, window_bounds = array<i64: 256, 128>}, {transform_indices = @transform_2, window_bounds = array<i64: 1, 128>}, {transform_indices = @transform_3, window_bounds = array<i64: 32, 128>}, {transform_indices = @transform_4, window_bounds = array<i64: 1, 2, 128>}]} {
    %c0_i32 = arith.constant 0 : i32
    %0 = arith.cmpi eq, %arg2, %c0_i32 : i32
    %1 = arith.extui %0 : i1 to i32
    %c0_i32_0 = arith.constant 0 : i32
    %2 = arith.cmpi ne, %1, %c0_i32_0 : i32
    scf.if %2 {
      %cst_10 = arith.constant 0.000000e+00 : f32
      %12 = vector.broadcast %cst_10 : f32 to vector<32x128xf32>
      %c0_11 = arith.constant 0 : index
      %c0_12 = arith.constant 0 : index
      %13 = vector.load %arg8[%c0_11, %c0_12] : memref<32x128xf32, #tpu.memory_space<vmem>>, vector<32x128xf32>
      tpu.vector_store %arg8[%c0_11, %c0_12], %12 {strides = array<i32>} : memref<32x128xf32, #tpu.memory_space<vmem>>, vector<32x128xf32>,
    } else {
    }
    %c0 = arith.constant 0 : index
    %c0_1 = arith.constant 0 : index
    %3 = vector.load %arg8[%c0, %c0_1] : memref<32x128xf32, #tpu.memory_space<vmem>>, vector<32x128xf32>
    %c0_2 = arith.constant 0 : index
    %c0_3 = arith.constant 0 : index
    %4 = vector.load %arg3[%c0_2, %c0_3] : memref<32x256xf32, #tpu.memory_space<vmem>>, vector<32x256xf32>
    %c0_4 = arith.constant 0 : index
    %c0_5 = arith.constant 0 : index
    %5 = vector.load %arg4[%c0_4, %c0_5] : memref<256x128xf32, #tpu.memory_space<vmem>>, vector<256x128xf32>
    %cst = arith.constant dense<0.000000e+00> : vector<32x128xf32>
    %6 = tpu.matmul %4, %5, %cst {dimension_numbers = #tpu.dot_dimension_numbers<[1], [0], [0], [1], [0, 0, 1, 1], [], []>} : vector<32x256xf32>, vector<256x128xf32>, vector<32x128xf32> -> vector<32x128xf32>
    %7 = arith.addf %3, %6 : vector<32x128xf32>
    %c0_6 = arith.constant 0 : index
    %c0_7 = arith.constant 0 : index
    %8 = vector.load %arg8[%c0_6, %c0_7] : memref<32x128xf32, #tpu.memory_space<vmem>>, vector<32x128xf32>
    tpu.vector_store %arg8[%c0_6, %c0_7], %7 {strides = array<i32>} : memref<32x128xf32, #tpu.memory_space<vmem>>, vector<32x128xf32>,
    %c0_i32_8 = arith.constant 0 : i32
    %9 = arith.cmpi eq, %arg2, %c0_i32_8 : i32
    %10 = arith.extui %9 : i1 to i32
    %c0_i32_9 = arith.constant 0 : i32
    %11 = arith.cmpi ne, %10, %c0_i32_9 : i32
    scf.if %11 {
      %c0_10 = arith.constant 0 : index
      %c0_11 = arith.constant 0 : index
      %12 = vector.load %arg8[%c0_10, %c0_11] : memref<32x128xf32, #tpu.memory_space<vmem>>, vector<32x128xf32>
      %c0_12 = arith.constant 0 : index
      %c0_13 = arith.constant 0 : index
      %13 = vector.load %arg5[%c0_12, %c0_13] : memref<1x128xf32, #tpu.memory_space<vmem>>, vector<1x128xf32>
      %14 = vector.broadcast %13 : vector<1x128xf32> to vector<32x128xf32>
      %15 = arith.addf %12, %14 : vector<32x128xf32>
      %cst_14 = arith.constant dense<0.000000e+00> : vector<128xf32>
      %16 = vector.multi_reduction <add>, %15, %cst_14 [0] : vector<32x128xf32> to vector<128xf32>
      %17 = vector.shape_cast %16 : vector<128xf32> to vector<1x128xf32>
      %18 = arith.mulf %15, %15 : vector<32x128xf32>
      %cst_15 = arith.constant dense<0.000000e+00> : vector<128xf32>
      %19 = vector.multi_reduction <add>, %18, %cst_15 [0] : vector<32x128xf32> to vector<128xf32>
      %20 = vector.shape_cast %19 : vector<128xf32> to vector<1x128xf32>
      %21 = tpu.concatenate %17, %20 in 0 : vector<1x128xf32>, vector<1x128xf32> -> vector<2x128xf32>
      %22 = vector.shape_cast %21 : vector<2x128xf32> to vector<1x2x128xf32>
      %c0_16 = arith.constant 0 : index
      %c0_17 = arith.constant 0 : index
      %c0_18 = arith.constant 0 : index
      %23 = vector.load %arg7[%c0_16, %c0_17, %c0_18] : memref<1x2x128xf32, #tpu.memory_space<vmem>>, vector<1x2x128xf32>
      tpu.vector_store %arg7[%c0_16, %c0_17, %c0_18], %22 {strides = array<i32>} : memref<1x2x128xf32, #tpu.memory_space<vmem>>, vector<1x2x128xf32>,
      %c0_19 = arith.constant 0 : index
      %c0_20 = arith.constant 0 : index
      %24 = vector.load %arg6[%c0_19, %c0_20] : memref<32x128xf32, #tpu.memory_space<vmem>>, vector<32x128xf32>
      tpu.vector_store %arg6[%c0_19, %c0_20], %15 {strides = array<i32>} : memref<32x128xf32, #tpu.memory_space<vmem>>, vector<32x128xf32>,
    } else {
    }
    return
  }
  func.func @transform_0(%arg0: i32, %arg1: i32, %arg2: i32) -> (i32, i32) {
    %c0_i32 = arith.constant 0 : i32
    return %arg0, %arg2 : i32, i32
  }
  func.func @transform_1(%arg0: i32, %arg1: i32, %arg2: i32) -> (i32, i32) {
    %c0_i32 = arith.constant 0 : i32
    return %arg2, %arg1 : i32, i32
  }
  func.func @transform_2(%arg0: i32, %arg1: i32, %arg2: i32) -> (i32, i32) {
    %c0_i32 = arith.constant 0 : i32
    %c0_i32_0 = arith.constant 0 : i32
    return %c0_i32, %arg1 : i32, i32
  }
  func.func @transform_3(%arg0: i32, %arg1: i32, %arg2: i32) -> (i32, i32) {
    %c0_i32 = arith.constant 0 : i32
    return %arg0, %arg1 : i32, i32
  }
  func.func @transform_4(%arg0: i32, %arg1: i32, %arg2: i32) -> (i32, i32, i32) {
    %c0_i32 = arith.constant 0 : i32
    %c0_i32_0 = arith.constant 0 : i32
    return %arg0, %c0_i32, %arg1 : i32, i32, i32
  }
}

module attributes {stable_mosaic.version = 11 : i64} {
  func.func @_bn_apply_kernel(%arg0: i32, %arg1: i32, %arg2: memref<32x128xf32, #tpu.memory_space<vmem>>, %arg3: memref<2x128xf32, #tpu.memory_space<vmem>>, %arg4: memref<1x128xf32, #tpu.memory_space<vmem>>, %arg5: memref<1x128xf32, #tpu.memory_space<vmem>>, %arg6: memref<32x128xf32, #tpu.memory_space<vmem>>) attributes {dimension_semantics = [#tpu.dimension_semantics<parallel>, #tpu.dimension_semantics<parallel>], iteration_bounds = array<i64: 1, 1>, scalar_prefetch = 0 : i64, scratch_operands = 0 : i64, tpu.core_type = #tpu.core_type<tc>, window_params = [{transform_indices = @transform_0, window_bounds = array<i64: 32, 128>}, {transform_indices = @transform_1, window_bounds = array<i64: 2, 128>}, {transform_indices = @transform_2, window_bounds = array<i64: 1, 128>}, {transform_indices = @transform_3, window_bounds = array<i64: 1, 128>}, {transform_indices = @transform_4, window_bounds = array<i64: 32, 128>}]} {
    %c0 = arith.constant 0 : index
    %c0_0 = arith.constant 0 : index
    %0 = vector.load %arg3[%c0, %c0_0] : memref<2x128xf32, #tpu.memory_space<vmem>>, vector<1x128xf32>
    %cst = arith.constant 3.125000e-02 : f32
    %1 = vector.broadcast %cst : f32 to vector<1x128xf32>
    %2 = arith.mulf %0, %1 : vector<1x128xf32>
    %c1 = arith.constant 1 : index
    %c0_1 = arith.constant 0 : index
    %3 = vector.load %arg3[%c1, %c0_1] : memref<2x128xf32, #tpu.memory_space<vmem>>, vector<1x128xf32>
    %cst_2 = arith.constant 3.125000e-02 : f32
    %4 = vector.broadcast %cst_2 : f32 to vector<1x128xf32>
    %5 = arith.mulf %3, %4 : vector<1x128xf32>
    %6 = arith.mulf %2, %2 : vector<1x128xf32>
    %7 = arith.subf %5, %6 : vector<1x128xf32>
    %cst_3 = arith.constant 0.000000e+00 : f32
    %8 = vector.broadcast %cst_3 : f32 to vector<1x128xf32>
    %9 = arith.maximumf %7, %8 : vector<1x128xf32>
    %cst_4 = arith.constant 9.99999974E-6 : f32
    %10 = vector.broadcast %cst_4 : f32 to vector<1x128xf32>
    %11 = arith.addf %9, %10 : vector<1x128xf32>
    %12 = math.rsqrt %11 : vector<1x128xf32>
    %c0_5 = arith.constant 0 : index
    %c0_6 = arith.constant 0 : index
    %13 = vector.load %arg4[%c0_5, %c0_6] : memref<1x128xf32, #tpu.memory_space<vmem>>, vector<1x128xf32>
    %14 = arith.mulf %12, %13 : vector<1x128xf32>
    %c0_7 = arith.constant 0 : index
    %c0_8 = arith.constant 0 : index
    %15 = vector.load %arg2[%c0_7, %c0_8] : memref<32x128xf32, #tpu.memory_space<vmem>>, vector<32x128xf32>
    %16 = vector.broadcast %2 : vector<1x128xf32> to vector<32x128xf32>
    %17 = arith.subf %15, %16 : vector<32x128xf32>
    %18 = vector.broadcast %14 : vector<1x128xf32> to vector<32x128xf32>
    %19 = arith.mulf %17, %18 : vector<32x128xf32>
    %c0_9 = arith.constant 0 : index
    %c0_10 = arith.constant 0 : index
    %20 = vector.load %arg5[%c0_9, %c0_10] : memref<1x128xf32, #tpu.memory_space<vmem>>, vector<1x128xf32>
    %21 = vector.broadcast %20 : vector<1x128xf32> to vector<32x128xf32>
    %22 = arith.addf %19, %21 : vector<32x128xf32>
    %cst_11 = arith.constant 0.000000e+00 : f32
    %23 = vector.broadcast %cst_11 : f32 to vector<32x128xf32>
    %24 = arith.cmpf oge, %22, %23 : vector<32x128xf32>
    %cst_12 = arith.constant 2.000000e-01 : f32
    %25 = vector.broadcast %cst_12 : f32 to vector<32x128xf32>
    %26 = arith.mulf %25, %22 : vector<32x128xf32>
    %27 = arith.select %24, %22, %26 : vector<32x128xi1>, vector<32x128xf32>
    %c0_13 = arith.constant 0 : index
    %c0_14 = arith.constant 0 : index
    %28 = vector.load %arg6[%c0_13, %c0_14] : memref<32x128xf32, #tpu.memory_space<vmem>>, vector<32x128xf32>
    tpu.vector_store %arg6[%c0_13, %c0_14], %27 {strides = array<i32>} : memref<32x128xf32, #tpu.memory_space<vmem>>, vector<32x128xf32>,
    return
  }
  func.func @transform_0(%arg0: i32, %arg1: i32) -> (i32, i32) {
    %c0_i32 = arith.constant 0 : i32
    return %arg0, %arg1 : i32, i32
  }
  func.func @transform_1(%arg0: i32, %arg1: i32) -> (i32, i32) {
    %c0_i32 = arith.constant 0 : i32
    %c0_i32_0 = arith.constant 0 : i32
    return %c0_i32, %arg1 : i32, i32
  }
  func.func @transform_2(%arg0: i32, %arg1: i32) -> (i32, i32) {
    %c0_i32 = arith.constant 0 : i32
    %c0_i32_0 = arith.constant 0 : i32
    return %c0_i32, %arg1 : i32, i32
  }
  func.func @transform_3(%arg0: i32, %arg1: i32) -> (i32, i32) {
    %c0_i32 = arith.constant 0 : i32
    %c0_i32_0 = arith.constant 0 : i32
    return %c0_i32, %arg1 : i32, i32
  }
  func.func @transform_4(%arg0: i32, %arg1: i32) -> (i32, i32) {
    %c0_i32 = arith.constant 0 : i32
    return %arg0, %arg1 : i32, i32
  }
}

module attributes {stable_mosaic.version = 11 : i64} {
  func.func @_conv_kernel(%arg0: i32, %arg1: i32, %arg2: i32, %arg3: memref<24x512xf32, #tpu.memory_space<vmem>>, %arg4: memref<512x128xf32, #tpu.memory_space<vmem>>, %arg5: memref<1x128xf32, #tpu.memory_space<vmem>>, %arg6: memref<24x128xf32, #tpu.memory_space<vmem>>, %arg7: memref<1x2x128xf32, #tpu.memory_space<vmem>>, %arg8: memref<24x128xf32, #tpu.memory_space<vmem>>) attributes {dimension_semantics = [#tpu.dimension_semantics<parallel>, #tpu.dimension_semantics<parallel>, #tpu.dimension_semantics<arbitrary>], iteration_bounds = array<i64: 1, 1, 1>, scalar_prefetch = 0 : i64, scratch_operands = 1 : i64, tpu.core_type = #tpu.core_type<tc>, window_params = [{transform_indices = @transform_0, window_bounds = array<i64: 24, 512>}, {transform_indices = @transform_1, window_bounds = array<i64: 512, 128>}, {transform_indices = @transform_2, window_bounds = array<i64: 1, 128>}, {transform_indices = @transform_3, window_bounds = array<i64: 24, 128>}, {transform_indices = @transform_4, window_bounds = array<i64: 1, 2, 128>}]} {
    %c0_i32 = arith.constant 0 : i32
    %0 = arith.cmpi eq, %arg2, %c0_i32 : i32
    %1 = arith.extui %0 : i1 to i32
    %c0_i32_0 = arith.constant 0 : i32
    %2 = arith.cmpi ne, %1, %c0_i32_0 : i32
    scf.if %2 {
      %cst_10 = arith.constant 0.000000e+00 : f32
      %12 = vector.broadcast %cst_10 : f32 to vector<24x128xf32>
      %c0_11 = arith.constant 0 : index
      %c0_12 = arith.constant 0 : index
      %13 = vector.load %arg8[%c0_11, %c0_12] : memref<24x128xf32, #tpu.memory_space<vmem>>, vector<24x128xf32>
      tpu.vector_store %arg8[%c0_11, %c0_12], %12 {strides = array<i32>} : memref<24x128xf32, #tpu.memory_space<vmem>>, vector<24x128xf32>,
    } else {
    }
    %c0 = arith.constant 0 : index
    %c0_1 = arith.constant 0 : index
    %3 = vector.load %arg8[%c0, %c0_1] : memref<24x128xf32, #tpu.memory_space<vmem>>, vector<24x128xf32>
    %c0_2 = arith.constant 0 : index
    %c0_3 = arith.constant 0 : index
    %4 = vector.load %arg3[%c0_2, %c0_3] : memref<24x512xf32, #tpu.memory_space<vmem>>, vector<24x512xf32>
    %c0_4 = arith.constant 0 : index
    %c0_5 = arith.constant 0 : index
    %5 = vector.load %arg4[%c0_4, %c0_5] : memref<512x128xf32, #tpu.memory_space<vmem>>, vector<512x128xf32>
    %cst = arith.constant dense<0.000000e+00> : vector<24x128xf32>
    %6 = tpu.matmul %4, %5, %cst {dimension_numbers = #tpu.dot_dimension_numbers<[1], [0], [0], [1], [0, 0, 1, 1], [], []>} : vector<24x512xf32>, vector<512x128xf32>, vector<24x128xf32> -> vector<24x128xf32>
    %7 = arith.addf %3, %6 : vector<24x128xf32>
    %c0_6 = arith.constant 0 : index
    %c0_7 = arith.constant 0 : index
    %8 = vector.load %arg8[%c0_6, %c0_7] : memref<24x128xf32, #tpu.memory_space<vmem>>, vector<24x128xf32>
    tpu.vector_store %arg8[%c0_6, %c0_7], %7 {strides = array<i32>} : memref<24x128xf32, #tpu.memory_space<vmem>>, vector<24x128xf32>,
    %c0_i32_8 = arith.constant 0 : i32
    %9 = arith.cmpi eq, %arg2, %c0_i32_8 : i32
    %10 = arith.extui %9 : i1 to i32
    %c0_i32_9 = arith.constant 0 : i32
    %11 = arith.cmpi ne, %10, %c0_i32_9 : i32
    scf.if %11 {
      %c0_10 = arith.constant 0 : index
      %c0_11 = arith.constant 0 : index
      %12 = vector.load %arg8[%c0_10, %c0_11] : memref<24x128xf32, #tpu.memory_space<vmem>>, vector<24x128xf32>
      %c0_12 = arith.constant 0 : index
      %c0_13 = arith.constant 0 : index
      %13 = vector.load %arg5[%c0_12, %c0_13] : memref<1x128xf32, #tpu.memory_space<vmem>>, vector<1x128xf32>
      %14 = vector.broadcast %13 : vector<1x128xf32> to vector<24x128xf32>
      %15 = arith.addf %12, %14 : vector<24x128xf32>
      %cst_14 = arith.constant dense<0.000000e+00> : vector<128xf32>
      %16 = vector.multi_reduction <add>, %15, %cst_14 [0] : vector<24x128xf32> to vector<128xf32>
      %17 = vector.shape_cast %16 : vector<128xf32> to vector<1x128xf32>
      %18 = arith.mulf %15, %15 : vector<24x128xf32>
      %cst_15 = arith.constant dense<0.000000e+00> : vector<128xf32>
      %19 = vector.multi_reduction <add>, %18, %cst_15 [0] : vector<24x128xf32> to vector<128xf32>
      %20 = vector.shape_cast %19 : vector<128xf32> to vector<1x128xf32>
      %21 = tpu.concatenate %17, %20 in 0 : vector<1x128xf32>, vector<1x128xf32> -> vector<2x128xf32>
      %22 = vector.shape_cast %21 : vector<2x128xf32> to vector<1x2x128xf32>
      %c0_16 = arith.constant 0 : index
      %c0_17 = arith.constant 0 : index
      %c0_18 = arith.constant 0 : index
      %23 = vector.load %arg7[%c0_16, %c0_17, %c0_18] : memref<1x2x128xf32, #tpu.memory_space<vmem>>, vector<1x2x128xf32>
      tpu.vector_store %arg7[%c0_16, %c0_17, %c0_18], %22 {strides = array<i32>} : memref<1x2x128xf32, #tpu.memory_space<vmem>>, vector<1x2x128xf32>,
      %c0_19 = arith.constant 0 : index
      %c0_20 = arith.constant 0 : index
      %24 = vector.load %arg6[%c0_19, %c0_20] : memref<24x128xf32, #tpu.memory_space<vmem>>, vector<24x128xf32>
      tpu.vector_store %arg6[%c0_19, %c0_20], %15 {strides = array<i32>} : memref<24x128xf32, #tpu.memory_space<vmem>>, vector<24x128xf32>,
    } else {
    }
    return
  }
  func.func @transform_0(%arg0: i32, %arg1: i32, %arg2: i32) -> (i32, i32) {
    %c0_i32 = arith.constant 0 : i32
    return %arg0, %arg2 : i32, i32
  }
  func.func @transform_1(%arg0: i32, %arg1: i32, %arg2: i32) -> (i32, i32) {
    %c0_i32 = arith.constant 0 : i32
    return %arg2, %arg1 : i32, i32
  }
  func.func @transform_2(%arg0: i32, %arg1: i32, %arg2: i32) -> (i32, i32) {
    %c0_i32 = arith.constant 0 : i32
    %c0_i32_0 = arith.constant 0 : i32
    return %c0_i32, %arg1 : i32, i32
  }
  func.func @transform_3(%arg0: i32, %arg1: i32, %arg2: i32) -> (i32, i32) {
    %c0_i32 = arith.constant 0 : i32
    return %arg0, %arg1 : i32, i32
  }
  func.func @transform_4(%arg0: i32, %arg1: i32, %arg2: i32) -> (i32, i32, i32) {
    %c0_i32 = arith.constant 0 : i32
    %c0_i32_0 = arith.constant 0 : i32
    return %arg0, %c0_i32, %arg1 : i32, i32, i32
  }
}

module attributes {stable_mosaic.version = 11 : i64} {
  func.func @_bn_apply_kernel(%arg0: i32, %arg1: i32, %arg2: memref<24x128xf32, #tpu.memory_space<vmem>>, %arg3: memref<2x128xf32, #tpu.memory_space<vmem>>, %arg4: memref<1x128xf32, #tpu.memory_space<vmem>>, %arg5: memref<1x128xf32, #tpu.memory_space<vmem>>, %arg6: memref<24x128xf32, #tpu.memory_space<vmem>>) attributes {dimension_semantics = [#tpu.dimension_semantics<parallel>, #tpu.dimension_semantics<parallel>], iteration_bounds = array<i64: 1, 1>, scalar_prefetch = 0 : i64, scratch_operands = 0 : i64, tpu.core_type = #tpu.core_type<tc>, window_params = [{transform_indices = @transform_0, window_bounds = array<i64: 24, 128>}, {transform_indices = @transform_1, window_bounds = array<i64: 2, 128>}, {transform_indices = @transform_2, window_bounds = array<i64: 1, 128>}, {transform_indices = @transform_3, window_bounds = array<i64: 1, 128>}, {transform_indices = @transform_4, window_bounds = array<i64: 24, 128>}]} {
    %c0 = arith.constant 0 : index
    %c0_0 = arith.constant 0 : index
    %0 = vector.load %arg3[%c0, %c0_0] : memref<2x128xf32, #tpu.memory_space<vmem>>, vector<1x128xf32>
    %cst = arith.constant 0.055555556 : f32
    %1 = vector.broadcast %cst : f32 to vector<1x128xf32>
    %2 = arith.mulf %0, %1 : vector<1x128xf32>
    %c1 = arith.constant 1 : index
    %c0_1 = arith.constant 0 : index
    %3 = vector.load %arg3[%c1, %c0_1] : memref<2x128xf32, #tpu.memory_space<vmem>>, vector<1x128xf32>
    %cst_2 = arith.constant 0.055555556 : f32
    %4 = vector.broadcast %cst_2 : f32 to vector<1x128xf32>
    %5 = arith.mulf %3, %4 : vector<1x128xf32>
    %6 = arith.mulf %2, %2 : vector<1x128xf32>
    %7 = arith.subf %5, %6 : vector<1x128xf32>
    %cst_3 = arith.constant 0.000000e+00 : f32
    %8 = vector.broadcast %cst_3 : f32 to vector<1x128xf32>
    %9 = arith.maximumf %7, %8 : vector<1x128xf32>
    %cst_4 = arith.constant 9.99999974E-6 : f32
    %10 = vector.broadcast %cst_4 : f32 to vector<1x128xf32>
    %11 = arith.addf %9, %10 : vector<1x128xf32>
    %12 = math.rsqrt %11 : vector<1x128xf32>
    %c0_5 = arith.constant 0 : index
    %c0_6 = arith.constant 0 : index
    %13 = vector.load %arg4[%c0_5, %c0_6] : memref<1x128xf32, #tpu.memory_space<vmem>>, vector<1x128xf32>
    %14 = arith.mulf %12, %13 : vector<1x128xf32>
    %c0_7 = arith.constant 0 : index
    %c0_8 = arith.constant 0 : index
    %15 = vector.load %arg2[%c0_7, %c0_8] : memref<24x128xf32, #tpu.memory_space<vmem>>, vector<24x128xf32>
    %16 = vector.broadcast %2 : vector<1x128xf32> to vector<24x128xf32>
    %17 = arith.subf %15, %16 : vector<24x128xf32>
    %18 = vector.broadcast %14 : vector<1x128xf32> to vector<24x128xf32>
    %19 = arith.mulf %17, %18 : vector<24x128xf32>
    %c0_9 = arith.constant 0 : index
    %c0_10 = arith.constant 0 : index
    %20 = vector.load %arg5[%c0_9, %c0_10] : memref<1x128xf32, #tpu.memory_space<vmem>>, vector<1x128xf32>
    %21 = vector.broadcast %20 : vector<1x128xf32> to vector<24x128xf32>
    %22 = arith.addf %19, %21 : vector<24x128xf32>
    %cst_11 = arith.constant 0.000000e+00 : f32
    %23 = vector.broadcast %cst_11 : f32 to vector<24x128xf32>
    %24 = arith.cmpf oge, %22, %23 : vector<24x128xf32>
    %cst_12 = arith.constant 2.000000e-01 : f32
    %25 = vector.broadcast %cst_12 : f32 to vector<24x128xf32>
    %26 = arith.mulf %25, %22 : vector<24x128xf32>
    %27 = arith.select %24, %22, %26 : vector<24x128xi1>, vector<24x128xf32>
    %c0_13 = arith.constant 0 : index
    %c0_14 = arith.constant 0 : index
    %28 = vector.load %arg6[%c0_13, %c0_14] : memref<24x128xf32, #tpu.memory_space<vmem>>, vector<24x128xf32>
    tpu.vector_store %arg6[%c0_13, %c0_14], %27 {strides = array<i32>} : memref<24x128xf32, #tpu.memory_space<vmem>>, vector<24x128xf32>,
    return
  }
  func.func @transform_0(%arg0: i32, %arg1: i32) -> (i32, i32) {
    %c0_i32 = arith.constant 0 : i32
    return %arg0, %arg1 : i32, i32
  }
  func.func @transform_1(%arg0: i32, %arg1: i32) -> (i32, i32) {
    %c0_i32 = arith.constant 0 : i32
    %c0_i32_0 = arith.constant 0 : i32
    return %c0_i32, %arg1 : i32, i32
  }
  func.func @transform_2(%arg0: i32, %arg1: i32) -> (i32, i32) {
    %c0_i32 = arith.constant 0 : i32
    %c0_i32_0 = arith.constant 0 : i32
    return %c0_i32, %arg1 : i32, i32
  }
  func.func @transform_3(%arg0: i32, %arg1: i32) -> (i32, i32) {
    %c0_i32 = arith.constant 0 : i32
    %c0_i32_0 = arith.constant 0 : i32
    return %c0_i32, %arg1 : i32, i32
  }
  func.func @transform_4(%arg0: i32, %arg1: i32) -> (i32, i32) {
    %c0_i32 = arith.constant 0 : i32
    return %arg0, %arg1 : i32, i32
  }
}

module attributes {stable_mosaic.version = 11 : i64} {
  func.func @_conv_kernel(%arg0: i32, %arg1: i32, %arg2: i32, %arg3: memref<8x512xf32, #tpu.memory_space<vmem>>, %arg4: memref<512x128xf32, #tpu.memory_space<vmem>>, %arg5: memref<1x128xf32, #tpu.memory_space<vmem>>, %arg6: memref<8x128xf32, #tpu.memory_space<vmem>>, %arg7: memref<8x128xf32, #tpu.memory_space<vmem>>) attributes {dimension_semantics = [#tpu.dimension_semantics<parallel>, #tpu.dimension_semantics<parallel>, #tpu.dimension_semantics<arbitrary>], iteration_bounds = array<i64: 1, 1, 2>, scalar_prefetch = 0 : i64, scratch_operands = 1 : i64, tpu.core_type = #tpu.core_type<tc>, window_params = [{transform_indices = @transform_0, window_bounds = array<i64: 8, 512>}, {transform_indices = @transform_1, window_bounds = array<i64: 512, 128>}, {transform_indices = @transform_2, window_bounds = array<i64: 1, 128>}, {transform_indices = @transform_3, window_bounds = array<i64: 8, 128>}]} {
    %c0_i32 = arith.constant 0 : i32
    %0 = arith.cmpi eq, %arg2, %c0_i32 : i32
    %1 = arith.extui %0 : i1 to i32
    %c0_i32_0 = arith.constant 0 : i32
    %2 = arith.cmpi ne, %1, %c0_i32_0 : i32
    scf.if %2 {
      %cst_9 = arith.constant 0.000000e+00 : f32
      %12 = vector.broadcast %cst_9 : f32 to vector<8x128xf32>
      %c0_10 = arith.constant 0 : index
      %c0_11 = arith.constant 0 : index
      %13 = vector.load %arg7[%c0_10, %c0_11] : memref<8x128xf32, #tpu.memory_space<vmem>>, vector<8x128xf32>
      tpu.vector_store %arg7[%c0_10, %c0_11], %12 {strides = array<i32>} : memref<8x128xf32, #tpu.memory_space<vmem>>, vector<8x128xf32>,
    } else {
    }
    %c0 = arith.constant 0 : index
    %c0_1 = arith.constant 0 : index
    %3 = vector.load %arg7[%c0, %c0_1] : memref<8x128xf32, #tpu.memory_space<vmem>>, vector<8x128xf32>
    %c0_2 = arith.constant 0 : index
    %c0_3 = arith.constant 0 : index
    %4 = vector.load %arg3[%c0_2, %c0_3] : memref<8x512xf32, #tpu.memory_space<vmem>>, vector<8x512xf32>
    %c0_4 = arith.constant 0 : index
    %c0_5 = arith.constant 0 : index
    %5 = vector.load %arg4[%c0_4, %c0_5] : memref<512x128xf32, #tpu.memory_space<vmem>>, vector<512x128xf32>
    %cst = arith.constant dense<0.000000e+00> : vector<8x128xf32>
    %6 = tpu.matmul %4, %5, %cst {dimension_numbers = #tpu.dot_dimension_numbers<[1], [0], [0], [1], [0, 0, 1, 1], [], []>} : vector<8x512xf32>, vector<512x128xf32>, vector<8x128xf32> -> vector<8x128xf32>
    %7 = arith.addf %3, %6 : vector<8x128xf32>
    %c0_6 = arith.constant 0 : index
    %c0_7 = arith.constant 0 : index
    %8 = vector.load %arg7[%c0_6, %c0_7] : memref<8x128xf32, #tpu.memory_space<vmem>>, vector<8x128xf32>
    tpu.vector_store %arg7[%c0_6, %c0_7], %7 {strides = array<i32>} : memref<8x128xf32, #tpu.memory_space<vmem>>, vector<8x128xf32>,
    %c1_i32 = arith.constant 1 : i32
    %9 = arith.cmpi eq, %arg2, %c1_i32 : i32
    %10 = arith.extui %9 : i1 to i32
    %c0_i32_8 = arith.constant 0 : i32
    %11 = arith.cmpi ne, %10, %c0_i32_8 : i32
    scf.if %11 {
      %c0_9 = arith.constant 0 : index
      %c0_10 = arith.constant 0 : index
      %12 = vector.load %arg7[%c0_9, %c0_10] : memref<8x128xf32, #tpu.memory_space<vmem>>, vector<8x128xf32>
      %c0_11 = arith.constant 0 : index
      %c0_12 = arith.constant 0 : index
      %13 = vector.load %arg5[%c0_11, %c0_12] : memref<1x128xf32, #tpu.memory_space<vmem>>, vector<1x128xf32>
      %14 = vector.broadcast %13 : vector<1x128xf32> to vector<8x128xf32>
      %15 = arith.addf %12, %14 : vector<8x128xf32>
      %c0_13 = arith.constant 0 : index
      %c0_14 = arith.constant 0 : index
      %16 = vector.load %arg6[%c0_13, %c0_14] : memref<8x128xf32, #tpu.memory_space<vmem>>, vector<8x128xf32>
      tpu.vector_store %arg6[%c0_13, %c0_14], %15 {strides = array<i32>} : memref<8x128xf32, #tpu.memory_space<vmem>>, vector<8x128xf32>,
    } else {
    }
    return
  }
  func.func @transform_0(%arg0: i32, %arg1: i32, %arg2: i32) -> (i32, i32) {
    %c0_i32 = arith.constant 0 : i32
    return %arg0, %arg2 : i32, i32
  }
  func.func @transform_1(%arg0: i32, %arg1: i32, %arg2: i32) -> (i32, i32) {
    %c0_i32 = arith.constant 0 : i32
    return %arg2, %arg1 : i32, i32
  }
  func.func @transform_2(%arg0: i32, %arg1: i32, %arg2: i32) -> (i32, i32) {
    %c0_i32 = arith.constant 0 : i32
    %c0_i32_0 = arith.constant 0 : i32
    return %c0_i32, %arg1 : i32, i32
  }
  func.func @transform_3(%arg0: i32, %arg1: i32, %arg2: i32) -> (i32, i32) {
    %c0_i32 = arith.constant 0 : i32
    return %arg0, %arg1 : i32, i32
  }
}

</mosaic_0001>

<llo_original>
// kernel: _lambda_.8
$region0: #{_lambda_.8}
  #allocation0 [shape = 'u32[]', space=smem, size = 0x4, offset = 0x4, fixed_abs, tag = 'smem constant byte address 0x4 - core index']
  #allocation1 [shape = 'u32[72,128]{1,0:T(1,128)}', space=vmem, size = 0x9000, scoped, tag = 'internal scratch']
  #allocation2 [shape = 'f32[512,128]{1,0:T(8,128)}', space=vmem, size = 0x40000, scoped, tag = 'scratch operand']
  %s0 = inlined_call_operand.vmem [shape: f32[512,48], index: 0, kind: input, shape index: {}]
  %s1 = inlined_call_operand.vmem [shape: f32[48,128], index: 1, kind: input, shape index: {}]
  %s2 = inlined_call_operand.vmem [shape: f32[1,128], index: 2, kind: input, shape index: {}]
  %s3 = inlined_call_operand.vmem [shape: f32[512,128], index: 3, kind: output, shape index: {}]
  %s4 = sld [smem:[#allocation0]]
  $region30: #{_lambda_.8} parent=0
    _
  %s6 = ssub.s32 1, %s4
  %s7 = scalar_select 0, %s6, %s4
  // Predicated region
  $region2: #{_lambda_.8} parent=0 // pred_check
    _
  $region3: #{_lambda_.8} parent=0 // pred_check_branch
    %9 = sbr.rel (0) target = $region5
  $region4: #{_lambda_.8} parent=0 // pred_region
    _
  $region5: #{_lambda_.8} parent=0 // pred_fallthru
    _
  // Predicated region
  $region6: #{_lambda_.8} parent=0 // pred_check
    _
  $region7: #{_lambda_.8} parent=0 // pred_check_branch
    %11 = sbr.rel (0) target = $region9
  $region8: #{_lambda_.8} parent=0 // pred_region
    _
  $region9: #{_lambda_.8} parent=0 // pred_fallthru
    _
  // Predicated region
  $region10: #{_lambda_.8} parent=0 // pred_check
    _
  $region11: #{_lambda_.8} parent=0 // pred_check_branch
    %13 = sbr.rel (0) target = $region13
  $region12: #{_lambda_.8} parent=0 // pred_region
    _
  $region13: #{_lambda_.8} parent=0 // pred_fallthru
    _
  %p14 = scmp.eq.s32.totalorder 0, 0
  // Predicated region
  $region14: #{_lambda_.8} parent=0 // pred_check
    %p15 = pneg %p14
  $region15: #{_lambda_.8} parent=0 // pred_check_branch
    %17 = sbr.rel (%p15) target = $region17
  $region16: #{_lambda_.8} parent=0 // pred_region
    %18 = vst [vmem:[#allocation2] sm:$0xff] 0.0
    %19 = vst [vmem:[#allocation2 + $0x8] sm:$0xff] 0.0
    %20 = vst [vmem:[#allocation2 + $0x10] sm:$0xff] 0.0
    %21 = vst [vmem:[#allocation2 + $0x18] sm:$0xff] 0.0
    %22 = vst [vmem:[#allocation2 + $0x20] sm:$0xff] 0.0
    %23 = vst [vmem:[#allocation2 + $0x28] sm:$0xff] 0.0
    %24 = vst [vmem:[#allocation2 + $0x30] sm:$0xff] 0.0
    %25 = vst [vmem:[#allocation2 + $0x38] sm:$0xff] 0.0
    %26 = vst [vmem:[#allocation2 + $0x40] sm:$0xff] 0.0
    %27 = vst [vmem:[#allocation2 + $0x48] sm:$0xff] 0.0
    %28 = vst [vmem:[#allocation2 + $0x50] sm:$0xff] 0.0
    %29 = vst [vmem:[#allocation2 + $0x58] sm:$0xff] 0.0
    %30 = vst [vmem:[#allocation2 + $0x60] sm:$0xff] 0.0
    %31 = vst [vmem:[#allocation2 + $0x68] sm:$0xff] 0.0
    %32 = vst [vmem:[#allocation2 + $0x70] sm:$0xff] 0.0
    %33 = vst [vmem:[#allocation2 + $0x78] sm:$0xff] 0.0
    %34 = vst [vmem:[#allocation2 + $0x80] sm:$0xff] 0.0
    %35 = vst [vmem:[#allocation2 + $0x88] sm:$0xff] 0.0
    %36 = vst [vmem:[#allocation2 + $0x90] sm:$0xff] 0.0
    %37 = vst [vmem:[#allocation2 + $0x98] sm:$0xff] 0.0
    %38 = vst [vmem:[#allocation2 + $0xa0] sm:$0xff] 0.0
    %39 = vst [vmem:[#allocation2 + $0xa8] sm:$0xff] 0.0
    %40 = vst [vmem:[#allocation2 + $0xb0] sm:$0xff] 0.0
    %41 = vst [vmem:[#allocation2 + $0xb8] sm:$0xff] 0.0
    %42 = vst [vmem:[#allocation2 + $0xc0] sm:$0xff] 0.0
    %43 = vst [vmem:[#allocation2 + $0xc8] sm:$0xff] 0.0
    %44 = vst [vmem:[#allocation2 + $0xd0] sm:$0xff] 0.0
    %45 = vst [vmem:[#allocation2 + $0xd8] sm:$0xff] 0.0
    %46 = vst [vmem:[#allocation2 + $0xe0] sm:$0xff] 0.0
    %47 = vst [vmem:[#allocation2 + $0xe8] sm:$0xff] 0.0
    %48 = vst [vmem:[#allocation2 + $0xf0] sm:$0xff] 0.0
    %49 = vst [vmem:[#allocation2 + $0xf8] sm:$0xff] 0.0
    %50 = vst [vmem:[#allocation2 + $0x100] sm:$0xff] 0.0
    %51 = vst [vmem:[#allocation2 + $0x108] sm:$0xff] 0.0
    %52 = vst [vmem:[#allocation2 + $0x110] sm:$0xff] 0.0
    %53 = vst [vmem:[#allocation2 + $0x118] sm:$0xff] 0.0
    %54 = vst [vmem:[#allocation2 + $0x120] sm:$0xff] 0.0
    %55 = vst [vmem:[#allocation2 + $0x128] sm:$0xff] 0.0
    %56 = vst [vmem:[#allocation2 + $0x130] sm:$0xff] 0.0
    %57 = vst [vmem:[#allocation2 + $0x138] sm:$0xff] 0.0
    %58 = vst [vmem:[#allocation2 + $0x140] sm:$0xff] 0.0
    %59 = vst [vmem:[#allocation2 + $0x148] sm:$0xff] 0.0
    %60 = vst [vmem:[#allocation2 + $0x150] sm:$0xff] 0.0
    %61 = vst [vmem:[#allocation2 + $0x158] sm:$0xff] 0.0
    %62 = vst [vmem:[#allocation2 + $0x160] sm:$0xff] 0.0
    %63 = vst [vmem:[#allocation2 + $0x168] sm:$0xff] 0.0
    %64 = vst [vmem:[#allocation2 + $0x170] sm:$0xff] 0.0
    %65 = vst [vmem:[#allocation2 + $0x178] sm:$0xff] 0.0
    %66 = vst [vmem:[#allocation2 + $0x180] sm:$0xff] 0.0
    %67 = vst [vmem:[#allocation2 + $0x188] sm:$0xff] 0.0
    %68 = vst [vmem:[#allocation2 + $0x190] sm:$0xff] 0.0
    %69 = vst [vmem:[#allocation2 + $0x198] sm:$0xff] 0.0
    %70 = vst [vmem:[#allocation2 + $0x1a0] sm:$0xff] 0.0
    %71 = vst [vmem:[#allocation2 + $0x1a8] sm:$0xff] 0.0
    %72 = vst [vmem:[#allocation2 + $0x1b0] sm:$0xff] 0.0
    %73 = vst [vmem:[#allocation2 + $0x1b8] sm:$0xff] 0.0
    %74 = vst [vmem:[#allocation2 + $0x1c0] sm:$0xff] 0.0
    %75 = vst [vmem:[#allocation2 + $0x1c8] sm:$0xff] 0.0
    %76 = vst [vmem:[#allocation2 + $0x1d0] sm:$0xff] 0.0
    %77 = vst [vmem:[#allocation2 + $0x1d8] sm:$0xff] 0.0
    %78 = vst [vmem:[#allocation2 + $0x1e0] sm:$0xff] 0.0
    %79 = vst [vmem:[#allocation2 + $0x1e8] sm:$0xff] 0.0
    %80 = vst [vmem:[#allocation2 + $0x1f0] sm:$0xff] 0.0
    %81 = vst [vmem:[#allocation2 + $0x1f8] sm:$0xff] 0.0
  $region17: #{_lambda_.8} parent=0 // pred_fallthru
    _
  %v82 = vld [vmem:[#allocation2] sm:$0xff]
  %v83 = vld [vmem:[#allocation2 + $0x8] sm:$0xff]
  %v84 = vld [vmem:[#allocation2 + $0x10] sm:$0xff]
  %v85 = vld [vmem:[#allocation2 + $0x18] sm:$0xff]
  %v86 = vld [vmem:[#allocation2 + $0x20] sm:$0xff]
  %v87 = vld [vmem:[#allocation2 + $0x28] sm:$0xff]
  %v88 = vld [vmem:[#allocation2 + $0x30] sm:$0xff]
  %v89 = vld [vmem:[#allocation2 + $0x38] sm:$0xff]
  %v90 = vld [vmem:[#allocation2 + $0x40] sm:$0xff]
  %v91 = vld [vmem:[#allocation2 + $0x48] sm:$0xff]
  %v92 = vld [vmem:[#allocation2 + $0x50] sm:$0xff]
  %v93 = vld [vmem:[#allocation2 + $0x58] sm:$0xff]
  %v94 = vld [vmem:[#allocation2 + $0x60] sm:$0xff]
  %v95 = vld [vmem:[#allocation2 + $0x68] sm:$0xff]
  %v96 = vld [vmem:[#allocation2 + $0x70] sm:$0xff]
  %v97 = vld [vmem:[#allocation2 + $0x78] sm:$0xff]
  %v98 = vld [vmem:[#allocation2 + $0x80] sm:$0xff]
  %v99 = vld [vmem:[#allocation2 + $0x88] sm:$0xff]
  %v100 = vld [vmem:[#allocation2 + $0x90] sm:$0xff]
  %v101 = vld [vmem:[#allocation2 + $0x98] sm:$0xff]
  %v102 = vld [vmem:[#allocation2 + $0xa0] sm:$0xff]
  %v103 = vld [vmem:[#allocation2 + $0xa8] sm:$0xff]
  %v104 = vld [vmem:[#allocation2 + $0xb0] sm:$0xff]
  %v105 = vld [vmem:[#allocation2 + $0xb8] sm:$0xff]
  %v106 = vld [vmem:[#allocation2 + $0xc0] sm:$0xff]
  %v107 = vld [vmem:[#allocation2 + $0xc8] sm:$0xff]
  %v108 = vld [vmem:[#allocation2 + $0xd0] sm:$0xff]
  %v109 = vld [vmem:[#allocation2 + $0xd8] sm:$0xff]
  %v110 = vld [vmem:[#allocation2 + $0xe0] sm:$0xff]
  %v111 = vld [vmem:[#allocation2 + $0xe8] sm:$0xff]
  %v112 = vld [vmem:[#allocation2 + $0xf0] sm:$0xff]
  %v113 = vld [vmem:[#allocation2 + $0xf8] sm:$0xff]
  %v114 = vld [vmem:[#allocation2 + $0x100] sm:$0xff]
  %v115 = vld [vmem:[#allocation2 + $0x108] sm:$0xff]
  %v116 = vld [vmem:[#allocation2 + $0x110] sm:$0xff]
  %v117 = vld [vmem:[#allocation2 + $0x118] sm:$0xff]
  %v118 = vld [vmem:[#allocation2 + $0x120] sm:$0xff]
  %v119 = vld [vmem:[#allocation2 + $0x128] sm:$0xff]
  %v120 = vld [vmem:[#allocation2 + $0x130] sm:$0xff]
  %v121 = vld [vmem:[#allocation2 + $0x138] sm:$0xff]
  %v122 = vld [vmem:[#allocation2 + $0x140] sm:$0xff]
  %v123 = vld [vmem:[#allocation2 + $0x148] sm:$0xff]
  %v124 = vld [vmem:[#allocation2 + $0x150] sm:$0xff]
  %v125 = vld [vmem:[#allocation2 + $0x158] sm:$0xff]
  %v126 = vld [vmem:[#allocation2 + $0x160] sm:$0xff]
  %v127 = vld [vmem:[#allocation2 + $0x168] sm:$0xff]
  %v128 = vld [vmem:[#allocation2 + $0x170] sm:$0xff]
  %v129 = vld [vmem:[#allocation2 + $0x178] sm:$0xff]
  %v130 = vld [vmem:[#allocation2 + $0x180] sm:$0xff]
  %v131 = vld [vmem:[#allocation2 + $0x188] sm:$0xff]
  %v132 = vld [vmem:[#allocation2 + $0x190] sm:$0xff]
  %v133 = vld [vmem:[#allocation2 + $0x198] sm:$0xff]
  %v134 = vld [vmem:[#allocation2 + $0x1a0] sm:$0xff]
  %v135 = vld [vmem:[#allocation2 + $0x1a8] sm:$0xff]
  %v136 = vld [vmem:[#allocation2 + $0x1b0] sm:$0xff]
  %v137 = vld [vmem:[#allocation2 + $0x1b8] sm:$0xff]
  %v138 = vld [vmem:[#allocation2 + $0x1c0] sm:$0xff]
  %v139 = vld [vmem:[#allocation2 + $0x1c8] sm:$0xff]
  %v140 = vld [vmem:[#allocation2 + $0x1d0] sm:$0xff]
  %v141 = vld [vmem:[#allocation2 + $0x1d8] sm:$0xff]
  %v142 = vld [vmem:[#allocation2 + $0x1e0] sm:$0xff]
  %v143 = vld [vmem:[#allocation2 + $0x1e8] sm:$0xff]
  %v144 = vld [vmem:[#allocation2 + $0x1f0] sm:$0xff]
  %v145 = vld [vmem:[#allocation2 + $0x1f8] sm:$0xff]
  %v146 = vld [vmem:[%s0] sm:$0xff]
  %v147 = vld [vmem:[%s0 + $0x8] sm:$0xff]
  %v148 = vld [vmem:[%s0 + $0x10] sm:$0xff]
  %v149 = vld [vmem:[%s0 + $0x18] sm:$0xff]
  %v150 = vld [vmem:[%s0 + $0x20] sm:$0xff]
  %v151 = vld [vmem:[%s0 + $0x28] sm:$0xff]
  %v152 = vld [vmem:[%s0 + $0x30] sm:$0xff]
  %v153 = vld [vmem:[%s0 + $0x38] sm:$0xff]
  %v154 = vld [vmem:[%s0 + $0x40] sm:$0xff]
  %v155 = vld [vmem:[%s0 + $0x48] sm:$0xff]
  %v156 = vld [vmem:[%s0 + $0x50] sm:$0xff]
  %v157 = vld [vmem:[%s0 + $0x58] sm:$0xff]
  %v158 = vld [vmem:[%s0 + $0x60] sm:$0xff]
  %v159 = vld [vmem:[%s0 + $0x68] sm:$0xff]
  %v160 = vld [vmem:[%s0 + $0x70] sm:$0xff]
  %v161 = vld [vmem:[%s0 + $0x78] sm:$0xff]
  %v162 = vld [vmem:[%s0 + $0x80] sm:$0xff]
  %v163 = vld [vmem:[%s0 + $0x88] sm:$0xff]
  %v164 = vld [vmem:[%s0 + $0x90] sm:$0xff]
  %v165 = vld [vmem:[%s0 + $0x98] sm:$0xff]
  %v166 = vld [vmem:[%s0 + $0xa0] sm:$0xff]
  %v167 = vld [vmem:[%s0 + $0xa8] sm:$0xff]
  %v168 = vld [vmem:[%s0 + $0xb0] sm:$0xff]
  %v169 = vld [vmem:[%s0 + $0xb8] sm:$0xff]
  %v170 = vld [vmem:[%s0 + $0xc0] sm:$0xff]
  %v171 = vld [vmem:[%s0 + $0xc8] sm:$0xff]
  %v172 = vld [vmem:[%s0 + $0xd0] sm:$0xff]
  %v173 = vld [vmem:[%s0 + $0xd8] sm:$0xff]
  %v174 = vld [vmem:[%s0 + $0xe0] sm:$0xff]
  %v175 = vld [vmem:[%s0 + $0xe8] sm:$0xff]
  %v176 = vld [vmem:[%s0 + $0xf0] sm:$0xff]
  %v177 = vld [vmem:[%s0 + $0xf8] sm:$0xff]
  %v178 = vld [vmem:[%s0 + $0x100] sm:$0xff]
  %v179 = vld [vmem:[%s0 + $0x108] sm:$0xff]
  %v180 = vld [vmem:[%s0 + $0x110] sm:$0xff]
  %v181 = vld [vmem:[%s0 + $0x118] sm:$0xff]
  %v182 = vld [vmem:[%s0 + $0x120] sm:$0xff]
  %v183 = vld [vmem:[%s0 + $0x128] sm:$0xff]
  %v184 = vld [vmem:[%s0 + $0x130] sm:$0xff]
  %v185 = vld [vmem:[%s0 + $0x138] sm:$0xff]
  %v186 = vld [vmem:[%s0 + $0x140] sm:$0xff]
  %v187 = vld [vmem:[%s0 + $0x148] sm:$0xff]
  %v188 = vld [vmem:[%s0 + $0x150] sm:$0xff]
  %v189 = vld [vmem:[%s0 + $0x158] sm:$0xff]
  %v190 = vld [vmem:[%s0 + $0x160] sm:$0xff]
  %v191 = vld [vmem:[%s0 + $0x168] sm:$0xff]
  %v192 = vld [vmem:[%s0 + $0x170] sm:$0xff]
  %v193 = vld [vmem:[%s0 + $0x178] sm:$0xff]
  %v194 = vld [vmem:[%s0 + $0x180] sm:$0xff]
  %v195 = vld [vmem:[%s0 + $0x188] sm:$0xff]
  %v196 = vld [vmem:[%s0 + $0x190] sm:$0xff]
  %v197 = vld [vmem:[%s0 + $0x198] sm:$0xff]
  %v198 = vld [vmem:[%s0 + $0x1a0] sm:$0xff]
  %v199 = vld [vmem:[%s0 + $0x1a8] sm:$0xff]
  %v200 = vld [vmem:[%s0 + $0x1b0] sm:$0xff]
  %v201 = vld [vmem:[%s0 + $0x1b8] sm:$0xff]
  %v202 = vld [vmem:[%s0 + $0x1c0] sm:$0xff]
  %v203 = vld [vmem:[%s0 + $0x1c8] sm:$0xff]
  %v204 = vld [vmem:[%s0 + $0x1d0] sm:$0xff]
  %v205 = vld [vmem:[%s0 + $0x1d8] sm:$0xff]
  %v206 = vld [vmem:[%s0 + $0x1e0] sm:$0xff]
  %v207 = vld [vmem:[%s0 + $0x1e8] sm:$0xff]
  %v208 = vld [vmem:[%s0 + $0x1f0] sm:$0xff]
  %v209 = vld [vmem:[%s0 + $0x1f8] sm:$0xff]
  %v210 = vld [vmem:[%s1] sm:$0xff]
  %v211 = vld [vmem:[%s1 + $0x8] sm:$0xff]
  %v212 = vld [vmem:[%s1 + $0x10] sm:$0xff]
  %v213 = vld [vmem:[%s1 + $0x18] sm:$0xff]
  %v214 = vld [vmem:[%s1 + $0x20] sm:$0xff]
  %v215 = vld [vmem:[%s1 + $0x28] sm:$0xff]
  %vm216 = vcmask 392192
  %v218 = vsel %vm216, %v146, 0
  %v221 = vsel %vm216, %v147, 0
  %v224 = vsel %vm216, %v148, 0
  %v227 = vsel %vm216, %v149, 0
  %v230 = vsel %vm216, %v150, 0
  %v233 = vsel %vm216, %v151, 0
  %v236 = vsel %vm216, %v152, 0
  %v239 = vsel %vm216, %v153, 0
  %v242 = vsel %vm216, %v154, 0
  %v245 = vsel %vm216, %v155, 0
  %v248 = vsel %vm216, %v156, 0
  %v251 = vsel %vm216, %v157, 0
  %v254 = vsel %vm216, %v158, 0
  %v257 = vsel %vm216, %v159, 0
  %v260 = vsel %vm216, %v160, 0
  %v263 = vsel %vm216, %v161, 0
  %v266 = vsel %vm216, %v162, 0
  %v269 = vsel %vm216, %v163, 0
  %v272 = vsel %vm216, %v164, 0
  %v275 = vsel %vm216, %v165, 0
  %v278 = vsel %vm216, %v166, 0
  %v281 = vsel %vm216, %v167, 0
  %v284 = vsel %vm216, %v168, 0
  %v287 = vsel %vm216, %v169, 0
  %v290 = vsel %vm216, %v170, 0
  %v293 = vsel %vm216, %v171, 0
  %v296 = vsel %vm216, %v172, 0
  %v299 = vsel %vm216, %v173, 0
  %v302 = vsel %vm216, %v174, 0
  %v305 = vsel %vm216, %v175, 0
  %v308 = vsel %vm216, %v176, 0
  %v311 = vsel %vm216, %v177, 0
  %v314 = vsel %vm216, %v178, 0
  %v317 = vsel %vm216, %v179, 0
  %v320 = vsel %vm216, %v180, 0
  %v323 = vsel %vm216, %v181, 0
  %v326 = vsel %vm216, %v182, 0
  %v329 = vsel %vm216, %v183, 0
  %v332 = vsel %vm216, %v184, 0
  %v335 = vsel %vm216, %v185, 0
  %v338 = vsel %vm216, %v186, 0
  %v341 = vsel %vm216, %v187, 0
  %v344 = vsel %vm216, %v188, 0
  %v347 = vsel %vm216, %v189, 0
  %v350 = vsel %vm216, %v190, 0
  %v353 = vsel %vm216, %v191, 0
  %v356 = vsel %vm216, %v192, 0
  %v359 = vsel %vm216, %v193, 0
  %v362 = vsel %vm216, %v194, 0
  %v365 = vsel %vm216, %v195, 0
  %v368 = vsel %vm216, %v196, 0
  %v371 = vsel %vm216, %v197, 0
  %v374 = vsel %vm216, %v198, 0
  %v377 = vsel %vm216, %v199, 0
  %v380 = vsel %vm216, %v200, 0
  %v383 = vsel %vm216, %v201, 0
  %v386 = vsel %vm216, %v202, 0
  %v389 = vsel %vm216, %v203, 0
  %v392 = vsel %vm216, %v204, 0
  %v395 = vsel %vm216, %v205, 0
  %v398 = vsel %vm216, %v206, 0
  %v401 = vsel %vm216, %v207, 0
  %v404 = vsel %vm216, %v208, 0
  %v407 = vsel %vm216, %v209, 0
  %409 = vmatpush.msra.mxu0 0.0
  %410 = vmatpush.msra.mxu0 0.0
  %411 = vmatpush.msra.mxu0 0.0
  %412 = vmatpush.msra.mxu0 0.0
  %413 = vmatpush.msra.mxu0 0.0
  %414 = vmatpush.msra.mxu0 0.0
  %415 = vmatpush.msra.mxu0 0.0
  %416 = vmatpush.msra.mxu0 0.0
  %417 = vmatpush.msra.mxu0 0.0
  %418 = vmatpush.msra.mxu0 0.0
  %419 = vmatpush.msra.mxu0 %v215
  %420 = vmatpush.msra.mxu0 %v214
  %421 = vmatpush.msra.mxu0 %v213
  %422 = vmatpush.msra.mxu0 %v212
  %423 = vmatpush.msra.mxu0 %v211
  %424 = vmatpush.msra.mxu0 %v210
  %425 = vmatmul.f32.gmra.mxu0 %v218
  %v426 = vpop.f32.mrf.mxu0
  %v427 = vadd.f32 0.0, %v426
  %428 = vmatmul.f32.gmra.mxu0 %v221
  %v429 = vpop.f32.mrf.mxu0
  %v430 = vadd.f32 0.0, %v429
  %431 = vmatmul.f32.gmra.mxu0 %v224
  %v432 = vpop.f32.mrf.mxu0
  %v433 = vadd.f32 0.0, %v432
  %434 = vmatmul.f32.gmra.mxu0 %v227
  %v435 = vpop.f32.mrf.mxu0
  %v436 = vadd.f32 0.0, %v435
  %437 = vmatmul.f32.gmra.mxu0 %v230
  %v438 = vpop.f32.mrf.mxu0
  %v439 = vadd.f32 0.0, %v438
  %440 = vmatmul.f32.gmra.mxu0 %v233
  %v441 = vpop.f32.mrf.mxu0
  %v442 = vadd.f32 0.0, %v441
  %443 = vmatmul.f32.gmra.mxu0 %v236
  %v444 = vpop.f32.mrf.mxu0
  %v445 = vadd.f32 0.0, %v444
  %446 = vmatmul.f32.gmra.mxu0 %v239
  %v447 = vpop.f32.mrf.mxu0
  %v448 = vadd.f32 0.0, %v447
  %449 = vmatmul.f32.gmra.mxu0 %v242
  %v450 = vpop.f32.mrf.mxu0
  %v451 = vadd.f32 0.0, %v450
  %452 = vmatmul.f32.gmra.mxu0 %v245
  %v453 = vpop.f32.mrf.mxu0
  %v454 = vadd.f32 0.0, %v453
  %455 = vmatmul.f32.gmra.mxu0 %v248
  %v456 = vpop.f32.mrf.mxu0
  %v457 = vadd.f32 0.0, %v456
  %458 = vmatmul.f32.gmra.mxu0 %v251
  %v459 = vpop.f32.mrf.mxu0
  %v460 = vadd.f32 0.0, %v459
  %461 = vmatmul.f32.gmra.mxu0 %v254
  %v462 = vpop.f32.mrf.mxu0
  %v463 = vadd.f32 0.0, %v462
  %464 = vmatmul.f32.gmra.mxu0 %v257
  %v465 = vpop.f32.mrf.mxu0
  %v466 = vadd.f32 0.0, %v465
  %467 = vmatmul.f32.gmra.mxu0 %v260
  %v468 = vpop.f32.mrf.mxu0
  %v469 = vadd.f32 0.0, %v468
  %470 = vmatmul.f32.gmra.mxu0 %v263
  %v471 = vpop.f32.mrf.mxu0
  %v472 = vadd.f32 0.0, %v471
  %473 = vmatmul.f32.gmra.mxu0 %v266
  %v474 = vpop.f32.mrf.mxu0
  %v475 = vadd.f32 0.0, %v474
  %476 = vmatmul.f32.gmra.mxu0 %v269
  %v477 = vpop.f32.mrf.mxu0
  %v478 = vadd.f32 0.0, %v477
  %479 = vmatmul.f32.gmra.mxu0 %v272
  %v480 = vpop.f32.mrf.mxu0
  %v481 = vadd.f32 0.0, %v480
  %482 = vmatmul.f32.gmra.mxu0 %v275
  %v483 = vpop.f32.mrf.mxu0
  %v484 = vadd.f32 0.0, %v483
  %485 = vmatmul.f32.gmra.mxu0 %v278
  %v486 = vpop.f32.mrf.mxu0
  %v487 = vadd.f32 0.0, %v486
  %488 = vmatmul.f32.gmra.mxu0 %v281
  %v489 = vpop.f32.mrf.mxu0
  %v490 = vadd.f32 0.0, %v489
  %491 = vmatmul.f32.gmra.mxu0 %v284
  %v492 = vpop.f32.mrf.mxu0
  %v493 = vadd.f32 0.0, %v492
  %494 = vmatmul.f32.gmra.mxu0 %v287
  %v495 = vpop.f32.mrf.mxu0
  %v496 = vadd.f32 0.0, %v495
  %497 = vmatmul.f32.gmra.mxu0 %v290
  %v498 = vpop.f32.mrf.mxu0
  %v499 = vadd.f32 0.0, %v498
  %500 = vmatmul.f32.gmra.mxu0 %v293
  %v501 = vpop.f32.mrf.mxu0
  %v502 = vadd.f32 0.0, %v501
  %503 = vmatmul.f32.gmra.mxu0 %v296
  %v504 = vpop.f32.mrf.mxu0
  %v505 = vadd.f32 0.0, %v504
  %506 = vmatmul.f32.gmra.mxu0 %v299
  %v507 = vpop.f32.mrf.mxu0
  %v508 = vadd.f32 0.0, %v507
  %509 = vmatmul.f32.gmra.mxu0 %v302
  %v510 = vpop.f32.mrf.mxu0
  %v511 = vadd.f32 0.0, %v510
  %512 = vmatmul.f32.gmra.mxu0 %v305
  %v513 = vpop.f32.mrf.mxu0
  %v514 = vadd.f32 0.0, %v513
  %515 = vmatmul.f32.gmra.mxu0 %v308
  %v516 = vpop.f32.mrf.mxu0
  %v517 = vadd.f32 0.0, %v516
  %518 = vmatmul.f32.gmra.mxu0 %v311
  %v519 = vpop.f32.mrf.mxu0
  %v520 = vadd.f32 0.0, %v519
  %521 = vmatmul.f32.gmra.mxu0 %v314
  %v522 = vpop.f32.mrf.mxu0
  %v523 = vadd.f32 0.0, %v522
  %524 = vmatmul.f32.gmra.mxu0 %v317
  %v525 = vpop.f32.mrf.mxu0
  %v526 = vadd.f32 0.0, %v525
  %527 = vmatmul.f32.gmra.mxu0 %v320
  %v528 = vpop.f32.mrf.mxu0
  %v529 = vadd.f32 0.0, %v528
  %530 = vmatmul.f32.gmra.mxu0 %v323
  %v531 = vpop.f32.mrf.mxu0
  %v532 = vadd.f32 0.0, %v531
  %533 = vmatmul.f32.gmra.mxu0 %v326
  %v534 = vpop.f32.mrf.mxu0
  %v535 = vadd.f32 0.0, %v534
  %536 = vmatmul.f32.gmra.mxu0 %v329
  %v537 = vpop.f32.mrf.mxu0
  %v538 = vadd.f32 0.0, %v537
  %539 = vmatmul.f32.gmra.mxu0 %v332
  %v540 = vpop.f32.mrf.mxu0
  %v541 = vadd.f32 0.0, %v540
  %542 = vmatmul.f32.gmra.mxu0 %v335
  %v543 = vpop.f32.mrf.mxu0
  %v544 = vadd.f32 0.0, %v543
  %545 = vmatmul.f32.gmra.mxu0 %v338
  %v546 = vpop.f32.mrf.mxu0
  %v547 = vadd.f32 0.0, %v546
  %548 = vmatmul.f32.gmra.mxu0 %v341
  %v549 = vpop.f32.mrf.mxu0
  %v550 = vadd.f32 0.0, %v549
  %551 = vmatmul.f32.gmra.mxu0 %v344
  %v552 = vpop.f32.mrf.mxu0
  %v553 = vadd.f32 0.0, %v552
  %554 = vmatmul.f32.gmra.mxu0 %v347
  %v555 = vpop.f32.mrf.mxu0
  %v556 = vadd.f32 0.0, %v555
  %557 = vmatmul.f32.gmra.mxu0 %v350
  %v558 = vpop.f32.mrf.mxu0
  %v559 = vadd.f32 0.0, %v558
  %560 = vmatmul.f32.gmra.mxu0 %v353
  %v561 = vpop.f32.mrf.mxu0
  %v562 = vadd.f32 0.0, %v561
  %563 = vmatmul.f32.gmra.mxu0 %v356
  %v564 = vpop.f32.mrf.mxu0
  %v565 = vadd.f32 0.0, %v564
  %566 = vmatmul.f32.gmra.mxu0 %v359
  %v567 = vpop.f32.mrf.mxu0
  %v568 = vadd.f32 0.0, %v567
  %569 = vmatmul.f32.gmra.mxu0 %v362
  %v570 = vpop.f32.mrf.mxu0
  %v571 = vadd.f32 0.0, %v570
  %572 = vmatmul.f32.gmra.mxu0 %v365
  %v573 = vpop.f32.mrf.mxu0
  %v574 = vadd.f32 0.0, %v573
  %575 = vmatmul.f32.gmra.mxu0 %v368
  %v576 = vpop.f32.mrf.mxu0
  %v577 = vadd.f32 0.0, %v576
  %578 = vmatmul.f32.gmra.mxu0 %v371
  %v579 = vpop.f32.mrf.mxu0
  %v580 = vadd.f32 0.0, %v579
  %581 = vmatmul.f32.gmra.mxu0 %v374
  %v582 = vpop.f32.mrf.mxu0
  %v583 = vadd.f32 0.0, %v582
  %584 = vmatmul.f32.gmra.mxu0 %v377
  %v585 = vpop.f32.mrf.mxu0
  %v586 = vadd.f32 0.0, %v585
  %587 = vmatmul.f32.gmra.mxu0 %v380
  %v588 = vpop.f32.mrf.mxu0
  %v589 = vadd.f32 0.0, %v588
  %590 = vmatmul.f32.gmra.mxu0 %v383
  %v591 = vpop.f32.mrf.mxu0
  %v592 = vadd.f32 0.0, %v591
  %593 = vmatmul.f32.gmra.mxu0 %v386
  %v594 = vpop.f32.mrf.mxu0
  %v595 = vadd.f32 0.0, %v594
  %596 = vmatmul.f32.gmra.mxu0 %v389
  %v597 = vpop.f32.mrf.mxu0
  %v598 = vadd.f32 0.0, %v597
  %599 = vmatmul.f32.gmra.mxu0 %v392
  %v600 = vpop.f32.mrf.mxu0
  %v601 = vadd.f32 0.0, %v600
  %602 = vmatmul.f32.gmra.mxu0 %v395
  %v603 = vpop.f32.mrf.mxu0
  %v604 = vadd.f32 0.0, %v603
  %605 = vmatmul.f32.gmra.mxu0 %v398
  %v606 = vpop.f32.mrf.mxu0
  %v607 = vadd.f32 0.0, %v606
  %608 = vmatmul.f32.gmra.mxu0 %v401
  %v609 = vpop.f32.mrf.mxu0
  %v610 = vadd.f32 0.0, %v609
  %611 = vmatmul.f32.gmra.mxu0 %v404
  %v612 = vpop.f32.mrf.mxu0
  %v613 = vadd.f32 0.0, %v612
  %614 = vmatmul.f32.gmra.mxu0 %v407
  %v615 = vpop.f32.mrf.mxu0
  %v616 = vadd.f32 0.0, %v615
  %617 = vdwg.mxu0
  %v618 = vadd.f32 %v82, %v427
  %v619 = vadd.f32 %v83, %v430
  %v620 = vadd.f32 %v84, %v433
  %v621 = vadd.f32 %v85, %v436
  %v622 = vadd.f32 %v86, %v439
  %v623 = vadd.f32 %v87, %v442
  %v624 = vadd.f32 %v88, %v445
  %v625 = vadd.f32 %v89, %v448
  %v626 = vadd.f32 %v90, %v451
  %v627 = vadd.f32 %v91, %v454
  %v628 = vadd.f32 %v92, %v457
  %v629 = vadd.f32 %v93, %v460
  %v630 = vadd.f32 %v94, %v463
  %v631 = vadd.f32 %v95, %v466
  %v632 = vadd.f32 %v96, %v469
  %v633 = vadd.f32 %v97, %v472
  %v634 = vadd.f32 %v98, %v475
  %v635 = vadd.f32 %v99, %v478
  %v636 = vadd.f32 %v100, %v481
  %v637 = vadd.f32 %v101, %v484
  %v638 = vadd.f32 %v102, %v487
  %v639 = vadd.f32 %v103, %v490
  %v640 = vadd.f32 %v104, %v493
  %v641 = vadd.f32 %v105, %v496
  %v642 = vadd.f32 %v106, %v499
  %v643 = vadd.f32 %v107, %v502
  %v644 = vadd.f32 %v108, %v505
  %v645 = vadd.f32 %v109, %v508
  %v646 = vadd.f32 %v110, %v511
  %v647 = vadd.f32 %v111, %v514
  %v648 = vadd.f32 %v112, %v517
  %v649 = vadd.f32 %v113, %v520
  %v650 = vadd.f32 %v114, %v523
  %v651 = vadd.f32 %v115, %v526
  %v652 = vadd.f32 %v116, %v529
  %v653 = vadd.f32 %v117, %v532
  %v654 = vadd.f32 %v118, %v535
  %v655 = vadd.f32 %v119, %v538
  %v656 = vadd.f32 %v120, %v541
  %v657 = vadd.f32 %v121, %v544
  %v658 = vadd.f32 %v122, %v547
  %v659 = vadd.f32 %v123, %v550
  %v660 = vadd.f32 %v124, %v553
  %v661 = vadd.f32 %v125, %v556
  %v662 = vadd.f32 %v126, %v559
  %v663 = vadd.f32 %v127, %v562
  %v664 = vadd.f32 %v128, %v565
  %v665 = vadd.f32 %v129, %v568
  %v666 = vadd.f32 %v130, %v571
  %v667 = vadd.f32 %v131, %v574
  %v668 = vadd.f32 %v132, %v577
  %v669 = vadd.f32 %v133, %v580
  %v670 = vadd.f32 %v134, %v583
  %v671 = vadd.f32 %v135, %v586
  %v672 = vadd.f32 %v136, %v589
  %v673 = vadd.f32 %v137, %v592
  %v674 = vadd.f32 %v138, %v595
  %v675 = vadd.f32 %v139, %v598
  %v676 = vadd.f32 %v140, %v601
  %v677 = vadd.f32 %v141, %v604
  %v678 = vadd.f32 %v142, %v607
  %v679 = vadd.f32 %v143, %v610
  %v680 = vadd.f32 %v144, %v613
  %v681 = vadd.f32 %v145, %v616
  %682 = vst [vmem:[#allocation2] sm:$0xff] %v618
  %683 = vst [vmem:[#allocation2 + $0x8] sm:$0xff] %v619
  %684 = vst [vmem:[#allocation2 + $0x10] sm:$0xff] %v620
  %685 = vst [vmem:[#allocation2 + $0x18] sm:$0xff] %v621
  %686 = vst [vmem:[#allocation2 + $0x20] sm:$0xff] %v622
  %687 = vst [vmem:[#allocation2 + $0x28] sm:$0xff] %v623
  %688 = vst [vmem:[#allocation2 + $0x30] sm:$0xff] %v624
  %689 = vst [vmem:[#allocation2 + $0x38] sm:$0xff] %v625
  %690 = vst [vmem:[#allocation2 + $0x40] sm:$0xff] %v626
  %691 = vst [vmem:[#allocation2 + $0x48] sm:$0xff] %v627
  %692 = vst [vmem:[#allocation2 + $0x50] sm:$0xff] %v628
  %693 = vst [vmem:[#allocation2 + $0x58] sm:$0xff] %v629
  %694 = vst [vmem:[#allocation2 + $0x60] sm:$0xff] %v630
  %695 = vst [vmem:[#allocation2 + $0x68] sm:$0xff] %v631
  %696 = vst [vmem:[#allocation2 + $0x70] sm:$0xff] %v632
  %697 = vst [vmem:[#allocation2 + $0x78] sm:$0xff] %v633
  %698 = vst [vmem:[#allocation2 + $0x80] sm:$0xff] %v634
  %699 = vst [vmem:[#allocation2 + $0x88] sm:$0xff] %v635
  %700 = vst [vmem:[#allocation2 + $0x90] sm:$0xff] %v636
  %701 = vst [vmem:[#allocation2 + $0x98] sm:$0xff] %v637
  %702 = vst [vmem:[#allocation2 + $0xa0] sm:$0xff] %v638
  %703 = vst [vmem:[#allocation2 + $0xa8] sm:$0xff] %v639
  %704 = vst [vmem:[#allocation2 + $0xb0] sm:$0xff] %v640
  %705 = vst [vmem:[#allocation2 + $0xb8] sm:$0xff] %v641
  %706 = vst [vmem:[#allocation2 + $0xc0] sm:$0xff] %v642
  %707 = vst [vmem:[#allocation2 + $0xc8] sm:$0xff] %v643
  %708 = vst [vmem:[#allocation2 + $0xd0] sm:$0xff] %v644
  %709 = vst [vmem:[#allocation2 + $0xd8] sm:$0xff] %v645
  %710 = vst [vmem:[#allocation2 + $0xe0] sm:$0xff] %v646
  %711 = vst [vmem:[#allocation2 + $0xe8] sm:$0xff] %v647
  %712 = vst [vmem:[#allocation2 + $0xf0] sm:$0xff] %v648
  %713 = vst [vmem:[#allocation2 + $0xf8] sm:$0xff] %v649
  %714 = vst [vmem:[#allocation2 + $0x100] sm:$0xff] %v650
  %715 = vst [vmem:[#allocation2 + $0x108] sm:$0xff] %v651
  %716 = vst [vmem:[#allocation2 + $0x110] sm:$0xff] %v652
  %717 = vst [vmem:[#allocation2 + $0x118] sm:$0xff] %v653
  %718 = vst [vmem:[#allocation2 + $0x120] sm:$0xff] %v654
  %719 = vst [vmem:[#allocation2 + $0x128] sm:$0xff] %v655
  %720 = vst [vmem:[#allocation2 + $0x130] sm:$0xff] %v656
  %721 = vst [vmem:[#allocation2 + $0x138] sm:$0xff] %v657
  %722 = vst [vmem:[#allocation2 + $0x140] sm:$0xff] %v658
  %723 = vst [vmem:[#allocation2 + $0x148] sm:$0xff] %v659
  %724 = vst [vmem:[#allocation2 + $0x150] sm:$0xff] %v660
  %725 = vst [vmem:[#allocation2 + $0x158] sm:$0xff] %v661
  %726 = vst [vmem:[#allocation2 + $0x160] sm:$0xff] %v662
  %727 = vst [vmem:[#allocation2 + $0x168] sm:$0xff] %v663
  %728 = vst [vmem:[#allocation2 + $0x170] sm:$0xff] %v664
  %729 = vst [vmem:[#allocation2 + $0x178] sm:$0xff] %v665
  %730 = vst [vmem:[#allocation2 + $0x180] sm:$0xff] %v666
  %731 = vst [vmem:[#allocation2 + $0x188] sm:$0xff] %v667
  %732 = vst [vmem:[#allocation2 + $0x190] sm:$0xff] %v668
  %733 = vst [vmem:[#allocation2 + $0x198] sm:$0xff] %v669
  %734 = vst [vmem:[#allocation2 + $0x1a0] sm:$0xff] %v670
  %735 = vst [vmem:[#allocation2 + $0x1a8] sm:$0xff] %v671
  %736 = vst [vmem:[#allocation2 + $0x1b0] sm:$0xff] %v672
  %737 = vst [vmem:[#allocation2 + $0x1b8] sm:$0xff] %v673
  %738 = vst [vmem:[#allocation2 + $0x1c0] sm:$0xff] %v674
  %739 = vst [vmem:[#allocation2 + $0x1c8] sm:$0xff] %v675
  %740 = vst [vmem:[#allocation2 + $0x1d0] sm:$0xff] %v676
  %741 = vst [vmem:[#allocation2 + $0x1d8] sm:$0xff] %v677
  %742 = vst [vmem:[#allocation2 + $0x1e0] sm:$0xff] %v678
  %743 = vst [vmem:[#allocation2 + $0x1e8] sm:$0xff] %v679
  %744 = vst [vmem:[#allocation2 + $0x1f0] sm:$0xff] %v680
  %745 = vst [vmem:[#allocation2 + $0x1f8] sm:$0xff] %v681
  // Predicated region
  $region18: #{_lambda_.8} parent=0 // pred_check
    %p746 = pneg %p14
  $region19: #{_lambda_.8} parent=0 // pred_check_branch
    %748 = sbr.rel (%p746) target = $region21
  $region20: #{_lambda_.8} parent=0 // pred_region
    %v749 = vld [vmem:[#allocation2] sm:$0xff]
    %v750 = vld [vmem:[#allocation2 + $0x8] sm:$0xff]
    %v751 = vld [vmem:[#allocation2 + $0x10] sm:$0xff]
    %v752 = vld [vmem:[#allocation2 + $0x18] sm:$0xff]
    %v753 = vld [vmem:[#allocation2 + $0x20] sm:$0xff]
    %v754 = vld [vmem:[#allocation2 + $0x28] sm:$0xff]
    %v755 = vld [vmem:[#allocation2 + $0x30] sm:$0xff]
    %v756 = vld [vmem:[#allocation2 + $0x38] sm:$0xff]
    %v757 = vld [vmem:[#allocation2 + $0x40] sm:$0xff]
    %v758 = vld [vmem:[#allocation2 + $0x48] sm:$0xff]
    %v759 = vld [vmem:[#allocation2 + $0x50] sm:$0xff]
    %v760 = vld [vmem:[#allocation2 + $0x58] sm:$0xff]
    %v761 = vld [vmem:[#allocation2 + $0x60] sm:$0xff]
    %v762 = vld [vmem:[#allocation2 + $0x68] sm:$0xff]
    %v763 = vld [vmem:[#allocation2 + $0x70] sm:$0xff]
    %v764 = vld [vmem:[#allocation2 + $0x78] sm:$0xff]
    %v765 = vld [vmem:[#allocation2 + $0x80] sm:$0xff]
    %v766 = vld [vmem:[#allocation2 + $0x88] sm:$0xff]
    %v767 = vld [vmem:[#allocation2 + $0x90] sm:$0xff]
    %v768 = vld [vmem:[#allocation2 + $0x98] sm:$0xff]
    %v769 = vld [vmem:[#allocation2 + $0xa0] sm:$0xff]
    %v770 = vld [vmem:[#allocation2 + $0xa8] sm:$0xff]
    %v771 = vld [vmem:[#allocation2 + $0xb0] sm:$0xff]
    %v772 = vld [vmem:[#allocation2 + $0xb8] sm:$0xff]
    %v773 = vld [vmem:[#allocation2 + $0xc0] sm:$0xff]
    %v774 = vld [vmem:[#allocation2 + $0xc8] sm:$0xff]
    %v775 = vld [vmem:[#allocation2 + $0xd0] sm:$0xff]
    %v776 = vld [vmem:[#allocation2 + $0xd8] sm:$0xff]
    %v777 = vld [vmem:[#allocation2 + $0xe0] sm:$0xff]
    %v778 = vld [vmem:[#allocation2 + $0xe8] sm:$0xff]
    %v779 = vld [vmem:[#allocation2 + $0xf0] sm:$0xff]
    %v780 = vld [vmem:[#allocation2 + $0xf8] sm:$0xff]
    %v781 = vld [vmem:[#allocation2 + $0x100] sm:$0xff]
    %v782 = vld [vmem:[#allocation2 + $0x108] sm:$0xff]
    %v783 = vld [vmem:[#allocation2 + $0x110] sm:$0xff]
    %v784 = vld [vmem:[#allocation2 + $0x118] sm:$0xff]
    %v785 = vld [vmem:[#allocation2 + $0x120] sm:$0xff]
    %v786 = vld [vmem:[#allocation2 + $0x128] sm:$0xff]
    %v787 = vld [vmem:[#allocation2 + $0x130] sm:$0xff]
    %v788 = vld [vmem:[#allocation2 + $0x138] sm:$0xff]
    %v789 = vld [vmem:[#allocation2 + $0x140] sm:$0xff]
    %v790 = vld [vmem:[#allocation2 + $0x148] sm:$0xff]
    %v791 = vld [vmem:[#allocation2 + $0x150] sm:$0xff]
    %v792 = vld [vmem:[#allocation2 + $0x158] sm:$0xff]
    %v793 = vld [vmem:[#allocation2 + $0x160] sm:$0xff]
    %v794 = vld [vmem:[#allocation2 + $0x168] sm:$0xff]
    %v795 = vld [vmem:[#allocation2 + $0x170] sm:$0xff]
    %v796 = vld [vmem:[#allocation2 + $0x178] sm:$0xff]
    %v797 = vld [vmem:[#allocation2 + $0x180] sm:$0xff]
    %v798 = vld [vmem:[#allocation2 + $0x188] sm:$0xff]
    %v799 = vld [vmem:[#allocation2 + $0x190] sm:$0xff]
    %v800 = vld [vmem:[#allocation2 + $0x198] sm:$0xff]
    %v801 = vld [vmem:[#allocation2 + $0x1a0] sm:$0xff]
    %v802 = vld [vmem:[#allocation2 + $0x1a8] sm:$0xff]
    %v803 = vld [vmem:[#allocation2 + $0x1b0] sm:$0xff]
    %v804 = vld [vmem:[#allocation2 + $0x1b8] sm:$0xff]
    %v805 = vld [vmem:[#allocation2 + $0x1c0] sm:$0xff]
    %v806 = vld [vmem:[#allocation2 + $0x1c8] sm:$0xff]
    %v807 = vld [vmem:[#allocation2 + $0x1d0] sm:$0xff]
    %v808 = vld [vmem:[#allocation2 + $0x1d8] sm:$0xff]
    %v809 = vld [vmem:[#allocation2 + $0x1e0] sm:$0xff]
    %v810 = vld [vmem:[#allocation2 + $0x1e8] sm:$0xff]
    %v811 = vld [vmem:[#allocation2 + $0x1f0] sm:$0xff]
    %v812 = vld [vmem:[#allocation2 + $0x1f8] sm:$0xff]
    %v813 = vld [vmem:[%s2] sm:$0x1]
    %v815 = vperm.slane %v813, 0
    %v817 = vadd.f32 %v749, %v815
    %v818 = vadd.f32 %v750, %v815
    %v819 = vadd.f32 %v751, %v815
    %v820 = vadd.f32 %v752, %v815
    %v821 = vadd.f32 %v753, %v815
    %v822 = vadd.f32 %v754, %v815
    %v823 = vadd.f32 %v755, %v815
    %v824 = vadd.f32 %v756, %v815
    %v825 = vadd.f32 %v757, %v815
    %v826 = vadd.f32 %v758, %v815
    %v827 = vadd.f32 %v759, %v815
    %v828 = vadd.f32 %v760, %v815
    %v829 = vadd.f32 %v761, %v815
    %v830 = vadd.f32 %v762, %v815
    %v831 = vadd.f32 %v763, %v815
    %v832 = vadd.f32 %v764, %v815
    %v833 = vadd.f32 %v765, %v815
    %v834 = vadd.f32 %v766, %v815
    %v835 = vadd.f32 %v767, %v815
    %v836 = vadd.f32 %v768, %v815
    %v837 = vadd.f32 %v769, %v815
    %v838 = vadd.f32 %v770, %v815
    %v839 = vadd.f32 %v771, %v815
    %v840 = vadd.f32 %v772, %v815
    %v841 = vadd.f32 %v773, %v815
    %v842 = vadd.f32 %v774, %v815
    %v843 = vadd.f32 %v775, %v815
    %v844 = vadd.f32 %v776, %v815
    %v845 = vadd.f32 %v777, %v815
    %v846 = vadd.f32 %v778, %v815
    %v847 = vadd.f32 %v779, %v815
    %v848 = vadd.f32 %v780, %v815
    %v849 = vadd.f32 %v781, %v815
    %v850 = vadd.f32 %v782, %v815
    %v851 = vadd.f32 %v783, %v815
    %v852 = vadd.f32 %v784, %v815
    %v853 = vadd.f32 %v785, %v815
    %v854 = vadd.f32 %v786, %v815
    %v855 = vadd.f32 %v787, %v815
    %v856 = vadd.f32 %v788, %v815
    %v857 = vadd.f32 %v789, %v815
    %v858 = vadd.f32 %v790, %v815
    %v859 = vadd.f32 %v791, %v815
    %v860 = vadd.f32 %v792, %v815
    %v861 = vadd.f32 %v793, %v815
    %v862 = vadd.f32 %v794, %v815
    %v863 = vadd.f32 %v795, %v815
    %v864 = vadd.f32 %v796, %v815
    %v865 = vadd.f32 %v797, %v815
    %v866 = vadd.f32 %v798, %v815
    %v867 = vadd.f32 %v799, %v815
    %v868 = vadd.f32 %v800, %v815
    %v869 = vadd.f32 %v801, %v815
    %v870 = vadd.f32 %v802, %v815
    %v871 = vadd.f32 %v803, %v815
    %v872 = vadd.f32 %v804, %v815
    %v873 = vadd.f32 %v805, %v815
    %v874 = vadd.f32 %v806, %v815
    %v875 = vadd.f32 %v807, %v815
    %v876 = vadd.f32 %v808, %v815
    %v877 = vadd.f32 %v809, %v815
    %v878 = vadd.f32 %v810, %v815
    %v879 = vadd.f32 %v811, %v815
    %v880 = vadd.f32 %v812, %v815
    %vm881 = vcmp.ge.f32.partialorder %v817, 0.0
    %vm882 = vcmp.ge.f32.partialorder %v818, 0.0
    %vm883 = vcmp.ge.f32.partialorder %v819, 0.0
    %vm884 = vcmp.ge.f32.partialorder %v820, 0.0
    %vm885 = vcmp.ge.f32.partialorder %v821, 0.0
    %vm886 = vcmp.ge.f32.partialorder %v822, 0.0
    %vm887 = vcmp.ge.f32.partialorder %v823, 0.0
    %vm888 = vcmp.ge.f32.partialorder %v824, 0.0
    %vm889 = vcmp.ge.f32.partialorder %v825, 0.0
    %vm890 = vcmp.ge.f32.partialorder %v826, 0.0
    %vm891 = vcmp.ge.f32.partialorder %v827, 0.0
    %vm892 = vcmp.ge.f32.partialorder %v828, 0.0
    %vm893 = vcmp.ge.f32.partialorder %v829, 0.0
    %vm894 = vcmp.ge.f32.partialorder %v830, 0.0
    %vm895 = vcmp.ge.f32.partialorder %v831, 0.0
    %vm896 = vcmp.ge.f32.partialorder %v832, 0.0
    %vm897 = vcmp.ge.f32.partialorder %v833, 0.0
    %vm898 = vcmp.ge.f32.partialorder %v834, 0.0
    %vm899 = vcmp.ge.f32.partialorder %v835, 0.0
    %vm900 = vcmp.ge.f32.partialorder %v836, 0.0
    %vm901 = vcmp.ge.f32.partialorder %v837, 0.0
    %vm902 = vcmp.ge.f32.partialorder %v838, 0.0
    %vm903 = vcmp.ge.f32.partialorder %v839, 0.0
    %vm904 = vcmp.ge.f32.partialorder %v840, 0.0
    %vm905 = vcmp.ge.f32.partialorder %v841, 0.0
    %vm906 = vcmp.ge.f32.partialorder %v842, 0.0
    %vm907 = vcmp.ge.f32.partialorder %v843, 0.0
    %vm908 = vcmp.ge.f32.partialorder %v844, 0.0
    %vm909 = vcmp.ge.f32.partialorder %v845, 0.0
    %vm910 = vcmp.ge.f32.partialorder %v846, 0.0
    %vm911 = vcmp.ge.f32.partialorder %v847, 0.0
    %vm912 = vcmp.ge.f32.partialorder %v848, 0.0
    %vm913 = vcmp.ge.f32.partialorder %v849, 0.0
    %vm914 = vcmp.ge.f32.partialorder %v850, 0.0
    %vm915 = vcmp.ge.f32.partialorder %v851, 0.0
    %vm916 = vcmp.ge.f32.partialorder %v852, 0.0
    %vm917 = vcmp.ge.f32.partialorder %v853, 0.0
    %vm918 = vcmp.ge.f32.partialorder %v854, 0.0
    %vm919 = vcmp.ge.f32.partialorder %v855, 0.0
    %vm920 = vcmp.ge.f32.partialorder %v856, 0.0
    %vm921 = vcmp.ge.f32.partialorder %v857, 0.0
    %vm922 = vcmp.ge.f32.partialorder %v858, 0.0
    %vm923 = vcmp.ge.f32.partialorder %v859, 0.0
    %vm924 = vcmp.ge.f32.partialorder %v860, 0.0
    %vm925 = vcmp.ge.f32.partialorder %v861, 0.0
    %vm926 = vcmp.ge.f32.partialorder %v862, 0.0
    %vm927 = vcmp.ge.f32.partialorder %v863, 0.0
    %vm928 = vcmp.ge.f32.partialorder %v864, 0.0
    %vm929 = vcmp.ge.f32.partialorder %v865, 0.0
    %vm930 = vcmp.ge.f32.partialorder %v866, 0.0
    %vm931 = vcmp.ge.f32.partialorder %v867, 0.0
    %vm932 = vcmp.ge.f32.partialorder %v868, 0.0
    %vm933 = vcmp.ge.f32.partialorder %v869, 0.0
    %vm934 = vcmp.ge.f32.partialorder %v870, 0.0
    %vm935 = vcmp.ge.f32.partialorder %v871, 0.0
    %vm936 = vcmp.ge.f32.partialorder %v872, 0.0
    %vm937 = vcmp.ge.f32.partialorder %v873, 0.0
    %vm938 = vcmp.ge.f32.partialorder %v874, 0.0
    %vm939 = vcmp.ge.f32.partialorder %v875, 0.0
    %vm940 = vcmp.ge.f32.partialorder %v876, 0.0
    %vm941 = vcmp.ge.f32.partialorder %v877, 0.0
    %vm942 = vcmp.ge.f32.partialorder %v878, 0.0
    %vm943 = vcmp.ge.f32.partialorder %v879, 0.0
    %vm944 = vcmp.ge.f32.partialorder %v880, 0.0
    %v945 = vmul.f32 %v817, 0.2
    %v946 = vmul.f32 %v818, 0.2
    %v947 = vmul.f32 %v819, 0.2
    %v948 = vmul.f32 %v820, 0.2
    %v949 = vmul.f32 %v821, 0.2
    %v950 = vmul.f32 %v822, 0.2
    %v951 = vmul.f32 %v823, 0.2
    %v952 = vmul.f32 %v824, 0.2
    %v953 = vmul.f32 %v825, 0.2
    %v954 = vmul.f32 %v826, 0.2
    %v955 = vmul.f32 %v827, 0.2
    %v956 = vmul.f32 %v828, 0.2
    %v957 = vmul.f32 %v829, 0.2
    %v958 = vmul.f32 %v830, 0.2
    %v959 = vmul.f32 %v831, 0.2
    %v960 = vmul.f32 %v832, 0.2
    %v961 = vmul.f32 %v833, 0.2
    %v962 = vmul.f32 %v834, 0.2
    %v963 = vmul.f32 %v835, 0.2
    %v964 = vmul.f32 %v836, 0.2
    %v965 = vmul.f32 %v837, 0.2
    %v966 = vmul.f32 %v838, 0.2
    %v967 = vmul.f32 %v839, 0.2
    %v968 = vmul.f32 %v840, 0.2
    %v969 = vmul.f32 %v841, 0.2
    %v970 = vmul.f32 %v842, 0.2
    %v971 = vmul.f32 %v843, 0.2
    %v972 = vmul.f32 %v844, 0.2
    %v973 = vmul.f32 %v845, 0.2
    %v974 = vmul.f32 %v846, 0.2
    %v975 = vmul.f32 %v847, 0.2
    %v976 = vmul.f32 %v848, 0.2
    %v977 = vmul.f32 %v849, 0.2
    %v978 = vmul.f32 %v850, 0.2
    %v979 = vmul.f32 %v851, 0.2
    %v980 = vmul.f32 %v852, 0.2
    %v981 = vmul.f32 %v853, 0.2
    %v982 = vmul.f32 %v854, 0.2
    %v983 = vmul.f32 %v855, 0.2
    %v984 = vmul.f32 %v856, 0.2
    %v985 = vmul.f32 %v857, 0.2
    %v986 = vmul.f32 %v858, 0.2
    %v987 = vmul.f32 %v859, 0.2
    %v988 = vmul.f32 %v860, 0.2
    %v989 = vmul.f32 %v861, 0.2
    %v990 = vmul.f32 %v862, 0.2
    %v991 = vmul.f32 %v863, 0.2
    %v992 = vmul.f32 %v864, 0.2
    %v993 = vmul.f32 %v865, 0.2
    %v994 = vmul.f32 %v866, 0.2
    %v995 = vmul.f32 %v867, 0.2
    %v996 = vmul.f32 %v868, 0.2
    %v997 = vmul.f32 %v869, 0.2
    %v998 = vmul.f32 %v870, 0.2
    %v999 = vmul.f32 %v871, 0.2
    %v1000 = vmul.f32 %v872, 0.2
    %v1001 = vmul.f32 %v873, 0.2
    %v1002 = vmul.f32 %v874, 0.2
    %v1003 = vmul.f32 %v875, 0.2
    %v1004 = vmul.f32 %v876, 0.2
    %v1005 = vmul.f32 %v877, 0.2
    %v1006 = vmul.f32 %v878, 0.2
    %v1007 = vmul.f32 %v879, 0.2
    %v1008 = vmul.f32 %v880, 0.2
    %v1009 = vsel %vm881, %v817, %v945
    %v1010 = vsel %vm882, %v818, %v946
    %v1011 = vsel %vm883, %v819, %v947
    %v1012 = vsel %vm884, %v820, %v948
    %v1013 = vsel %vm885, %v821, %v949
    %v1014 = vsel %vm886, %v822, %v950
    %v1015 = vsel %vm887, %v823, %v951
    %v1016 = vsel %vm888, %v824, %v952
    %v1017 = vsel %vm889, %v825, %v953
    %v1018 = vsel %vm890, %v826, %v954
    %v1019 = vsel %vm891, %v827, %v955
    %v1020 = vsel %vm892, %v828, %v956
    %v1021 = vsel %vm893, %v829, %v957
    %v1022 = vsel %vm894, %v830, %v958
    %v1023 = vsel %vm895, %v831, %v959
    %v1024 = vsel %vm896, %v832, %v960
    %v1025 = vsel %vm897, %v833, %v961
    %v1026 = vsel %vm898, %v834, %v962
    %v1027 = vsel %vm899, %v835, %v963
    %v1028 = vsel %vm900, %v836, %v964
    %v1029 = vsel %vm901, %v837, %v965
    %v1030 = vsel %vm902, %v838, %v966
    %v1031 = vsel %vm903, %v839, %v967
    %v1032 = vsel %vm904, %v840, %v968
    %v1033 = vsel %vm905, %v841, %v969
    %v1034 = vsel %vm906, %v842, %v970
    %v1035 = vsel %vm907, %v843, %v971
    %v1036 = vsel %vm908, %v844, %v972
    %v1037 = vsel %vm909, %v845, %v973
    %v1038 = vsel %vm910, %v846, %v974
    %v1039 = vsel %vm911, %v847, %v975
    %v1040 = vsel %vm912, %v848, %v976
    %v1041 = vsel %vm913, %v849, %v977
    %v1042 = vsel %vm914, %v850, %v978
    %v1043 = vsel %vm915, %v851, %v979
    %v1044 = vsel %vm916, %v852, %v980
    %v1045 = vsel %vm917, %v853, %v981
    %v1046 = vsel %vm918, %v854, %v982
    %v1047 = vsel %vm919, %v855, %v983
    %v1048 = vsel %vm920, %v856, %v984
    %v1049 = vsel %vm921, %v857, %v985
    %v1050 = vsel %vm922, %v858, %v986
    %v1051 = vsel %vm923, %v859, %v987
    %v1052 = vsel %vm924, %v860, %v988
    %v1053 = vsel %vm925, %v861, %v989
    %v1054 = vsel %vm926, %v862, %v990
    %v1055 = vsel %vm927, %v863, %v991
    %v1056 = vsel %vm928, %v864, %v992
    %v1057 = vsel %vm929, %v865, %v993
    %v1058 = vsel %vm930, %v866, %v994
    %v1059 = vsel %vm931, %v867, %v995
    %v1060 = vsel %vm932, %v868, %v996
    %v1061 = vsel %vm933, %v869, %v997
    %v1062 = vsel %vm934, %v870, %v998
    %v1063 = vsel %vm935, %v871, %v999
    %v1064 = vsel %vm936, %v872, %v1000
    %v1065 = vsel %vm937, %v873, %v1001
    %v1066 = vsel %vm938, %v874, %v1002
    %v1067 = vsel %vm939, %v875, %v1003
    %v1068 = vsel %vm940, %v876, %v1004
    %v1069 = vsel %vm941, %v877, %v1005
    %v1070 = vsel %vm942, %v878, %v1006
    %v1071 = vsel %vm943, %v879, %v1007
    %v1072 = vsel %vm944, %v880, %v1008
    %1073 = vst [vmem:[%s3] sm:$0xff] %v1009
    %1074 = vst [vmem:[%s3 + $0x8] sm:$0xff] %v1010
    %1075 = vst [vmem:[%s3 + $0x10] sm:$0xff] %v1011
    %1076 = vst [vmem:[%s3 + $0x18] sm:$0xff] %v1012
    %1077 = vst [vmem:[%s3 + $0x20] sm:$0xff] %v1013
    %1078 = vst [vmem:[%s3 + $0x28] sm:$0xff] %v1014
    %1079 = vst [vmem:[%s3 + $0x30] sm:$0xff] %v1015
    %1080 = vst [vmem:[%s3 + $0x38] sm:$0xff] %v1016
    %1081 = vst [vmem:[%s3 + $0x40] sm:$0xff] %v1017
    %1082 = vst [vmem:[%s3 + $0x48] sm:$0xff] %v1018
    %1083 = vst [vmem:[%s3 + $0x50] sm:$0xff] %v1019
    %1084 = vst [vmem:[%s3 + $0x58] sm:$0xff] %v1020
    %1085 = vst [vmem:[%s3 + $0x60] sm:$0xff] %v1021
    %1086 = vst [vmem:[%s3 + $0x68] sm:$0xff] %v1022
    %1087 = vst [vmem:[%s3 + $0x70] sm:$0xff] %v1023
    %1088 = vst [vmem:[%s3 + $0x78] sm:$0xff] %v1024
    %1089 = vst [vmem:[%s3 + $0x80] sm:$0xff] %v1025
    %1090 = vst [vmem:[%s3 + $0x88] sm:$0xff] %v1026
    %1091 = vst [vmem:[%s3 + $0x90] sm:$0xff] %v1027
    %1092 = vst [vmem:[%s3 + $0x98] sm:$0xff] %v1028
    %1093 = vst [vmem:[%s3 + $0xa0] sm:$0xff] %v1029
    %1094 = vst [vmem:[%s3 + $0xa8] sm:$0xff] %v1030
    %1095 = vst [vmem:[%s3 + $0xb0] sm:$0xff] %v1031
    %1096 = vst [vmem:[%s3 + $0xb8] sm:$0xff] %v1032
    %1097 = vst [vmem:[%s3 + $0xc0] sm:$0xff] %v1033
    %1098 = vst [vmem:[%s3 + $0xc8] sm:$0xff] %v1034
    %1099 = vst [vmem:[%s3 + $0xd0] sm:$0xff] %v1035
    %1100 = vst [vmem:[%s3 + $0xd8] sm:$0xff] %v1036
    %1101 = vst [vmem:[%s3 + $0xe0] sm:$0xff] %v1037
    %1102 = vst [vmem:[%s3 + $0xe8] sm:$0xff] %v1038
    %1103 = vst [vmem:[%s3 + $0xf0] sm:$0xff] %v1039
    %1104 = vst [vmem:[%s3 + $0xf8] sm:$0xff] %v1040
    %1105 = vst [vmem:[%s3 + $0x100] sm:$0xff] %v1041
    %1106 = vst [vmem:[%s3 + $0x108] sm:$0xff] %v1042
    %1107 = vst [vmem:[%s3 + $0x110] sm:$0xff] %v1043
    %1108 = vst [vmem:[%s3 + $0x118] sm:$0xff] %v1044
    %1109 = vst [vmem:[%s3 + $0x120] sm:$0xff] %v1045
    %1110 = vst [vmem:[%s3 + $0x128] sm:$0xff] %v1046
    %1111 = vst [vmem:[%s3 + $0x130] sm:$0xff] %v1047
    %1112 = vst [vmem:[%s3 + $0x138] sm:$0xff] %v1048
    %1113 = vst [vmem:[%s3 + $0x140] sm:$0xff] %v1049
    %1114 = vst [vmem:[%s3 + $0x148] sm:$0xff] %v1050
    %1115 = vst [vmem:[%s3 + $0x150] sm:$0xff] %v1051
    %1116 = vst [vmem:[%s3 + $0x158] sm:$0xff] %v1052
    %1117 = vst [vmem:[%s3 + $0x160] sm:$0xff] %v1053
    %1118 = vst [vmem:[%s3 + $0x168] sm:$0xff] %v1054
    %1119 = vst [vmem:[%s3 + $0x170] sm:$0xff] %v1055
    %1120 = vst [vmem:[%s3 + $0x178] sm:$0xff] %v1056
    %1121 = vst [vmem:[%s3 + $0x180] sm:$0xff] %v1057
    %1122 = vst [vmem:[%s3 + $0x188] sm:$0xff] %v1058
    %1123 = vst [vmem:[%s3 + $0x190] sm:$0xff] %v1059
    %1124 = vst [vmem:[%s3 + $0x198] sm:$0xff] %v1060
    %1125 = vst [vmem:[%s3 + $0x1a0] sm:$0xff] %v1061
    %1126 = vst [vmem:[%s3 + $0x1a8] sm:$0xff] %v1062
    %1127 = vst [vmem:[%s3 + $0x1b0] sm:$0xff] %v1063
    %1128 = vst [vmem:[%s3 + $0x1b8] sm:$0xff] %v1064
    %1129 = vst [vmem:[%s3 + $0x1c0] sm:$0xff] %v1065
    %1130 = vst [vmem:[%s3 + $0x1c8] sm:$0xff] %v1066
    %1131 = vst [vmem:[%s3 + $0x1d0] sm:$0xff] %v1067
    %1132 = vst [vmem:[%s3 + $0x1d8] sm:$0xff] %v1068
    %1133 = vst [vmem:[%s3 + $0x1e0] sm:$0xff] %v1069
    %1134 = vst [vmem:[%s3 + $0x1e8] sm:$0xff] %v1070
    %1135 = vst [vmem:[%s3 + $0x1f0] sm:$0xff] %v1071
    %1136 = vst [vmem:[%s3 + $0x1f8] sm:$0xff] %v1072
  $region21: #{_lambda_.8} parent=0 // pred_fallthru
    _
  // Predicated region
  $region22: #{_lambda_.8} parent=0 // pred_check
    _
  $region23: #{_lambda_.8} parent=0 // pred_check_branch
    %1138 = sbr.rel (0) target = $region25
  $region24: #{_lambda_.8} parent=0 // pred_region
    _
  $region25: #{_lambda_.8} parent=0 // pred_fallthru
    _
  // Predicated region
  $region26: #{_lambda_.8} parent=0 // pred_check
    _
  $region27: #{_lambda_.8} parent=0 // pred_check_branch
    %1140 = sbr.rel (0) target = $region29
  $region28: #{_lambda_.8} parent=0 // pred_region
    _
  $region29: #{_lambda_.8} parent=0 // pred_fallthru
    _

// kernel: _lambda_.9
$region0: #{_lambda_.9}
  #allocation0 [shape = 'u32[]', space=smem, size = 0x4, offset = 0x4, fixed_abs, tag = 'smem constant byte address 0x4 - core index']
  #allocation1 [shape = 'u32[72,128]{1,0:T(1,128)}', space=vmem, size = 0x9000, scoped, tag = 'internal scratch']
  #allocation2 [shape = 'f32[128,128]{1,0:T(8,128)}', space=vmem, size = 0x10000, scoped, tag = 'scratch operand']
  %s0 = inlined_call_operand.vmem [shape: f32[128,128], index: 0, kind: input, shape index: {}]
  %s1 = inlined_call_operand.vmem [shape: f32[128,128], index: 1, kind: input, shape index: {}]
  %s2 = inlined_call_operand.vmem [shape: f32[1,128], index: 2, kind: input, shape index: {}]
  %s3 = inlined_call_operand.vmem [shape: f32[128,128], index: 3, kind: output, shape index: {0}]
  %s4 = inlined_call_operand.vmem [shape: f32[1,2,128], index: 4, kind: output, shape index: {1}]
  %5 = xla_tuple %s3, %s4
  %s6 = sld [smem:[#allocation0]]
  $region38: #{_lambda_.9} parent=0
    _
  %s8 = ssub.s32 1, %s6
  %s9 = scalar_select 0, %s8, %s6
  // Predicated region
  $region2: #{_lambda_.9} parent=0 // pred_check
    _
  $region3: #{_lambda_.9} parent=0 // pred_check_branch
    %11 = sbr.rel (0) target = $region5
  $region4: #{_lambda_.9} parent=0 // pred_region
    _
  $region5: #{_lambda_.9} parent=0 // pred_fallthru
    _
  // Predicated region
  $region6: #{_lambda_.9} parent=0 // pred_check
    _
  $region7: #{_lambda_.9} parent=0 // pred_check_branch
    %13 = sbr.rel (0) target = $region9
  $region8: #{_lambda_.9} parent=0 // pred_region
    _
  $region9: #{_lambda_.9} parent=0 // pred_fallthru
    _
  // Predicated region
  $region10: #{_lambda_.9} parent=0 // pred_check
    _
  $region11: #{_lambda_.9} parent=0 // pred_check_branch
    %15 = sbr.rel (0) target = $region13
  $region12: #{_lambda_.9} parent=0 // pred_region
    _
  $region13: #{_lambda_.9} parent=0 // pred_fallthru
    _
  %p16 = scmp.eq.s32.totalorder 0, 0
  // Predicated region
  $region14: #{_lambda_.9} parent=0 // pred_check
    %p17 = pneg %p16
  $region15: #{_lambda_.9} parent=0 // pred_check_branch
    %19 = sbr.rel (%p17) target = $region17
  $region16: #{_lambda_.9} parent=0 // pred_region
    %20 = vst [vmem:[#allocation2] sm:$0xff] 0.0
    %21 = vst [vmem:[#allocation2 + $0x8] sm:$0xff] 0.0
    %22 = vst [vmem:[#allocation2 + $0x10] sm:$0xff] 0.0
    %23 = vst [vmem:[#allocation2 + $0x18] sm:$0xff] 0.0
    %24 = vst [vmem:[#allocation2 + $0x20] sm:$0xff] 0.0
    %25 = vst [vmem:[#allocation2 + $0x28] sm:$0xff] 0.0
    %26 = vst [vmem:[#allocation2 + $0x30] sm:$0xff] 0.0
    %27 = vst [vmem:[#allocation2 + $0x38] sm:$0xff] 0.0
    %28 = vst [vmem:[#allocation2 + $0x40] sm:$0xff] 0.0
    %29 = vst [vmem:[#allocation2 + $0x48] sm:$0xff] 0.0
    %30 = vst [vmem:[#allocation2 + $0x50] sm:$0xff] 0.0
    %31 = vst [vmem:[#allocation2 + $0x58] sm:$0xff] 0.0
    %32 = vst [vmem:[#allocation2 + $0x60] sm:$0xff] 0.0
    %33 = vst [vmem:[#allocation2 + $0x68] sm:$0xff] 0.0
    %34 = vst [vmem:[#allocation2 + $0x70] sm:$0xff] 0.0
    %35 = vst [vmem:[#allocation2 + $0x78] sm:$0xff] 0.0
  $region17: #{_lambda_.9} parent=0 // pred_fallthru
    _
  %v36 = vld [vmem:[#allocation2] sm:$0xff]
  %v37 = vld [vmem:[#allocation2 + $0x8] sm:$0xff]
  %v38 = vld [vmem:[#allocation2 + $0x10] sm:$0xff]
  %v39 = vld [vmem:[#allocation2 + $0x18] sm:$0xff]
  %v40 = vld [vmem:[#allocation2 + $0x20] sm:$0xff]
  %v41 = vld [vmem:[#allocation2 + $0x28] sm:$0xff]
  %v42 = vld [vmem:[#allocation2 + $0x30] sm:$0xff]
  %v43 = vld [vmem:[#allocation2 + $0x38] sm:$0xff]
  %v44 = vld [vmem:[#allocation2 + $0x40] sm:$0xff]
  %v45 = vld [vmem:[#allocation2 + $0x48] sm:$0xff]
  %v46 = vld [vmem:[#allocation2 + $0x50] sm:$0xff]
  %v47 = vld [vmem:[#allocation2 + $0x58] sm:$0xff]
  %v48 = vld [vmem:[#allocation2 + $0x60] sm:$0xff]
  %v49 = vld [vmem:[#allocation2 + $0x68] sm:$0xff]
  %v50 = vld [vmem:[#allocation2 + $0x70] sm:$0xff]
  %v51 = vld [vmem:[#allocation2 + $0x78] sm:$0xff]
  %v52 = vld [vmem:[%s0] sm:$0xff]
  %v53 = vld [vmem:[%s0 + $0x8] sm:$0xff]
  %v54 = vld [vmem:[%s0 + $0x10] sm:$0xff]
  %v55 = vld [vmem:[%s0 + $0x18] sm:$0xff]
  %v56 = vld [vmem:[%s0 + $0x20] sm:$0xff]
  %v57 = vld [vmem:[%s0 + $0x28] sm:$0xff]
  %v58 = vld [vmem:[%s0 + $0x30] sm:$0xff]
  %v59 = vld [vmem:[%s0 + $0x38] sm:$0xff]
  %v60 = vld [vmem:[%s0 + $0x40] sm:$0xff]
  %v61 = vld [vmem:[%s0 + $0x48] sm:$0xff]
  %v62 = vld [vmem:[%s0 + $0x50] sm:$0xff]
  %v63 = vld [vmem:[%s0 + $0x58] sm:$0xff]
  %v64 = vld [vmem:[%s0 + $0x60] sm:$0xff]
  %v65 = vld [vmem:[%s0 + $0x68] sm:$0xff]
  %v66 = vld [vmem:[%s0 + $0x70] sm:$0xff]
  %v67 = vld [vmem:[%s0 + $0x78] sm:$0xff]
  %v68 = vld [vmem:[%s1] sm:$0xff]
  %v69 = vld [vmem:[%s1 + $0x8] sm:$0xff]
  %v70 = vld [vmem:[%s1 + $0x10] sm:$0xff]
  %v71 = vld [vmem:[%s1 + $0x18] sm:$0xff]
  %v72 = vld [vmem:[%s1 + $0x20] sm:$0xff]
  %v73 = vld [vmem:[%s1 + $0x28] sm:$0xff]
  %v74 = vld [vmem:[%s1 + $0x30] sm:$0xff]
  %v75 = vld [vmem:[%s1 + $0x38] sm:$0xff]
  %v76 = vld [vmem:[%s1 + $0x40] sm:$0xff]
  %v77 = vld [vmem:[%s1 + $0x48] sm:$0xff]
  %v78 = vld [vmem:[%s1 + $0x50] sm:$0xff]
  %v79 = vld [vmem:[%s1 + $0x58] sm:$0xff]
  %v80 = vld [vmem:[%s1 + $0x60] sm:$0xff]
  %v81 = vld [vmem:[%s1 + $0x68] sm:$0xff]
  %v82 = vld [vmem:[%s1 + $0x70] sm:$0xff]
  %v83 = vld [vmem:[%s1 + $0x78] sm:$0xff]
  %84 = vmatpush.msra.mxu0 %v83
  %85 = vmatpush.msra.mxu0 %v82
  %86 = vmatpush.msra.mxu0 %v81
  %87 = vmatpush.msra.mxu0 %v80
  %88 = vmatpush.msra.mxu0 %v79
  %89 = vmatpush.msra.mxu0 %v78
  %90 = vmatpush.msra.mxu0 %v77
  %91 = vmatpush.msra.mxu0 %v76
  %92 = vmatpush.msra.mxu0 %v75
  %93 = vmatpush.msra.mxu0 %v74
  %94 = vmatpush.msra.mxu0 %v73
  %95 = vmatpush.msra.mxu0 %v72
  %96 = vmatpush.msra.mxu0 %v71
  %97 = vmatpush.msra.mxu0 %v70
  %98 = vmatpush.msra.mxu0 %v69
  %99 = vmatpush.msra.mxu0 %v68
  %100 = vmatmul.f32.gmra.mxu0 %v52
  %v101 = vpop.f32.mrf.mxu0
  %v102 = vadd.f32 0.0, %v101
  %103 = vmatmul.f32.gmra.mxu0 %v53
  %v104 = vpop.f32.mrf.mxu0
  %v105 = vadd.f32 0.0, %v104
  %106 = vmatmul.f32.gmra.mxu0 %v54
  %v107 = vpop.f32.mrf.mxu0
  %v108 = vadd.f32 0.0, %v107
  %109 = vmatmul.f32.gmra.mxu0 %v55
  %v110 = vpop.f32.mrf.mxu0
  %v111 = vadd.f32 0.0, %v110
  %112 = vmatmul.f32.gmra.mxu0 %v56
  %v113 = vpop.f32.mrf.mxu0
  %v114 = vadd.f32 0.0, %v113
  %115 = vmatmul.f32.gmra.mxu0 %v57
  %v116 = vpop.f32.mrf.mxu0
  %v117 = vadd.f32 0.0, %v116
  %118 = vmatmul.f32.gmra.mxu0 %v58
  %v119 = vpop.f32.mrf.mxu0
  %v120 = vadd.f32 0.0, %v119
  %121 = vmatmul.f32.gmra.mxu0 %v59
  %v122 = vpop.f32.mrf.mxu0
  %v123 = vadd.f32 0.0, %v122
  %124 = vmatmul.f32.gmra.mxu0 %v60
  %v125 = vpop.f32.mrf.mxu0
  %v126 = vadd.f32 0.0, %v125
  %127 = vmatmul.f32.gmra.mxu0 %v61
  %v128 = vpop.f32.mrf.mxu0
  %v129 = vadd.f32 0.0, %v128
  %130 = vmatmul.f32.gmra.mxu0 %v62
  %v131 = vpop.f32.mrf.mxu0
  %v132 = vadd.f32 0.0, %v131
  %133 = vmatmul.f32.gmra.mxu0 %v63
  %v134 = vpop.f32.mrf.mxu0
  %v135 = vadd.f32 0.0, %v134
  %136 = vmatmul.f32.gmra.mxu0 %v64
  %v137 = vpop.f32.mrf.mxu0
  %v138 = vadd.f32 0.0, %v137
  %139 = vmatmul.f32.gmra.mxu0 %v65
  %v140 = vpop.f32.mrf.mxu0
  %v141 = vadd.f32 0.0, %v140
  %142 = vmatmul.f32.gmra.mxu0 %v66
  %v143 = vpop.f32.mrf.mxu0
  %v144 = vadd.f32 0.0, %v143
  %145 = vmatmul.f32.gmra.mxu0 %v67
  %v146 = vpop.f32.mrf.mxu0
  %v147 = vadd.f32 0.0, %v146
  %148 = vdwg.mxu0
  %v149 = vadd.f32 %v36, %v102
  %v150 = vadd.f32 %v37, %v105
  %v151 = vadd.f32 %v38, %v108
  %v152 = vadd.f32 %v39, %v111
  %v153 = vadd.f32 %v40, %v114
  %v154 = vadd.f32 %v41, %v117
  %v155 = vadd.f32 %v42, %v120
  %v156 = vadd.f32 %v43, %v123
  %v157 = vadd.f32 %v44, %v126
  %v158 = vadd.f32 %v45, %v129
  %v159 = vadd.f32 %v46, %v132
  %v160 = vadd.f32 %v47, %v135
  %v161 = vadd.f32 %v48, %v138
  %v162 = vadd.f32 %v49, %v141
  %v163 = vadd.f32 %v50, %v144
  %v164 = vadd.f32 %v51, %v147
  %165 = vst [vmem:[#allocation2] sm:$0xff] %v149
  %166 = vst [vmem:[#allocation2 + $0x8] sm:$0xff] %v150
  %167 = vst [vmem:[#allocation2 + $0x10] sm:$0xff] %v151
  %168 = vst [vmem:[#allocation2 + $0x18] sm:$0xff] %v152
  %169 = vst [vmem:[#allocation2 + $0x20] sm:$0xff] %v153
  %170 = vst [vmem:[#allocation2 + $0x28] sm:$0xff] %v154
  %171 = vst [vmem:[#allocation2 + $0x30] sm:$0xff] %v155
  %172 = vst [vmem:[#allocation2 + $0x38] sm:$0xff] %v156
  %173 = vst [vmem:[#allocation2 + $0x40] sm:$0xff] %v157
  %174 = vst [vmem:[#allocation2 + $0x48] sm:$0xff] %v158
  %175 = vst [vmem:[#allocation2 + $0x50] sm:$0xff] %v159
  %176 = vst [vmem:[#allocation2 + $0x58] sm:$0xff] %v160
  %177 = vst [vmem:[#allocation2 + $0x60] sm:$0xff] %v161
  %178 = vst [vmem:[#allocation2 + $0x68] sm:$0xff] %v162
  %179 = vst [vmem:[#allocation2 + $0x70] sm:$0xff] %v163
  %180 = vst [vmem:[#allocation2 + $0x78] sm:$0xff] %v164
  // Predicated region
  $region18: #{_lambda_.9} parent=0 // pred_check
    %p181 = pneg %p16
  $region19: #{_lambda_.9} parent=0 // pred_check_branch
    %183 = sbr.rel (%p181) target = $region21
  $region20: #{_lambda_.9} parent=0 // pred_region
    %v184 = vld [vmem:[#allocation2] sm:$0xff]
    %v185 = vld [vmem:[#allocation2 + $0x8] sm:$0xff]
    %v186 = vld [vmem:[#allocation2 + $0x10] sm:$0xff]
    %v187 = vld [vmem:[#allocation2 + $0x18] sm:$0xff]
    %v188 = vld [vmem:[#allocation2 + $0x20] sm:$0xff]
    %v189 = vld [vmem:[#allocation2 + $0x28] sm:$0xff]
    %v190 = vld [vmem:[#allocation2 + $0x30] sm:$0xff]
    %v191 = vld [vmem:[#allocation2 + $0x38] sm:$0xff]
    %v192 = vld [vmem:[#allocation2 + $0x40] sm:$0xff]
    %v193 = vld [vmem:[#allocation2 + $0x48] sm:$0xff]
    %v194 = vld [vmem:[#allocation2 + $0x50] sm:$0xff]
    %v195 = vld [vmem:[#allocation2 + $0x58] sm:$0xff]
    %v196 = vld [vmem:[#allocation2 + $0x60] sm:$0xff]
    %v197 = vld [vmem:[#allocation2 + $0x68] sm:$0xff]
    %v198 = vld [vmem:[#allocation2 + $0x70] sm:$0xff]
    %v199 = vld [vmem:[#allocation2 + $0x78] sm:$0xff]
    %v200 = vld [vmem:[%s2] sm:$0x1]
    %v202 = vperm.slane %v200, 0
    %v204 = vadd.f32 %v184, %v202
    %v205 = vadd.f32 %v185, %v202
    %v206 = vadd.f32 %v186, %v202
    %v207 = vadd.f32 %v187, %v202
    %v208 = vadd.f32 %v188, %v202
    %v209 = vadd.f32 %v189, %v202
    %v210 = vadd.f32 %v190, %v202
    %v211 = vadd.f32 %v191, %v202
    %v212 = vadd.f32 %v192, %v202
    %v213 = vadd.f32 %v193, %v202
    %v214 = vadd.f32 %v194, %v202
    %v215 = vadd.f32 %v195, %v202
    %v216 = vadd.f32 %v196, %v202
    %v217 = vadd.f32 %v197, %v202
    %v218 = vadd.f32 %v198, %v202
    %v219 = vadd.f32 %v199, %v202
    %v220 = vadd.f32 %v204, %v205
    %v221 = vadd.f32 %v220, %v206
    %v222 = vadd.f32 %v221, %v207
    %v223 = vadd.f32 %v222, %v208
    %v224 = vadd.f32 %v223, %v209
    %v225 = vadd.f32 %v224, %v210
    %v226 = vadd.f32 %v225, %v211
    %v227 = vadd.f32 %v226, %v212
    %v228 = vadd.f32 %v227, %v213
    %v229 = vadd.f32 %v228, %v214
    %v230 = vadd.f32 %v229, %v215
    %v231 = vadd.f32 %v230, %v216
    %v232 = vadd.f32 %v231, %v217
    %v233 = vadd.f32 %v232, %v218
    %v234 = vadd.f32 %v233, %v219
    %v235 = vrot.slane %v234, 4
    %v236 = vadd.f32 %v234, %v235
    %v237 = vrot.slane %v236, 2
    %v238 = vadd.f32 %v236, %v237
    %v239 = vrot.slane %v238, 1
    %v240 = vadd.f32 %v238, %v239
    %v241 = vmul.f32 %v204, %v204
    %v242 = vmul.f32 %v205, %v205
    %v243 = vmul.f32 %v206, %v206
    %v244 = vmul.f32 %v207, %v207
    %v245 = vmul.f32 %v208, %v208
    %v246 = vmul.f32 %v209, %v209
    %v247 = vmul.f32 %v210, %v210
    %v248 = vmul.f32 %v211, %v211
    %v249 = vmul.f32 %v212, %v212
    %v250 = vmul.f32 %v213, %v213
    %v251 = vmul.f32 %v214, %v214
    %v252 = vmul.f32 %v215, %v215
    %v253 = vmul.f32 %v216, %v216
    %v254 = vmul.f32 %v217, %v217
    %v255 = vmul.f32 %v218, %v218
    %v256 = vmul.f32 %v219, %v219
    %v257 = vadd.f32 %v241, %v242
    %v258 = vadd.f32 %v257, %v243
    %v259 = vadd.f32 %v258, %v244
    %v260 = vadd.f32 %v259, %v245
    %v261 = vadd.f32 %v260, %v246
    %v262 = vadd.f32 %v261, %v247
    %v263 = vadd.f32 %v262, %v248
    %v264 = vadd.f32 %v263, %v249
    %v265 = vadd.f32 %v264, %v250
    %v266 = vadd.f32 %v265, %v251
    %v267 = vadd.f32 %v266, %v252
    %v268 = vadd.f32 %v267, %v253
    %v269 = vadd.f32 %v268, %v254
    %v270 = vadd.f32 %v269, %v255
    %v271 = vadd.f32 %v270, %v256
    %v272 = vrot.slane %v271, 4
    %v273 = vadd.f32 %v271, %v272
    %v274 = vrot.slane %v273, 2
    %v275 = vadd.f32 %v273, %v274
    %v276 = vrot.slane %v275, 1
    %v277 = vadd.f32 %v275, %v276
    %vm278 = vcmask 1040384
    %v279 = vsel %vm278, %v240, %v277
    %280 = vst [vmem:[%s4] sm:$0x3] %v279
    %281 = vst [vmem:[%s3] sm:$0xff] %v204
    %282 = vst [vmem:[%s3 + $0x8] sm:$0xff] %v205
    %283 = vst [vmem:[%s3 + $0x10] sm:$0xff] %v206
    %284 = vst [vmem:[%s3 + $0x18] sm:$0xff] %v207
    %285 = vst [vmem:[%s3 + $0x20] sm:$0xff] %v208
    %286 = vst [vmem:[%s3 + $0x28] sm:$0xff] %v209
    %287 = vst [vmem:[%s3 + $0x30] sm:$0xff] %v210
    %288 = vst [vmem:[%s3 + $0x38] sm:$0xff] %v211
    %289 = vst [vmem:[%s3 + $0x40] sm:$0xff] %v212
    %290 = vst [vmem:[%s3 + $0x48] sm:$0xff] %v213
    %291 = vst [vmem:[%s3 + $0x50] sm:$0xff] %v214
    %292 = vst [vmem:[%s3 + $0x58] sm:$0xff] %v215
    %293 = vst [vmem:[%s3 + $0x60] sm:$0xff] %v216
    %294 = vst [vmem:[%s3 + $0x68] sm:$0xff] %v217
    %295 = vst [vmem:[%s3 + $0x70] sm:$0xff] %v218
    %296 = vst [vmem:[%s3 + $0x78] sm:$0xff] %v219
  $region21: #{_lambda_.9} parent=0 // pred_fallthru
    _
  // Predicated region
  $region22: #{_lambda_.9} parent=0 // pred_check
    _
  $region23: #{_lambda_.9} parent=0 // pred_check_branch
    %298 = sbr.rel (0) target = $region25
  $region24: #{_lambda_.9} parent=0 // pred_region
    _
  $region25: #{_lambda_.9} parent=0 // pred_fallthru
    _
  // Predicated region
  $region26: #{_lambda_.9} parent=0 // pred_check
    _
  $region27: #{_lambda_.9} parent=0 // pred_check_branch
    %300 = sbr.rel (0) target = $region29
  $region28: #{_lambda_.9} parent=0 // pred_region
    _
  $region29: #{_lambda_.9} parent=0 // pred_fallthru
    _
  // Predicated region
  $region30: #{_lambda_.9} parent=0 // pred_check
    _
  $region31: #{_lambda_.9} parent=0 // pred_check_branch
    %302 = sbr.rel (0) target = $region33
  $region32: #{_lambda_.9} parent=0 // pred_region
    _
  $region33: #{_lambda_.9} parent=0 // pred_fallthru
    _
  // Predicated region
  $region34: #{_lambda_.9} parent=0 // pred_check
    _
  $region35: #{_lambda_.9} parent=0 // pred_check_branch
    %304 = sbr.rel (0) target = $region37
  $region36: #{_lambda_.9} parent=0 // pred_region
    _
  $region37: #{_lambda_.9} parent=0 // pred_fallthru
    _

// kernel: _lambda_.10
$region0: #{_lambda_.10}
  #allocation0 [shape = 'u32[]', space=smem, size = 0x4, offset = 0x4, fixed_abs, tag = 'smem constant byte address 0x4 - core index']
  #allocation1 [shape = 'u32[72,128]{1,0:T(1,128)}', space=vmem, size = 0x9000, scoped, tag = 'internal scratch']
  %s0 = inlined_call_operand.vmem [shape: f32[128,128], index: 0, kind: input, shape index: {}]
  %s1 = inlined_call_operand.vmem [shape: f32[2,128], index: 1, kind: input, shape index: {}]
  %s2 = inlined_call_operand.vmem [shape: f32[1,128], index: 2, kind: input, shape index: {}]
  %s3 = inlined_call_operand.vmem [shape: f32[1,128], index: 3, kind: input, shape index: {}]
  %s4 = inlined_call_operand.vmem [shape: f32[128,128], index: 4, kind: output, shape index: {}]
  %s5 = sld [smem:[#allocation0]]
  $region26: #{_lambda_.10} parent=0
    _
  %s7 = ssub.s32 1, %s5
  %s8 = scalar_select 0, %s7, %s5
  // Predicated region
  $region2: #{_lambda_.10} parent=0 // pred_check
    _
  $region3: #{_lambda_.10} parent=0 // pred_check_branch
    %10 = sbr.rel (0) target = $region5
  $region4: #{_lambda_.10} parent=0 // pred_region
    _
  $region5: #{_lambda_.10} parent=0 // pred_fallthru
    _
  // Predicated region
  $region6: #{_lambda_.10} parent=0 // pred_check
    _
  $region7: #{_lambda_.10} parent=0 // pred_check_branch
    %12 = sbr.rel (0) target = $region9
  $region8: #{_lambda_.10} parent=0 // pred_region
    _
  $region9: #{_lambda_.10} parent=0 // pred_fallthru
    _
  // Predicated region
  $region10: #{_lambda_.10} parent=0 // pred_check
    _
  $region11: #{_lambda_.10} parent=0 // pred_check_branch
    %14 = sbr.rel (0) target = $region13
  $region12: #{_lambda_.10} parent=0 // pred_region
    _
  $region13: #{_lambda_.10} parent=0 // pred_fallthru
    _
  // Predicated region
  $region14: #{_lambda_.10} parent=0 // pred_check
    _
  $region15: #{_lambda_.10} parent=0 // pred_check_branch
    %16 = sbr.rel (0) target = $region17
  $region16: #{_lambda_.10} parent=0 // pred_region
    _
  $region17: #{_lambda_.10} parent=0 // pred_fallthru
    _
  %v17 = vld [vmem:[%s1] sm:$0x1]
  %v18 = vmul.f32 %v17, 0.0078125
  %v19 = vld [vmem:[%s1 + $0x1] sm:$0x1]
  %v20 = vmul.f32 %v19, 0.0078125
  %v21 = vmul.f32 %v18, %v18
  %v22 = vsub.f32 %v20, %v21
  %v23 = vmax.f32 %v22, 0.0
  %v24 = vadd.f32 %v23, 1e-05
  %v25 = vrsqrt.pop %v24
  %v26 = vmul.f32 %v25, %v24
  %v27 = vmul.f32 %v26, %v25
  %v28 = vmul.f32 0.5, %v27
  %v29 = vsub.f32 1.5, %v28
  %v30 = vmul.f32 %v25, %v29
  %vm31 = vweird.f32 %v24
  %vm32 = vweird.f32 %v25
  %vm33 = vmor %vm31, %vm32
  %v34 = vsel %vm33, %v25, %v30
  %v35 = vld [vmem:[%s2] sm:$0x1]
  %v36 = vmul.f32 %v34, %v35
  %v37 = vld [vmem:[%s0] sm:$0xff]
  %v38 = vld [vmem:[%s0 + $0x8] sm:$0xff]
  %v39 = vld [vmem:[%s0 + $0x10] sm:$0xff]
  %v40 = vld [vmem:[%s0 + $0x18] sm:$0xff]
  %v41 = vld [vmem:[%s0 + $0x20] sm:$0xff]
  %v42 = vld [vmem:[%s0 + $0x28] sm:$0xff]
  %v43 = vld [vmem:[%s0 + $0x30] sm:$0xff]
  %v44 = vld [vmem:[%s0 + $0x38] sm:$0xff]
  %v45 = vld [vmem:[%s0 + $0x40] sm:$0xff]
  %v46 = vld [vmem:[%s0 + $0x48] sm:$0xff]
  %v47 = vld [vmem:[%s0 + $0x50] sm:$0xff]
  %v48 = vld [vmem:[%s0 + $0x58] sm:$0xff]
  %v49 = vld [vmem:[%s0 + $0x60] sm:$0xff]
  %v50 = vld [vmem:[%s0 + $0x68] sm:$0xff]
  %v51 = vld [vmem:[%s0 + $0x70] sm:$0xff]
  %v52 = vld [vmem:[%s0 + $0x78] sm:$0xff]
  %v53 = vperm.slane %v18, 0
  %v54 = vsub.f32 %v37, %v53
  %v55 = vsub.f32 %v38, %v53
  %v56 = vsub.f32 %v39, %v53
  %v57 = vsub.f32 %v40, %v53
  %v58 = vsub.f32 %v41, %v53
  %v59 = vsub.f32 %v42, %v53
  %v60 = vsub.f32 %v43, %v53
  %v61 = vsub.f32 %v44, %v53
  %v62 = vsub.f32 %v45, %v53
  %v63 = vsub.f32 %v46, %v53
  %v64 = vsub.f32 %v47, %v53
  %v65 = vsub.f32 %v48, %v53
  %v66 = vsub.f32 %v49, %v53
  %v67 = vsub.f32 %v50, %v53
  %v68 = vsub.f32 %v51, %v53
  %v69 = vsub.f32 %v52, %v53
  %v70 = vperm.slane %v36, 0
  %v71 = vmul.f32 %v54, %v70
  %v72 = vmul.f32 %v55, %v70
  %v73 = vmul.f32 %v56, %v70
  %v74 = vmul.f32 %v57, %v70
  %v75 = vmul.f32 %v58, %v70
  %v76 = vmul.f32 %v59, %v70
  %v77 = vmul.f32 %v60, %v70
  %v78 = vmul.f32 %v61, %v70
  %v79 = vmul.f32 %v62, %v70
  %v80 = vmul.f32 %v63, %v70
  %v81 = vmul.f32 %v64, %v70
  %v82 = vmul.f32 %v65, %v70
  %v83 = vmul.f32 %v66, %v70
  %v84 = vmul.f32 %v67, %v70
  %v85 = vmul.f32 %v68, %v70
  %v86 = vmul.f32 %v69, %v70
  %v87 = vld [vmem:[%s3] sm:$0x1]
  %v89 = vperm.slane %v87, 0
  %v91 = vadd.f32 %v71, %v89
  %v92 = vadd.f32 %v72, %v89
  %v93 = vadd.f32 %v73, %v89
  %v94 = vadd.f32 %v74, %v89
  %v95 = vadd.f32 %v75, %v89
  %v96 = vadd.f32 %v76, %v89
  %v97 = vadd.f32 %v77, %v89
  %v98 = vadd.f32 %v78, %v89
  %v99 = vadd.f32 %v79, %v89
  %v100 = vadd.f32 %v80, %v89
  %v101 = vadd.f32 %v81, %v89
  %v102 = vadd.f32 %v82, %v89
  %v103 = vadd.f32 %v83, %v89
  %v104 = vadd.f32 %v84, %v89
  %v105 = vadd.f32 %v85, %v89
  %v106 = vadd.f32 %v86, %v89
  %vm107 = vcmp.ge.f32.partialorder %v91, 0.0
  %vm108 = vcmp.ge.f32.partialorder %v92, 0.0
  %vm109 = vcmp.ge.f32.partialorder %v93, 0.0
  %vm110 = vcmp.ge.f32.partialorder %v94, 0.0
  %vm111 = vcmp.ge.f32.partialorder %v95, 0.0
  %vm112 = vcmp.ge.f32.partialorder %v96, 0.0
  %vm113 = vcmp.ge.f32.partialorder %v97, 0.0
  %vm114 = vcmp.ge.f32.partialorder %v98, 0.0
  %vm115 = vcmp.ge.f32.partialorder %v99, 0.0
  %vm116 = vcmp.ge.f32.partialorder %v100, 0.0
  %vm117 = vcmp.ge.f32.partialorder %v101, 0.0
  %vm118 = vcmp.ge.f32.partialorder %v102, 0.0
  %vm119 = vcmp.ge.f32.partialorder %v103, 0.0
  %vm120 = vcmp.ge.f32.partialorder %v104, 0.0
  %vm121 = vcmp.ge.f32.partialorder %v105, 0.0
  %vm122 = vcmp.ge.f32.partialorder %v106, 0.0
  %v123 = vmul.f32 %v91, 0.2
  %v124 = vmul.f32 %v92, 0.2
  %v125 = vmul.f32 %v93, 0.2
  %v126 = vmul.f32 %v94, 0.2
  %v127 = vmul.f32 %v95, 0.2
  %v128 = vmul.f32 %v96, 0.2
  %v129 = vmul.f32 %v97, 0.2
  %v130 = vmul.f32 %v98, 0.2
  %v131 = vmul.f32 %v99, 0.2
  %v132 = vmul.f32 %v100, 0.2
  %v133 = vmul.f32 %v101, 0.2
  %v134 = vmul.f32 %v102, 0.2
  %v135 = vmul.f32 %v103, 0.2
  %v136 = vmul.f32 %v104, 0.2
  %v137 = vmul.f32 %v105, 0.2
  %v138 = vmul.f32 %v106, 0.2
  %v139 = vsel %vm107, %v91, %v123
  %v140 = vsel %vm108, %v92, %v124
  %v141 = vsel %vm109, %v93, %v125
  %v142 = vsel %vm110, %v94, %v126
  %v143 = vsel %vm111, %v95, %v127
  %v144 = vsel %vm112, %v96, %v128
  %v145 = vsel %vm113, %v97, %v129
  %v146 = vsel %vm114, %v98, %v130
  %v147 = vsel %vm115, %v99, %v131
  %v148 = vsel %vm116, %v100, %v132
  %v149 = vsel %vm117, %v101, %v133
  %v150 = vsel %vm118, %v102, %v134
  %v151 = vsel %vm119, %v103, %v135
  %v152 = vsel %vm120, %v104, %v136
  %v153 = vsel %vm121, %v105, %v137
  %v154 = vsel %vm122, %v106, %v138
  %155 = vst [vmem:[%s4] sm:$0xff] %v139
  %156 = vst [vmem:[%s4 + $0x8] sm:$0xff] %v140
  %157 = vst [vmem:[%s4 + $0x10] sm:$0xff] %v141
  %158 = vst [vmem:[%s4 + $0x18] sm:$0xff] %v142
  %159 = vst [vmem:[%s4 + $0x20] sm:$0xff] %v143
  %160 = vst [vmem:[%s4 + $0x28] sm:$0xff] %v144
  %161 = vst [vmem:[%s4 + $0x30] sm:$0xff] %v145
  %162 = vst [vmem:[%s4 + $0x38] sm:$0xff] %v146
  %163 = vst [vmem:[%s4 + $0x40] sm:$0xff] %v147
  %164 = vst [vmem:[%s4 + $0x48] sm:$0xff] %v148
  %165 = vst [vmem:[%s4 + $0x50] sm:$0xff] %v149
  %166 = vst [vmem:[%s4 + $0x58] sm:$0xff] %v150
  %167 = vst [vmem:[%s4 + $0x60] sm:$0xff] %v151
  %168 = vst [vmem:[%s4 + $0x68] sm:$0xff] %v152
  %169 = vst [vmem:[%s4 + $0x70] sm:$0xff] %v153
  %170 = vst [vmem:[%s4 + $0x78] sm:$0xff] %v154
  // Predicated region
  $region18: #{_lambda_.10} parent=0 // pred_check
    _
  $region19: #{_lambda_.10} parent=0 // pred_check_branch
    %172 = sbr.rel (0) target = $region21
  $region20: #{_lambda_.10} parent=0 // pred_region
    _
  $region21: #{_lambda_.10} parent=0 // pred_fallthru
    _
  // Predicated region
  $region22: #{_lambda_.10} parent=0 // pred_check
    _
  $region23: #{_lambda_.10} parent=0 // pred_check_branch
    %174 = sbr.rel (0) target = $region25
  $region24: #{_lambda_.10} parent=0 // pred_region
    _
  $region25: #{_lambda_.10} parent=0 // pred_fallthru
    _

// kernel: _lambda_.11
$region0: #{_lambda_.11}
  #allocation0 [shape = 'u32[]', space=smem, size = 0x4, offset = 0x4, fixed_abs, tag = 'smem constant byte address 0x4 - core index']
  #allocation1 [shape = 'u32[72,128]{1,0:T(1,128)}', space=vmem, size = 0x9000, scoped, tag = 'internal scratch']
  #allocation2 [shape = 'f32[32,128]{1,0:T(8,128)}', space=vmem, size = 0x4000, scoped, tag = 'scratch operand']
  %s0 = inlined_call_operand.vmem [shape: f32[32,256], index: 0, kind: input, shape index: {}]
  %s1 = inlined_call_operand.vmem [shape: f32[256,128], index: 1, kind: input, shape index: {}]
  %s2 = inlined_call_operand.vmem [shape: f32[1,128], index: 2, kind: input, shape index: {}]
  %s3 = inlined_call_operand.vmem [shape: f32[32,128], index: 3, kind: output, shape index: {0}]
  %s4 = inlined_call_operand.vmem [shape: f32[1,2,128], index: 4, kind: output, shape index: {1}]
  %5 = xla_tuple %s3, %s4
  %s6 = sld [smem:[#allocation0]]
  $region38: #{_lambda_.11} parent=0
    _
  %s8 = ssub.s32 1, %s6
  %s9 = scalar_select 0, %s8, %s6
  // Predicated region
  $region2: #{_lambda_.11} parent=0 // pred_check
    _
  $region3: #{_lambda_.11} parent=0 // pred_check_branch
    %11 = sbr.rel (0) target = $region5
  $region4: #{_lambda_.11} parent=0 // pred_region
    _
  $region5: #{_lambda_.11} parent=0 // pred_fallthru
    _
  // Predicated region
  $region6: #{_lambda_.11} parent=0 // pred_check
    _
  $region7: #{_lambda_.11} parent=0 // pred_check_branch
    %13 = sbr.rel (0) target = $region9
  $region8: #{_lambda_.11} parent=0 // pred_region
    _
  $region9: #{_lambda_.11} parent=0 // pred_fallthru
    _
  // Predicated region
  $region10: #{_lambda_.11} parent=0 // pred_check
    _
  $region11: #{_lambda_.11} parent=0 // pred_check_branch
    %15 = sbr.rel (0) target = $region13
  $region12: #{_lambda_.11} parent=0 // pred_region
    _
  $region13: #{_lambda_.11} parent=0 // pred_fallthru
    _
  %p16 = scmp.eq.s32.totalorder 0, 0
  // Predicated region
  $region14: #{_lambda_.11} parent=0 // pred_check
    %p17 = pneg %p16
  $region15: #{_lambda_.11} parent=0 // pred_check_branch
    %19 = sbr.rel (%p17) target = $region17
  $region16: #{_lambda_.11} parent=0 // pred_region
    %20 = vst [vmem:[#allocation2] sm:$0xff] 0.0
    %21 = vst [vmem:[#allocation2 + $0x8] sm:$0xff] 0.0
    %22 = vst [vmem:[#allocation2 + $0x10] sm:$0xff] 0.0
    %23 = vst [vmem:[#allocation2 + $0x18] sm:$0xff] 0.0
  $region17: #{_lambda_.11} parent=0 // pred_fallthru
    _
  %v24 = vld [vmem:[#allocation2] sm:$0xff]
  %v25 = vld [vmem:[#allocation2 + $0x8] sm:$0xff]
  %v26 = vld [vmem:[#allocation2 + $0x10] sm:$0xff]
  %v27 = vld [vmem:[#allocation2 + $0x18] sm:$0xff]
  %v28 = vld [vmem:[%s0] sm:$0xff]
  %v29 = vld [vmem:[%s0 + $0x8] sm:$0xff]
  %v30 = vld [vmem:[%s0 + $0x10] sm:$0xff]
  %v31 = vld [vmem:[%s0 + $0x18] sm:$0xff]
  %v32 = vld [vmem:[%s0 + $0x20] sm:$0xff]
  %v33 = vld [vmem:[%s0 + $0x28] sm:$0xff]
  %v34 = vld [vmem:[%s0 + $0x30] sm:$0xff]
  %v35 = vld [vmem:[%s0 + $0x38] sm:$0xff]
  %v36 = vld [vmem:[%s1] sm:$0xff]
  %v37 = vld [vmem:[%s1 + $0x8] sm:$0xff]
  %v38 = vld [vmem:[%s1 + $0x10] sm:$0xff]
  %v39 = vld [vmem:[%s1 + $0x18] sm:$0xff]
  %v40 = vld [vmem:[%s1 + $0x20] sm:$0xff]
  %v41 = vld [vmem:[%s1 + $0x28] sm:$0xff]
  %v42 = vld [vmem:[%s1 + $0x30] sm:$0xff]
  %v43 = vld [vmem:[%s1 + $0x38] sm:$0xff]
  %v44 = vld [vmem:[%s1 + $0x40] sm:$0xff]
  %v45 = vld [vmem:[%s1 + $0x48] sm:$0xff]
  %v46 = vld [vmem:[%s1 + $0x50] sm:$0xff]
  %v47 = vld [vmem:[%s1 + $0x58] sm:$0xff]
  %v48 = vld [vmem:[%s1 + $0x60] sm:$0xff]
  %v49 = vld [vmem:[%s1 + $0x68] sm:$0xff]
  %v50 = vld [vmem:[%s1 + $0x70] sm:$0xff]
  %v51 = vld [vmem:[%s1 + $0x78] sm:$0xff]
  %v52 = vld [vmem:[%s1 + $0x80] sm:$0xff]
  %v53 = vld [vmem:[%s1 + $0x88] sm:$0xff]
  %v54 = vld [vmem:[%s1 + $0x90] sm:$0xff]
  %v55 = vld [vmem:[%s1 + $0x98] sm:$0xff]
  %v56 = vld [vmem:[%s1 + $0xa0] sm:$0xff]
  %v57 = vld [vmem:[%s1 + $0xa8] sm:$0xff]
  %v58 = vld [vmem:[%s1 + $0xb0] sm:$0xff]
  %v59 = vld [vmem:[%s1 + $0xb8] sm:$0xff]
  %v60 = vld [vmem:[%s1 + $0xc0] sm:$0xff]
  %v61 = vld [vmem:[%s1 + $0xc8] sm:$0xff]
  %v62 = vld [vmem:[%s1 + $0xd0] sm:$0xff]
  %v63 = vld [vmem:[%s1 + $0xd8] sm:$0xff]
  %v64 = vld [vmem:[%s1 + $0xe0] sm:$0xff]
  %v65 = vld [vmem:[%s1 + $0xe8] sm:$0xff]
  %v66 = vld [vmem:[%s1 + $0xf0] sm:$0xff]
  %v67 = vld [vmem:[%s1 + $0xf8] sm:$0xff]
  %68 = vmatpush.msra.mxu0 %v51
  %69 = vmatpush.msra.mxu0 %v50
  %70 = vmatpush.msra.mxu0 %v49
  %71 = vmatpush.msra.mxu0 %v48
  %72 = vmatpush.msra.mxu0 %v47
  %73 = vmatpush.msra.mxu0 %v46
  %74 = vmatpush.msra.mxu0 %v45
  %75 = vmatpush.msra.mxu0 %v44
  %76 = vmatpush.msra.mxu0 %v43
  %77 = vmatpush.msra.mxu0 %v42
  %78 = vmatpush.msra.mxu0 %v41
  %79 = vmatpush.msra.mxu0 %v40
  %80 = vmatpush.msra.mxu0 %v39
  %81 = vmatpush.msra.mxu0 %v38
  %82 = vmatpush.msra.mxu0 %v37
  %83 = vmatpush.msra.mxu0 %v36
  %84 = vmatmul.f32.gmra.mxu0 %v28
  %v85 = vpop.f32.mrf.mxu0
  %v86 = vadd.f32 0.0, %v85
  %87 = vmatmul.f32.gmra.mxu0 %v30
  %v88 = vpop.f32.mrf.mxu0
  %v89 = vadd.f32 0.0, %v88
  %90 = vmatmul.f32.gmra.mxu0 %v32
  %v91 = vpop.f32.mrf.mxu0
  %v92 = vadd.f32 0.0, %v91
  %93 = vmatmul.f32.gmra.mxu0 %v34
  %v94 = vpop.f32.mrf.mxu0
  %v95 = vadd.f32 0.0, %v94
  %96 = vdwg.mxu0
  %97 = vmatpush.msra.mxu0 %v67
  %98 = vmatpush.msra.mxu0 %v66
  %99 = vmatpush.msra.mxu0 %v65
  %100 = vmatpush.msra.mxu0 %v64
  %101 = vmatpush.msra.mxu0 %v63
  %102 = vmatpush.msra.mxu0 %v62
  %103 = vmatpush.msra.mxu0 %v61
  %104 = vmatpush.msra.mxu0 %v60
  %105 = vmatpush.msra.mxu0 %v59
  %106 = vmatpush.msra.mxu0 %v58
  %107 = vmatpush.msra.mxu0 %v57
  %108 = vmatpush.msra.mxu0 %v56
  %109 = vmatpush.msra.mxu0 %v55
  %110 = vmatpush.msra.mxu0 %v54
  %111 = vmatpush.msra.mxu0 %v53
  %112 = vmatpush.msra.mxu0 %v52
  %113 = vmatmul.f32.gmra.mxu0 %v29
  %v114 = vpop.f32.mrf.mxu0
  %v115 = vadd.f32 %v86, %v114
  %116 = vmatmul.f32.gmra.mxu0 %v31
  %v117 = vpop.f32.mrf.mxu0
  %v118 = vadd.f32 %v89, %v117
  %119 = vmatmul.f32.gmra.mxu0 %v33
  %v120 = vpop.f32.mrf.mxu0
  %v121 = vadd.f32 %v92, %v120
  %122 = vmatmul.f32.gmra.mxu0 %v35
  %v123 = vpop.f32.mrf.mxu0
  %v124 = vadd.f32 %v95, %v123
  %125 = vdwg.mxu0
  %v126 = vadd.f32 %v24, %v115
  %v127 = vadd.f32 %v25, %v118
  %v128 = vadd.f32 %v26, %v121
  %v129 = vadd.f32 %v27, %v124
  %130 = vst [vmem:[#allocation2] sm:$0xff] %v126
  %131 = vst [vmem:[#allocation2 + $0x8] sm:$0xff] %v127
  %132 = vst [vmem:[#allocation2 + $0x10] sm:$0xff] %v128
  %133 = vst [vmem:[#allocation2 + $0x18] sm:$0xff] %v129
  // Predicated region
  $region18: #{_lambda_.11} parent=0 // pred_check
    %p134 = pneg %p16
  $region19: #{_lambda_.11} parent=0 // pred_check_branch
    %136 = sbr.rel (%p134) target = $region21
  $region20: #{_lambda_.11} parent=0 // pred_region
    %v137 = vld [vmem:[#allocation2] sm:$0xff]
    %v138 = vld [vmem:[#allocation2 + $0x8] sm:$0xff]
    %v139 = vld [vmem:[#allocation2 + $0x10] sm:$0xff]
    %v140 = vld [vmem:[#allocation2 + $0x18] sm:$0xff]
    %v141 = vld [vmem:[%s2] sm:$0x1]
    %v143 = vperm.slane %v141, 0
    %v145 = vadd.f32 %v137, %v143
    %v146 = vadd.f32 %v138, %v143
    %v147 = vadd.f32 %v139, %v143
    %v148 = vadd.f32 %v140, %v143
    %v149 = vadd.f32 %v145, %v146
    %v150 = vadd.f32 %v149, %v147
    %v151 = vadd.f32 %v150, %v148
    %v152 = vrot.slane %v151, 4
    %v153 = vadd.f32 %v151, %v152
    %v154 = vrot.slane %v153, 2
    %v155 = vadd.f32 %v153, %v154
    %v156 = vrot.slane %v155, 1
    %v157 = vadd.f32 %v155, %v156
    %v158 = vmul.f32 %v145, %v145
    %v159 = vmul.f32 %v146, %v146
    %v160 = vmul.f32 %v147, %v147
    %v161 = vmul.f32 %v148, %v148
    %v162 = vadd.f32 %v158, %v159
    %v163 = vadd.f32 %v162, %v160
    %v164 = vadd.f32 %v163, %v161
    %v165 = vrot.slane %v164, 4
    %v166 = vadd.f32 %v164, %v165
    %v167 = vrot.slane %v166, 2
    %v168 = vadd.f32 %v166, %v167
    %v169 = vrot.slane %v168, 1
    %v170 = vadd.f32 %v168, %v169
    %vm171 = vcmask 1040384
    %v172 = vsel %vm171, %v157, %v170
    %173 = vst [vmem:[%s4] sm:$0x3] %v172
    %174 = vst [vmem:[%s3] sm:$0xff] %v145
    %175 = vst [vmem:[%s3 + $0x8] sm:$0xff] %v146
    %176 = vst [vmem:[%s3 + $0x10] sm:$0xff] %v147
    %177 = vst [vmem:[%s3 + $0x18] sm:$0xff] %v148
  $region21: #{_lambda_.11} parent=0 // pred_fallthru
    _
  // Predicated region
  $region22: #{_lambda_.11} parent=0 // pred_check
    _
  $region23: #{_lambda_.11} parent=0 // pred_check_branch
    %179 = sbr.rel (0) target = $region25
  $region24: #{_lambda_.11} parent=0 // pred_region
    _
  $region25: #{_lambda_.11} parent=0 // pred_fallthru
    _
  // Predicated region
  $region26: #{_lambda_.11} parent=0 // pred_check
    _
  $region27: #{_lambda_.11} parent=0 // pred_check_branch
    %181 = sbr.rel (0) target = $region29
  $region28: #{_lambda_.11} parent=0 // pred_region
    _
  $region29: #{_lambda_.11} parent=0 // pred_fallthru
    _
  // Predicated region
  $region30: #{_lambda_.11} parent=0 // pred_check
    _
  $region31: #{_lambda_.11} parent=0 // pred_check_branch
    %183 = sbr.rel (0) target = $region33
  $region32: #{_lambda_.11} parent=0 // pred_region
    _
  $region33: #{_lambda_.11} parent=0 // pred_fallthru
    _
  // Predicated region
  $region34: #{_lambda_.11} parent=0 // pred_check
    _
  $region35: #{_lambda_.11} parent=0 // pred_check_branch
    %185 = sbr.rel (0) target = $region37
  $region36: #{_lambda_.11} parent=0 // pred_region
    _
  $region37: #{_lambda_.11} parent=0 // pred_fallthru
    _

// kernel: _lambda_.12
$region0: #{_lambda_.12}
  #allocation0 [shape = 'u32[]', space=smem, size = 0x4, offset = 0x4, fixed_abs, tag = 'smem constant byte address 0x4 - core index']
  #allocation1 [shape = 'u32[72,128]{1,0:T(1,128)}', space=vmem, size = 0x9000, scoped, tag = 'internal scratch']
  %s0 = inlined_call_operand.vmem [shape: f32[32,128], index: 0, kind: input, shape index: {}]
  %s1 = inlined_call_operand.vmem [shape: f32[2,128], index: 1, kind: input, shape index: {}]
  %s2 = inlined_call_operand.vmem [shape: f32[1,128], index: 2, kind: input, shape index: {}]
  %s3 = inlined_call_operand.vmem [shape: f32[1,128], index: 3, kind: input, shape index: {}]
  %s4 = inlined_call_operand.vmem [shape: f32[32,128], index: 4, kind: output, shape index: {}]
  %s5 = sld [smem:[#allocation0]]
  $region26: #{_lambda_.12} parent=0
    _
  %s7 = ssub.s32 1, %s5
  %s8 = scalar_select 0, %s7, %s5
  // Predicated region
  $region2: #{_lambda_.12} parent=0 // pred_check
    _
  $region3: #{_lambda_.12} parent=0 // pred_check_branch
    %10 = sbr.rel (0) target = $region5
  $region4: #{_lambda_.12} parent=0 // pred_region
    _
  $region5: #{_lambda_.12} parent=0 // pred_fallthru
    _
  // Predicated region
  $region6: #{_lambda_.12} parent=0 // pred_check
    _
  $region7: #{_lambda_.12} parent=0 // pred_check_branch
    %12 = sbr.rel (0) target = $region9
  $region8: #{_lambda_.12} parent=0 // pred_region
    _
  $region9: #{_lambda_.12} parent=0 // pred_fallthru
    _
  // Predicated region
  $region10: #{_lambda_.12} parent=0 // pred_check
    _
  $region11: #{_lambda_.12} parent=0 // pred_check_branch
    %14 = sbr.rel (0) target = $region13
  $region12: #{_lambda_.12} parent=0 // pred_region
    _
  $region13: #{_lambda_.12} parent=0 // pred_fallthru
    _
  // Predicated region
  $region14: #{_lambda_.12} parent=0 // pred_check
    _
  $region15: #{_lambda_.12} parent=0 // pred_check_branch
    %16 = sbr.rel (0) target = $region17
  $region16: #{_lambda_.12} parent=0 // pred_region
    _
  $region17: #{_lambda_.12} parent=0 // pred_fallthru
    _
  %v17 = vld [vmem:[%s1] sm:$0x1]
  %v18 = vmul.f32 %v17, 0.03125
  %v19 = vld [vmem:[%s1 + $0x1] sm:$0x1]
  %v20 = vmul.f32 %v19, 0.03125
  %v21 = vmul.f32 %v18, %v18
  %v22 = vsub.f32 %v20, %v21
  %v23 = vmax.f32 %v22, 0.0
  %v24 = vadd.f32 %v23, 1e-05
  %v25 = vrsqrt.pop %v24
  %v26 = vmul.f32 %v25, %v24
  %v27 = vmul.f32 %v26, %v25
  %v28 = vmul.f32 0.5, %v27
  %v29 = vsub.f32 1.5, %v28
  %v30 = vmul.f32 %v25, %v29
  %vm31 = vweird.f32 %v24
  %vm32 = vweird.f32 %v25
  %vm33 = vmor %vm31, %vm32
  %v34 = vsel %vm33, %v25, %v30
  %v35 = vld [vmem:[%s2] sm:$0x1]
  %v36 = vmul.f32 %v34, %v35
  %v37 = vld [vmem:[%s0] sm:$0xff]
  %v38 = vld [vmem:[%s0 + $0x8] sm:$0xff]
  %v39 = vld [vmem:[%s0 + $0x10] sm:$0xff]
  %v40 = vld [vmem:[%s0 + $0x18] sm:$0xff]
  %v41 = vperm.slane %v18, 0
  %v42 = vsub.f32 %v37, %v41
  %v43 = vsub.f32 %v38, %v41
  %v44 = vsub.f32 %v39, %v41
  %v45 = vsub.f32 %v40, %v41
  %v46 = vperm.slane %v36, 0
  %v47 = vmul.f32 %v42, %v46
  %v48 = vmul.f32 %v43, %v46
  %v49 = vmul.f32 %v44, %v46
  %v50 = vmul.f32 %v45, %v46
  %v51 = vld [vmem:[%s3] sm:$0x1]
  %v53 = vperm.slane %v51, 0
  %v55 = vadd.f32 %v47, %v53
  %v56 = vadd.f32 %v48, %v53
  %v57 = vadd.f32 %v49, %v53
  %v58 = vadd.f32 %v50, %v53
  %vm59 = vcmp.ge.f32.partialorder %v55, 0.0
  %vm60 = vcmp.ge.f32.partialorder %v56, 0.0
  %vm61 = vcmp.ge.f32.partialorder %v57, 0.0
  %vm62 = vcmp.ge.f32.partialorder %v58, 0.0
  %v63 = vmul.f32 %v55, 0.2
  %v64 = vmul.f32 %v56, 0.2
  %v65 = vmul.f32 %v57, 0.2
  %v66 = vmul.f32 %v58, 0.2
  %v67 = vsel %vm59, %v55, %v63
  %v68 = vsel %vm60, %v56, %v64
  %v69 = vsel %vm61, %v57, %v65
  %v70 = vsel %vm62, %v58, %v66
  %71 = vst [vmem:[%s4] sm:$0xff] %v67
  %72 = vst [vmem:[%s4 + $0x8] sm:$0xff] %v68
  %73 = vst [vmem:[%s4 + $0x10] sm:$0xff] %v69
  %74 = vst [vmem:[%s4 + $0x18] sm:$0xff] %v70
  // Predicated region
  $region18: #{_lambda_.12} parent=0 // pred_check
    _
  $region19: #{_lambda_.12} parent=0 // pred_check_branch
    %76 = sbr.rel (0) target = $region21
  $region20: #{_lambda_.12} parent=0 // pred_region
    _
  $region21: #{_lambda_.12} parent=0 // pred_fallthru
    _
  // Predicated region
  $region22: #{_lambda_.12} parent=0 // pred_check
    _
  $region23: #{_lambda_.12} parent=0 // pred_check_branch
    %78 = sbr.rel (0) target = $region25
  $region24: #{_lambda_.12} parent=0 // pred_region
    _
  $region25: #{_lambda_.12} parent=0 // pred_fallthru
    _

// kernel: _lambda_.14
$region0: #{_lambda_.14}
  #allocation0 [shape = 'u32[]', space=smem, size = 0x4, offset = 0x4, fixed_abs, tag = 'smem constant byte address 0x4 - core index']
  #allocation1 [shape = 'u32[72,128]{1,0:T(1,128)}', space=vmem, size = 0x9000, scoped, tag = 'internal scratch']
  %s0 = inlined_call_operand.vmem [shape: f32[24,128], index: 0, kind: input, shape index: {}]
  %s1 = inlined_call_operand.vmem [shape: f32[2,128], index: 1, kind: input, shape index: {}]
  %s2 = inlined_call_operand.vmem [shape: f32[1,128], index: 2, kind: input, shape index: {}]
  %s3 = inlined_call_operand.vmem [shape: f32[1,128], index: 3, kind: input, shape index: {}]
  %s4 = inlined_call_operand.vmem [shape: f32[24,128], index: 4, kind: output, shape index: {}]
  %s5 = sld [smem:[#allocation0]]
  $region26: #{_lambda_.14} parent=0
    _
  %s7 = ssub.s32 1, %s5
  %s8 = scalar_select 0, %s7, %s5
  // Predicated region
  $region2: #{_lambda_.14} parent=0 // pred_check
    _
  $region3: #{_lambda_.14} parent=0 // pred_check_branch
    %10 = sbr.rel (0) target = $region5
  $region4: #{_lambda_.14} parent=0 // pred_region
    _
  $region5: #{_lambda_.14} parent=0 // pred_fallthru
    _
  // Predicated region
  $region6: #{_lambda_.14} parent=0 // pred_check
    _
  $region7: #{_lambda_.14} parent=0 // pred_check_branch
    %12 = sbr.rel (0) target = $region9
  $region8: #{_lambda_.14} parent=0 // pred_region
    _
  $region9: #{_lambda_.14} parent=0 // pred_fallthru
    _
  // Predicated region
  $region10: #{_lambda_.14} parent=0 // pred_check
    _
  $region11: #{_lambda_.14} parent=0 // pred_check_branch
    %14 = sbr.rel (0) target = $region13
  $region12: #{_lambda_.14} parent=0 // pred_region
    _
  $region13: #{_lambda_.14} parent=0 // pred_fallthru
    _
  // Predicated region
  $region14: #{_lambda_.14} parent=0 // pred_check
    _
  $region15: #{_lambda_.14} parent=0 // pred_check_branch
    %16 = sbr.rel (0) target = $region17
  $region16: #{_lambda_.14} parent=0 // pred_region
    _
  $region17: #{_lambda_.14} parent=0 // pred_fallthru
    _
  %v17 = vld [vmem:[%s1] sm:$0x1]
  %v18 = vmul.f32 %v17, 0.055555556
  %v19 = vld [vmem:[%s1 + $0x1] sm:$0x1]
  %v20 = vmul.f32 %v19, 0.055555556
  %v21 = vmul.f32 %v18, %v18
  %v22 = vsub.f32 %v20, %v21
  %v23 = vmax.f32 %v22, 0.0
  %v24 = vadd.f32 %v23, 1e-05
  %v25 = vrsqrt.pop %v24
  %v26 = vmul.f32 %v25, %v24
  %v27 = vmul.f32 %v26, %v25
  %v28 = vmul.f32 0.5, %v27
  %v29 = vsub.f32 1.5, %v28
  %v30 = vmul.f32 %v25, %v29
  %vm31 = vweird.f32 %v24
  %vm32 = vweird.f32 %v25
  %vm33 = vmor %vm31, %vm32
  %v34 = vsel %vm33, %v25, %v30
  %v35 = vld [vmem:[%s2] sm:$0x1]
  %v36 = vmul.f32 %v34, %v35
  %v37 = vld [vmem:[%s0] sm:$0xff]
  %v38 = vld [vmem:[%s0 + $0x8] sm:$0xff]
  %v39 = vld [vmem:[%s0 + $0x10] sm:$0xff]
  %v40 = vperm.slane %v18, 0
  %v41 = vsub.f32 %v37, %v40
  %v42 = vsub.f32 %v38, %v40
  %v43 = vsub.f32 %v39, %v40
  %v44 = vperm.slane %v36, 0
  %v45 = vmul.f32 %v41, %v44
  %v46 = vmul.f32 %v42, %v44
  %v47 = vmul.f32 %v43, %v44
  %v48 = vld [vmem:[%s3] sm:$0x1]
  %v50 = vperm.slane %v48, 0
  %v52 = vadd.f32 %v45, %v50
  %v53 = vadd.f32 %v46, %v50
  %v54 = vadd.f32 %v47, %v50
  %vm55 = vcmp.ge.f32.partialorder %v52, 0.0
  %vm56 = vcmp.ge.f32.partialorder %v53, 0.0
  %vm57 = vcmp.ge.f32.partialorder %v54, 0.0
  %v58 = vmul.f32 %v52, 0.2
  %v59 = vmul.f32 %v53, 0.2
  %v60 = vmul.f32 %v54, 0.2
  %v61 = vsel %vm55, %v52, %v58
  %v62 = vsel %vm56, %v53, %v59
  %v63 = vsel %vm57, %v54, %v60
  %64 = vst [vmem:[%s4] sm:$0xff] %v61
  %65 = vst [vmem:[%s4 + $0x8] sm:$0xff] %v62
  %66 = vst [vmem:[%s4 + $0x10] sm:$0xff] %v63
  // Predicated region
  $region18: #{_lambda_.14} parent=0 // pred_check
    _
  $region19: #{_lambda_.14} parent=0 // pred_check_branch
    %68 = sbr.rel (0) target = $region21
  $region20: #{_lambda_.14} parent=0 // pred_region
    _
  $region21: #{_lambda_.14} parent=0 // pred_fallthru
    _
  // Predicated region
  $region22: #{_lambda_.14} parent=0 // pred_check
    _
  $region23: #{_lambda_.14} parent=0 // pred_check_branch
    %70 = sbr.rel (0) target = $region25
  $region24: #{_lambda_.14} parent=0 // pred_region
    _
  $region25: #{_lambda_.14} parent=0 // pred_fallthru
    _

// kernel: _lambda_.13
$region0: #{_lambda_.13}
  #allocation0 [shape = 'u32[]', space=smem, size = 0x4, offset = 0x4, fixed_abs, tag = 'smem constant byte address 0x4 - core index']
  #allocation1 [shape = 'u32[72,128]{1,0:T(1,128)}', space=vmem, size = 0x9000, scoped, tag = 'internal scratch']
  #allocation2 [shape = 'f32[24,128]{1,0:T(8,128)}', space=vmem, size = 0x3000, scoped, tag = 'scratch operand']
  %s0 = inlined_call_operand.vmem [shape: f32[24,512], index: 0, kind: input, shape index: {}]
  %s1 = inlined_call_operand.vmem [shape: f32[512,128], index: 1, kind: input, shape index: {}]
  %s2 = inlined_call_operand.vmem [shape: f32[1,128], index: 2, kind: input, shape index: {}]
  %s3 = inlined_call_operand.vmem [shape: f32[24,128], index: 3, kind: output, shape index: {0}]
  %s4 = inlined_call_operand.vmem [shape: f32[1,2,128], index: 4, kind: output, shape index: {1}]
  %5 = xla_tuple %s3, %s4
  %s6 = sld [smem:[#allocation0]]
  $region38: #{_lambda_.13} parent=0
    _
  %s8 = ssub.s32 1, %s6
  %s9 = scalar_select 0, %s8, %s6
  // Predicated region
  $region2: #{_lambda_.13} parent=0 // pred_check
    _
  $region3: #{_lambda_.13} parent=0 // pred_check_branch
    %11 = sbr.rel (0) target = $region5
  $region4: #{_lambda_.13} parent=0 // pred_region
    _
  $region5: #{_lambda_.13} parent=0 // pred_fallthru
    _
  // Predicated region
  $region6: #{_lambda_.13} parent=0 // pred_check
    _
  $region7: #{_lambda_.13} parent=0 // pred_check_branch
    %13 = sbr.rel (0) target = $region9
  $region8: #{_lambda_.13} parent=0 // pred_region
    _
  $region9: #{_lambda_.13} parent=0 // pred_fallthru
    _
  // Predicated region
  $region10: #{_lambda_.13} parent=0 // pred_check
    _
  $region11: #{_lambda_.13} parent=0 // pred_check_branch
    %15 = sbr.rel (0) target = $region13
  $region12: #{_lambda_.13} parent=0 // pred_region
    _
  $region13: #{_lambda_.13} parent=0 // pred_fallthru
    _
  %p16 = scmp.eq.s32.totalorder 0, 0
  // Predicated region
  $region14: #{_lambda_.13} parent=0 // pred_check
    %p17 = pneg %p16
  $region15: #{_lambda_.13} parent=0 // pred_check_branch
    %19 = sbr.rel (%p17) target = $region17
  $region16: #{_lambda_.13} parent=0 // pred_region
    %20 = vst [vmem:[#allocation2] sm:$0xff] 0.0
    %21 = vst [vmem:[#allocation2 + $0x8] sm:$0xff] 0.0
    %22 = vst [vmem:[#allocation2 + $0x10] sm:$0xff] 0.0
  $region17: #{_lambda_.13} parent=0 // pred_fallthru
    _
  %v23 = vld [vmem:[#allocation2] sm:$0xff]
  %v24 = vld [vmem:[#allocation2 + $0x8] sm:$0xff]
  %v25 = vld [vmem:[#allocation2 + $0x10] sm:$0xff]
  %v26 = vld [vmem:[%s0] sm:$0xff]
  %v27 = vld [vmem:[%s0 + $0x8] sm:$0xff]
  %v28 = vld [vmem:[%s0 + $0x10] sm:$0xff]
  %v29 = vld [vmem:[%s0 + $0x18] sm:$0xff]
  %v30 = vld [vmem:[%s0 + $0x20] sm:$0xff]
  %v31 = vld [vmem:[%s0 + $0x28] sm:$0xff]
  %v32 = vld [vmem:[%s0 + $0x30] sm:$0xff]
  %v33 = vld [vmem:[%s0 + $0x38] sm:$0xff]
  %v34 = vld [vmem:[%s0 + $0x40] sm:$0xff]
  %v35 = vld [vmem:[%s0 + $0x48] sm:$0xff]
  %v36 = vld [vmem:[%s0 + $0x50] sm:$0xff]
  %v37 = vld [vmem:[%s0 + $0x58] sm:$0xff]
  %v38 = vld [vmem:[%s1] sm:$0xff]
  %v39 = vld [vmem:[%s1 + $0x8] sm:$0xff]
  %v40 = vld [vmem:[%s1 + $0x10] sm:$0xff]
  %v41 = vld [vmem:[%s1 + $0x18] sm:$0xff]
  %v42 = vld [vmem:[%s1 + $0x20] sm:$0xff]
  %v43 = vld [vmem:[%s1 + $0x28] sm:$0xff]
  %v44 = vld [vmem:[%s1 + $0x30] sm:$0xff]
  %v45 = vld [vmem:[%s1 + $0x38] sm:$0xff]
  %v46 = vld [vmem:[%s1 + $0x40] sm:$0xff]
  %v47 = vld [vmem:[%s1 + $0x48] sm:$0xff]
  %v48 = vld [vmem:[%s1 + $0x50] sm:$0xff]
  %v49 = vld [vmem:[%s1 + $0x58] sm:$0xff]
  %v50 = vld [vmem:[%s1 + $0x60] sm:$0xff]
  %v51 = vld [vmem:[%s1 + $0x68] sm:$0xff]
  %v52 = vld [vmem:[%s1 + $0x70] sm:$0xff]
  %v53 = vld [vmem:[%s1 + $0x78] sm:$0xff]
  %v54 = vld [vmem:[%s1 + $0x80] sm:$0xff]
  %v55 = vld [vmem:[%s1 + $0x88] sm:$0xff]
  %v56 = vld [vmem:[%s1 + $0x90] sm:$0xff]
  %v57 = vld [vmem:[%s1 + $0x98] sm:$0xff]
  %v58 = vld [vmem:[%s1 + $0xa0] sm:$0xff]
  %v59 = vld [vmem:[%s1 + $0xa8] sm:$0xff]
  %v60 = vld [vmem:[%s1 + $0xb0] sm:$0xff]
  %v61 = vld [vmem:[%s1 + $0xb8] sm:$0xff]
  %v62 = vld [vmem:[%s1 + $0xc0] sm:$0xff]
  %v63 = vld [vmem:[%s1 + $0xc8] sm:$0xff]
  %v64 = vld [vmem:[%s1 + $0xd0] sm:$0xff]
  %v65 = vld [vmem:[%s1 + $0xd8] sm:$0xff]
  %v66 = vld [vmem:[%s1 + $0xe0] sm:$0xff]
  %v67 = vld [vmem:[%s1 + $0xe8] sm:$0xff]
  %v68 = vld [vmem:[%s1 + $0xf0] sm:$0xff]
  %v69 = vld [vmem:[%s1 + $0xf8] sm:$0xff]
  %v70 = vld [vmem:[%s1 + $0x100] sm:$0xff]
  %v71 = vld [vmem:[%s1 + $0x108] sm:$0xff]
  %v72 = vld [vmem:[%s1 + $0x110] sm:$0xff]
  %v73 = vld [vmem:[%s1 + $0x118] sm:$0xff]
  %v74 = vld [vmem:[%s1 + $0x120] sm:$0xff]
  %v75 = vld [vmem:[%s1 + $0x128] sm:$0xff]
  %v76 = vld [vmem:[%s1 + $0x130] sm:$0xff]
  %v77 = vld [vmem:[%s1 + $0x138] sm:$0xff]
  %v78 = vld [vmem:[%s1 + $0x140] sm:$0xff]
  %v79 = vld [vmem:[%s1 + $0x148] sm:$0xff]
  %v80 = vld [vmem:[%s1 + $0x150] sm:$0xff]
  %v81 = vld [vmem:[%s1 + $0x158] sm:$0xff]
  %v82 = vld [vmem:[%s1 + $0x160] sm:$0xff]
  %v83 = vld [vmem:[%s1 + $0x168] sm:$0xff]
  %v84 = vld [vmem:[%s1 + $0x170] sm:$0xff]
  %v85 = vld [vmem:[%s1 + $0x178] sm:$0xff]
  %v86 = vld [vmem:[%s1 + $0x180] sm:$0xff]
  %v87 = vld [vmem:[%s1 + $0x188] sm:$0xff]
  %v88 = vld [vmem:[%s1 + $0x190] sm:$0xff]
  %v89 = vld [vmem:[%s1 + $0x198] sm:$0xff]
  %v90 = vld [vmem:[%s1 + $0x1a0] sm:$0xff]
  %v91 = vld [vmem:[%s1 + $0x1a8] sm:$0xff]
  %v92 = vld [vmem:[%s1 + $0x1b0] sm:$0xff]
  %v93 = vld [vmem:[%s1 + $0x1b8] sm:$0xff]
  %v94 = vld [vmem:[%s1 + $0x1c0] sm:$0xff]
  %v95 = vld [vmem:[%s1 + $0x1c8] sm:$0xff]
  %v96 = vld [vmem:[%s1 + $0x1d0] sm:$0xff]
  %v97 = vld [vmem:[%s1 + $0x1d8] sm:$0xff]
  %v98 = vld [vmem:[%s1 + $0x1e0] sm:$0xff]
  %v99 = vld [vmem:[%s1 + $0x1e8] sm:$0xff]
  %v100 = vld [vmem:[%s1 + $0x1f0] sm:$0xff]
  %v101 = vld [vmem:[%s1 + $0x1f8] sm:$0xff]
  %102 = vmatpush.msra.mxu0 %v53
  %103 = vmatpush.msra.mxu0 %v52
  %104 = vmatpush.msra.mxu0 %v51
  %105 = vmatpush.msra.mxu0 %v50
  %106 = vmatpush.msra.mxu0 %v49
  %107 = vmatpush.msra.mxu0 %v48
  %108 = vmatpush.msra.mxu0 %v47
  %109 = vmatpush.msra.mxu0 %v46
  %110 = vmatpush.msra.mxu0 %v45
  %111 = vmatpush.msra.mxu0 %v44
  %112 = vmatpush.msra.mxu0 %v43
  %113 = vmatpush.msra.mxu0 %v42
  %114 = vmatpush.msra.mxu0 %v41
  %115 = vmatpush.msra.mxu0 %v40
  %116 = vmatpush.msra.mxu0 %v39
  %117 = vmatpush.msra.mxu0 %v38
  %118 = vmatmul.f32.gmra.mxu0 %v26
  %v119 = vpop.f32.mrf.mxu0
  %v120 = vadd.f32 0.0, %v119
  %121 = vmatmul.f32.gmra.mxu0 %v30
  %v122 = vpop.f32.mrf.mxu0
  %v123 = vadd.f32 0.0, %v122
  %124 = vmatmul.f32.gmra.mxu0 %v34
  %v125 = vpop.f32.mrf.mxu0
  %v126 = vadd.f32 0.0, %v125
  %127 = vdwg.mxu0
  %128 = vmatpush.msra.mxu0 %v69
  %129 = vmatpush.msra.mxu0 %v68
  %130 = vmatpush.msra.mxu0 %v67
  %131 = vmatpush.msra.mxu0 %v66
  %132 = vmatpush.msra.mxu0 %v65
  %133 = vmatpush.msra.mxu0 %v64
  %134 = vmatpush.msra.mxu0 %v63
  %135 = vmatpush.msra.mxu0 %v62
  %136 = vmatpush.msra.mxu0 %v61
  %137 = vmatpush.msra.mxu0 %v60
  %138 = vmatpush.msra.mxu0 %v59
  %139 = vmatpush.msra.mxu0 %v58
  %140 = vmatpush.msra.mxu0 %v57
  %141 = vmatpush.msra.mxu0 %v56
  %142 = vmatpush.msra.mxu0 %v55
  %143 = vmatpush.msra.mxu0 %v54
  %144 = vmatmul.f32.gmra.mxu0 %v27
  %v145 = vpop.f32.mrf.mxu0
  %v146 = vadd.f32 %v120, %v145
  %147 = vmatmul.f32.gmra.mxu0 %v31
  %v148 = vpop.f32.mrf.mxu0
  %v149 = vadd.f32 %v123, %v148
  %150 = vmatmul.f32.gmra.mxu0 %v35
  %v151 = vpop.f32.mrf.mxu0
  %v152 = vadd.f32 %v126, %v151
  %153 = vdwg.mxu0
  %154 = vmatpush.msra.mxu0 %v85
  %155 = vmatpush.msra.mxu0 %v84
  %156 = vmatpush.msra.mxu0 %v83
  %157 = vmatpush.msra.mxu0 %v82
  %158 = vmatpush.msra.mxu0 %v81
  %159 = vmatpush.msra.mxu0 %v80
  %160 = vmatpush.msra.mxu0 %v79
  %161 = vmatpush.msra.mxu0 %v78
  %162 = vmatpush.msra.mxu0 %v77
  %163 = vmatpush.msra.mxu0 %v76
  %164 = vmatpush.msra.mxu0 %v75
  %165 = vmatpush.msra.mxu0 %v74
  %166 = vmatpush.msra.mxu0 %v73
  %167 = vmatpush.msra.mxu0 %v72
  %168 = vmatpush.msra.mxu0 %v71
  %169 = vmatpush.msra.mxu0 %v70
  %170 = vmatmul.f32.gmra.mxu0 %v28
  %v171 = vpop.f32.mrf.mxu0
  %v172 = vadd.f32 %v146, %v171
  %173 = vmatmul.f32.gmra.mxu0 %v32
  %v174 = vpop.f32.mrf.mxu0
  %v175 = vadd.f32 %v149, %v174
  %176 = vmatmul.f32.gmra.mxu0 %v36
  %v177 = vpop.f32.mrf.mxu0
  %v178 = vadd.f32 %v152, %v177
  %179 = vdwg.mxu0
  %180 = vmatpush.msra.mxu0 %v101
  %181 = vmatpush.msra.mxu0 %v100
  %182 = vmatpush.msra.mxu0 %v99
  %183 = vmatpush.msra.mxu0 %v98
  %184 = vmatpush.msra.mxu0 %v97
  %185 = vmatpush.msra.mxu0 %v96
  %186 = vmatpush.msra.mxu0 %v95
  %187 = vmatpush.msra.mxu0 %v94
  %188 = vmatpush.msra.mxu0 %v93
  %189 = vmatpush.msra.mxu0 %v92
  %190 = vmatpush.msra.mxu0 %v91
  %191 = vmatpush.msra.mxu0 %v90
  %192 = vmatpush.msra.mxu0 %v89
  %193 = vmatpush.msra.mxu0 %v88
  %194 = vmatpush.msra.mxu0 %v87
  %195 = vmatpush.msra.mxu0 %v86
  %196 = vmatmul.f32.gmra.mxu0 %v29
  %v197 = vpop.f32.mrf.mxu0
  %v198 = vadd.f32 %v172, %v197
  %199 = vmatmul.f32.gmra.mxu0 %v33
  %v200 = vpop.f32.mrf.mxu0
  %v201 = vadd.f32 %v175, %v200
  %202 = vmatmul.f32.gmra.mxu0 %v37
  %v203 = vpop.f32.mrf.mxu0
  %v204 = vadd.f32 %v178, %v203
  %205 = vdwg.mxu0
  %v206 = vadd.f32 %v23, %v198
  %v207 = vadd.f32 %v24, %v201
  %v208 = vadd.f32 %v25, %v204
  %209 = vst [vmem:[#allocation2] sm:$0xff] %v206
  %210 = vst [vmem:[#allocation2 + $0x8] sm:$0xff] %v207
  %211 = vst [vmem:[#allocation2 + $0x10] sm:$0xff] %v208
  // Predicated region
  $region18: #{_lambda_.13} parent=0 // pred_check
    %p212 = pneg %p16
  $region19: #{_lambda_.13} parent=0 // pred_check_branch
    %214 = sbr.rel (%p212) target = $region21
  $region20: #{_lambda_.13} parent=0 // pred_region
    %v215 = vld [vmem:[#allocation2] sm:$0xff]
    %v216 = vld [vmem:[#allocation2 + $0x8] sm:$0xff]
    %v217 = vld [vmem:[#allocation2 + $0x10] sm:$0xff]
    %v218 = vld [vmem:[%s2] sm:$0x1]
    %v220 = vperm.slane %v218, 0
    %v222 = vadd.f32 %v215, %v220
    %v223 = vadd.f32 %v216, %v220
    %v224 = vadd.f32 %v217, %v220
    %v225 = vadd.f32 %v222, %v223
    %v226 = vadd.f32 %v225, %v224
    %v227 = vrot.slane %v226, 4
    %v228 = vadd.f32 %v226, %v227
    %v229 = vrot.slane %v228, 2
    %v230 = vadd.f32 %v228, %v229
    %v231 = vrot.slane %v230, 1
    %v232 = vadd.f32 %v230, %v231
    %v233 = vmul.f32 %v222, %v222
    %v234 = vmul.f32 %v223, %v223
    %v235 = vmul.f32 %v224, %v224
    %v236 = vadd.f32 %v233, %v234
    %v237 = vadd.f32 %v236, %v235
    %v238 = vrot.slane %v237, 4
    %v239 = vadd.f32 %v237, %v238
    %v240 = vrot.slane %v239, 2
    %v241 = vadd.f32 %v239, %v240
    %v242 = vrot.slane %v241, 1
    %v243 = vadd.f32 %v241, %v242
    %vm244 = vcmask 1040384
    %v245 = vsel %vm244, %v232, %v243
    %246 = vst [vmem:[%s4] sm:$0x3] %v245
    %247 = vst [vmem:[%s3] sm:$0xff] %v222
    %248 = vst [vmem:[%s3 + $0x8] sm:$0xff] %v223
    %249 = vst [vmem:[%s3 + $0x10] sm:$0xff] %v224
  $region21: #{_lambda_.13} parent=0 // pred_fallthru
    _
  // Predicated region
  $region22: #{_lambda_.13} parent=0 // pred_check
    _
  $region23: #{_lambda_.13} parent=0 // pred_check_branch
    %251 = sbr.rel (0) target = $region25
  $region24: #{_lambda_.13} parent=0 // pred_region
    _
  $region25: #{_lambda_.13} parent=0 // pred_fallthru
    _
  // Predicated region
  $region26: #{_lambda_.13} parent=0 // pred_check
    _
  $region27: #{_lambda_.13} parent=0 // pred_check_branch
    %253 = sbr.rel (0) target = $region29
  $region28: #{_lambda_.13} parent=0 // pred_region
    _
  $region29: #{_lambda_.13} parent=0 // pred_fallthru
    _
  // Predicated region
  $region30: #{_lambda_.13} parent=0 // pred_check
    _
  $region31: #{_lambda_.13} parent=0 // pred_check_branch
    %255 = sbr.rel (0) target = $region33
  $region32: #{_lambda_.13} parent=0 // pred_region
    _
  $region33: #{_lambda_.13} parent=0 // pred_fallthru
    _
  // Predicated region
  $region34: #{_lambda_.13} parent=0 // pred_check
    _
  $region35: #{_lambda_.13} parent=0 // pred_check_branch
    %257 = sbr.rel (0) target = $region37
  $region36: #{_lambda_.13} parent=0 // pred_region
    _
  $region37: #{_lambda_.13} parent=0 // pred_fallthru
    _

// kernel: _lambda_.15
$region0: #{_lambda_.15}
  #allocation0 [shape = 'u32[]', space=smem, size = 0x4, offset = 0x4, fixed_abs, tag = 'smem constant byte address 0x4 - core index']
  #allocation1 [shape = 'u32[72,128]{1,0:T(1,128)}', space=vmem, size = 0x9000, scoped, tag = 'internal scratch']
  #allocation2 [shape = 'f32[8,128]{1,0:T(8,128)}', space=vmem, size = 0x1000, scoped, tag = 'scratch operand']
  %s0 = inlined_call_operand.vmem [shape: f32[8,1024], index: 0, kind: input, shape index: {}]
  %s1 = inlined_call_operand.vmem [shape: f32[1024,128], index: 1, kind: input, shape index: {}]
  %s2 = inlined_call_operand.vmem [shape: f32[1,128], index: 2, kind: input, shape index: {}]
  %s3 = inlined_call_operand.vmem [shape: f32[8,128], index: 3, kind: output, shape index: {}]
  %s4 = sld [smem:[#allocation0]]
  $region53: #{_lambda_.15} parent=0
    _
  %s6 = ssub.s32 1, %s4
  %s7 = scalar_select 0, %s6, %s4
  loop: start=0, step=1, limit=4
  $region2: #{_lambda_.15} parent=0 // loop_pre_header
    _
  $region3: #{_lambda_.15} parent=0 // loop_header
    %s9 = sphi 0, %s13
    %p10 = scmp.ge.s32.totalorder %s9, 4
    %s16 = sphi 0, %s35
    %s17 = sphi 0, %s31
    %s18 = sphi 0, %s27
    %s19 = sphi 0, %s16
    %s20 = sphi 0, %s17
    %s21 = sphi 0, %s18
    %s22 = sphi 0, %s19
    %s23 = sphi 0, %s20
    %s24 = sphi 0, %s21
    %s40 = sphi 0, %s42
    %s43 = sphi 0, %s40
    %s44 = sphi 0, %s43
    %s60 = sphi 0, %s44
    %s68 = sphi 0, %s70
    %s71 = sphi 0, %s68
    %s72 = sphi 0, %s71
    %s88 = sphi 0, %s72
    %s94 = sphi 0, %s96
    %s97 = sphi 0, %s94
    %s98 = sphi 0, %s97
    %s114 = sphi 0, %s98
    %s122 = sphi 0, %s124
    %s125 = sphi 0, %s122
    %s126 = sphi 0, %s125
    %s142 = sphi 0, %s126
  $region4: #{_lambda_.15} parent=0 // loop_header_branch
    %12 = sbr.rel (%p10) target = $region8
  $region5: #{_lambda_.15} parent=0 // loop_body
    %s14 = ssub.s32 %s9, 1
    %s15 = ssub.s32 %s9, 2
    %s25 = sadd.s32 1, %s18
    %p26 = scmp.ge.s32.totalorder %s25, 2
    %s27 = scalar_select %p26, 0, %s25
    %s28 = sadd.s32 1, %s17
    %s29 = scalar_select %p26, %s28, %s17
    %p30 = scmp.ge.s32.totalorder %s29, 1
    %s31 = scalar_select %p30, 0, %s29
    %s32 = sadd.s32 1, %s16
    %s33 = scalar_select %p30, %s32, %s16
    %p34 = scmp.ge.s32.totalorder %s33, 1
    %s35 = scalar_select %p34, 0, %s33
    %s36 = ssub.s32 %s16, %s35
    %s37 = ssub.s32 %s18, %s27
    %s38 = sor.u32 %s36, %s37
    %p39 = scmp.eq.s32.totalorder %s38, 0
    %s41 = sadd.s32 %s40, 1
    %s42 = scalar_select %p39, %s40, %s41
    %p45 = pneg %p39
    %p46 = scmp.eq.s32.totalorder %s9, 1
    %p47 = por %p45, %p46
    %p48 = scmp.ne.s32.totalorder %s40, %s43
    %p49 = scmp.eq.s32.totalorder %s9, 0
    %p50 = por %p48, %p49
    %p51 = scmp.ne.s32.totalorder %s40, %s43
    %p52 = scmp.eq.s32.totalorder %s14, 1
    %p53 = por %p51, %p52
    %p54 = scmp.ne.s32.totalorder %s43, %s44
    %p55 = scmp.eq.s32.totalorder %s14, 0
    %p56 = por %p54, %p55
    %p57 = scmp.ne.s32.totalorder %s43, %s44
    %p58 = scmp.eq.s32.totalorder %s15, 1
    %p59 = por %p57, %p58
    %p61 = scmp.ne.s32.totalorder %s44, %s60
    %p62 = scmp.eq.s32.totalorder %s15, 0
    %p63 = por %p61, %p62
    %s64 = ssub.s32 %s18, %s27
    %s65 = ssub.s32 %s17, %s31
    %s66 = sor.u32 %s64, %s65
    %p67 = scmp.eq.s32.totalorder %s66, 0
    %s69 = sadd.s32 %s68, 1
    %s70 = scalar_select %p67, %s68, %s69
    %p73 = pneg %p67
    %p74 = scmp.eq.s32.totalorder %s9, 1
    %p75 = por %p73, %p74
    %p76 = scmp.ne.s32.totalorder %s68, %s71
    %p77 = scmp.eq.s32.totalorder %s9, 0
    %p78 = por %p76, %p77
    %p79 = scmp.ne.s32.totalorder %s68, %s71
    %p80 = scmp.eq.s32.totalorder %s14, 1
    %p81 = por %p79, %p80
    %p82 = scmp.ne.s32.totalorder %s71, %s72
    %p83 = scmp.eq.s32.totalorder %s14, 0
    %p84 = por %p82, %p83
    %p85 = scmp.ne.s32.totalorder %s71, %s72
    %p86 = scmp.eq.s32.totalorder %s15, 1
    %p87 = por %p85, %p86
    %p89 = scmp.ne.s32.totalorder %s72, %s88
    %p90 = scmp.eq.s32.totalorder %s15, 0
    %p91 = por %p89, %p90
    %s92 = ssub.s32 %s17, %s31
    %p93 = scmp.eq.s32.totalorder %s92, 0
    %s95 = sadd.s32 %s94, 1
    %s96 = scalar_select %p93, %s94, %s95
    %p99 = pneg %p93
    %p100 = scmp.eq.s32.totalorder %s9, 1
    %p101 = por %p99, %p100
    %p102 = scmp.ne.s32.totalorder %s94, %s97
    %p103 = scmp.eq.s32.totalorder %s9, 0
    %p104 = por %p102, %p103
    %p105 = scmp.ne.s32.totalorder %s94, %s97
    %p106 = scmp.eq.s32.totalorder %s14, 1
    %p107 = por %p105, %p106
    %p108 = scmp.ne.s32.totalorder %s97, %s98
    %p109 = scmp.eq.s32.totalorder %s14, 0
    %p110 = por %p108, %p109
    %p111 = scmp.ne.s32.totalorder %s97, %s98
    %p112 = scmp.eq.s32.totalorder %s15, 1
    %p113 = por %p111, %p112
    %p115 = scmp.ne.s32.totalorder %s98, %s114
    %p116 = scmp.eq.s32.totalorder %s15, 0
    %p117 = por %p115, %p116
    %s118 = ssub.s32 %s16, %s35
    %s119 = ssub.s32 %s17, %s31
    %s120 = sor.u32 %s118, %s119
    %p121 = scmp.eq.s32.totalorder %s120, 0
    %s123 = sadd.s32 %s122, 1
    %s124 = scalar_select %p121, %s122, %s123
    %p127 = pneg %p121
    %p128 = scmp.eq.s32.totalorder %s9, 1
    %p129 = por %p127, %p128
    %p130 = scmp.ne.s32.totalorder %s122, %s125
    %p131 = scmp.eq.s32.totalorder %s9, 0
    %p132 = por %p130, %p131
    %p133 = scmp.ne.s32.totalorder %s122, %s125
    %p134 = scmp.eq.s32.totalorder %s14, 1
    %p135 = por %p133, %p134
    %p136 = scmp.ne.s32.totalorder %s125, %s126
    %p137 = scmp.eq.s32.totalorder %s14, 0
    %p138 = por %p136, %p137
    %p139 = scmp.ne.s32.totalorder %s125, %s126
    %p140 = scmp.eq.s32.totalorder %s15, 1
    %p141 = por %p139, %p140
    %p143 = scmp.ne.s32.totalorder %s126, %s142
    %p144 = scmp.eq.s32.totalorder %s15, 0
    %p145 = por %p143, %p144
    %p146 = scmp.le.s32.totalorder 1, %s9
    %p147 = scmp.lt.s32.totalorder %s9, 3
    %p148 = pnand %p146, %p147
    %p149 = pneg %p148
    // Predicated region
    $region9: #{_lambda_.15} parent=5 // pred_check
      _
    $region10: #{_lambda_.15} parent=5 // pred_check_branch
      %151 = sbr.rel (%p148) target = $region12
    $region11: #{_lambda_.15} parent=5 // pred_region
      %s152 = ssub.s32 %s9, 1
      // Predicated region
      $region13: #{_lambda_.15} parent=11 // pred_check
        %p153 = pneg %p110
      $region14: #{_lambda_.15} parent=11 // pred_check_branch
        %155 = sbr.rel (%p153) target = $region16
      $region15: #{_lambda_.15} parent=11 // pred_region
        %p156 = scmp.lt.s32.totalorder %s20, 0
        %s157 = scalar_select %p156, %s20, 0
        %s158 = scalar_lea.vmem %s2, %s157
      $region16: #{_lambda_.15} parent=11 // pred_fallthru
        _
    $region12: #{_lambda_.15} parent=5 // pred_fallthru
      _
    %p159 = scmp.lt.s32.totalorder %s9, 2
    // Predicated region
    $region17: #{_lambda_.15} parent=5 // pred_check
      %p160 = pneg %p159
    $region18: #{_lambda_.15} parent=5 // pred_check_branch
      %162 = sbr.rel (%p160) target = $region20
    $region19: #{_lambda_.15} parent=5 // pred_region
      // Predicated region
      $region21: #{_lambda_.15} parent=19 // pred_check
        %p163 = pneg %p50
      $region22: #{_lambda_.15} parent=19 // pred_check_branch
        %165 = sbr.rel (%p163) target = $region24
      $region23: #{_lambda_.15} parent=19 // pred_region
        %s166 = smul.u32 4, %s18
        %p167 = scmp.lt.s32.totalorder %s16, 0
        %s168 = scalar_select %p167, %s16, 0
        %p169 = scmp.lt.s32.totalorder %s166, 7
        %s170 = scalar_select %p169, %s166, 7
        %s171 = smul.addr %s168, 8
        %s172 = sadd.s32 %s170, %s171
        %s173 = smul.addr %s172, 8
        %s174 = scalar_lea.vmem %s0, %s173
        %s175 = smul.u32 4, %s18
      $region24: #{_lambda_.15} parent=19 // pred_fallthru
        _
      // Predicated region
      $region25: #{_lambda_.15} parent=19 // pred_check
        %p176 = pneg %p78
      $region26: #{_lambda_.15} parent=19 // pred_check_branch
        %178 = sbr.rel (%p176) target = $region28
      $region27: #{_lambda_.15} parent=19 // pred_region
        %s179 = smul.u32 64, %s18
        %p180 = scmp.lt.s32.totalorder %s179, 127
        %s181 = scalar_select %p180, %s179, 127
        %p182 = scmp.lt.s32.totalorder %s17, 0
        %s183 = scalar_select %p182, %s17, 0
        %s184 = sadd.s32 %s183, %s181
        %s185 = smul.addr %s184, 8
        %s186 = scalar_lea.vmem %s1, %s185
        %s187 = smul.u32 64, %s18
      $region28: #{_lambda_.15} parent=19 // pred_fallthru
        _
    $region20: #{_lambda_.15} parent=5 // pred_fallthru
      _
    %p188 = scmp.le.s32.totalorder 1, %s9
    %p189 = scmp.lt.s32.totalorder %s9, 3
    %p190 = pnand %p188, %p189
    %p191 = pneg %p190
    // Predicated region
    $region29: #{_lambda_.15} parent=5 // pred_check
      _
    $region30: #{_lambda_.15} parent=5 // pred_check_branch
      %193 = sbr.rel (%p190) target = $region32
    $region31: #{_lambda_.15} parent=5 // pred_region
      %s194 = ssub.s32 %s9, 1
      %s195 = smul.u32 4, %s21
      %p196 = scmp.lt.s32.totalorder %s19, 0
      %s197 = scalar_select %p196, %s19, 0
      %p198 = scmp.lt.s32.totalorder %s195, 7
      %s199 = scalar_select %p198, %s195, 7
      %s200 = smul.addr %s197, 8
      %s201 = sadd.s32 %s199, %s200
      %s202 = smul.addr %s201, 8
      %s203 = scalar_lea.vmem %s0, %s202
      %p204 = pneg %p56
      %p205 = pneg %p53
      %s206 = smul.u32 64, %s21
      %p207 = scmp.lt.s32.totalorder %s206, 127
      %s208 = scalar_select %p207, %s206, 127
      %p209 = scmp.lt.s32.totalorder %s20, 0
      %s210 = scalar_select %p209, %s20, 0
      %s211 = sadd.s32 %s210, %s208
      %s212 = smul.addr %s211, 8
      %s213 = scalar_lea.vmem %s1, %s212
      %p214 = pneg %p84
      %p215 = pneg %p81
      %p216 = scmp.lt.s32.totalorder %s20, 0
      %s217 = scalar_select %p216, %s20, 0
      %s218 = scalar_lea.vmem %s2, %s217
      %p219 = pneg %p110
      %p220 = pneg %p107
      %p221 = pneg %p138
      %p222 = pneg %p135
      %p223 = scmp.lt.s32.totalorder %s19, 0
      %s224 = scalar_select %p223, %s19, 0
      %p225 = scmp.lt.s32.totalorder %s20, 0
      %s226 = scalar_select %p225, %s20, 0
      %s227 = sadd.s32 %s226, %s224
      %s228 = smul.addr %s227, 8
      %s229 = scalar_lea.vmem %s3, %s228
      %s230 = smul.u32 4, %s21
      %p231 = scmp.lt.s32.totalorder %s19, 0
      %s232 = scalar_select %p231, %s19, 0
      %p233 = scmp.lt.s32.totalorder %s230, 7
      %s234 = scalar_select %p233, %s230, 7
      %s235 = smul.addr %s232, 8
      %s236 = sadd.s32 %s234, %s235
      %s237 = smul.addr %s236, 8
      %s238 = scalar_lea.vmem %s0, %s237
      %s239 = smul.u32 4, %s21
      %s240 = smul.u32 64, %s21
      %p241 = scmp.lt.s32.totalorder %s240, 127
      %s242 = scalar_select %p241, %s240, 127
      %p243 = scmp.lt.s32.totalorder %s20, 0
      %s244 = scalar_select %p243, %s20, 0
      %s245 = sadd.s32 %s244, %s242
      %s246 = smul.addr %s245, 8
      %s247 = scalar_lea.vmem %s1, %s246
      %s248 = smul.u32 64, %s21
      %p249 = scmp.lt.s32.totalorder %s20, 0
      %s250 = scalar_select %p249, %s20, 0
      %s251 = scalar_lea.vmem %s2, %s250
      %p252 = scmp.lt.s32.totalorder %s19, 0
      %s253 = scalar_select %p252, %s19, 0
      %p254 = scmp.lt.s32.totalorder %s20, 0
      %s255 = scalar_select %p254, %s20, 0
      %s256 = sadd.s32 %s255, %s253
      %s257 = smul.addr %s256, 8
      %s258 = scalar_lea.vmem %s3, %s257
      %p259 = scmp.eq.s32.totalorder %s21, 0
      // Predicated region
      $region33: #{_lambda_.15} parent=31 // pred_check
        %p260 = pneg %p259
      $region34: #{_lambda_.15} parent=31 // pred_check_branch
        %262 = sbr.rel (%p260) target = $region36
      $region35: #{_lambda_.15} parent=31 // pred_region
        %263 = vst [vmem:[#allocation2] sm:$0xff] 0.0
      $region36: #{_lambda_.15} parent=31 // pred_fallthru
        _
      %v264 = vld [vmem:[#allocation2] sm:$0xff]
      %v265 = vld [vmem:[%s238] sm:$0xff]
      %v266 = vld [vmem:[%s238 + $0x8] sm:$0xff]
      %v267 = vld [vmem:[%s238 + $0x10] sm:$0xff]
      %v268 = vld [vmem:[%s238 + $0x18] sm:$0xff]
      %v269 = vld [vmem:[%s247] sm:$0xff]
      %v270 = vld [vmem:[%s247 + $0x8] sm:$0xff]
      %v271 = vld [vmem:[%s247 + $0x10] sm:$0xff]
      %v272 = vld [vmem:[%s247 + $0x18] sm:$0xff]
      %v273 = vld [vmem:[%s247 + $0x20] sm:$0xff]
      %v274 = vld [vmem:[%s247 + $0x28] sm:$0xff]
      %v275 = vld [vmem:[%s247 + $0x30] sm:$0xff]
      %v276 = vld [vmem:[%s247 + $0x38] sm:$0xff]
      %v277 = vld [vmem:[%s247 + $0x40] sm:$0xff]
      %v278 = vld [vmem:[%s247 + $0x48] sm:$0xff]
      %v279 = vld [vmem:[%s247 + $0x50] sm:$0xff]
      %v280 = vld [vmem:[%s247 + $0x58] sm:$0xff]
      %v281 = vld [vmem:[%s247 + $0x60] sm:$0xff]
      %v282 = vld [vmem:[%s247 + $0x68] sm:$0xff]
      %v283 = vld [vmem:[%s247 + $0x70] sm:$0xff]
      %v284 = vld [vmem:[%s247 + $0x78] sm:$0xff]
      %v285 = vld [vmem:[%s247 + $0x80] sm:$0xff]
      %v286 = vld [vmem:[%s247 + $0x88] sm:$0xff]
      %v287 = vld [vmem:[%s247 + $0x90] sm:$0xff]
      %v288 = vld [vmem:[%s247 + $0x98] sm:$0xff]
      %v289 = vld [vmem:[%s247 + $0xa0] sm:$0xff]
      %v290 = vld [vmem:[%s247 + $0xa8] sm:$0xff]
      %v291 = vld [vmem:[%s247 + $0xb0] sm:$0xff]
      %v292 = vld [vmem:[%s247 + $0xb8] sm:$0xff]
      %v293 = vld [vmem:[%s247 + $0xc0] sm:$0xff]
      %v294 = vld [vmem:[%s247 + $0xc8] sm:$0xff]
      %v295 = vld [vmem:[%s247 + $0xd0] sm:$0xff]
      %v296 = vld [vmem:[%s247 + $0xd8] sm:$0xff]
      %v297 = vld [vmem:[%s247 + $0xe0] sm:$0xff]
      %v298 = vld [vmem:[%s247 + $0xe8] sm:$0xff]
      %v299 = vld [vmem:[%s247 + $0xf0] sm:$0xff]
      %v300 = vld [vmem:[%s247 + $0xf8] sm:$0xff]
      %v301 = vld [vmem:[%s247 + $0x100] sm:$0xff]
      %v302 = vld [vmem:[%s247 + $0x108] sm:$0xff]
      %v303 = vld [vmem:[%s247 + $0x110] sm:$0xff]
      %v304 = vld [vmem:[%s247 + $0x118] sm:$0xff]
      %v305 = vld [vmem:[%s247 + $0x120] sm:$0xff]
      %v306 = vld [vmem:[%s247 + $0x128] sm:$0xff]
      %v307 = vld [vmem:[%s247 + $0x130] sm:$0xff]
      %v308 = vld [vmem:[%s247 + $0x138] sm:$0xff]
      %v309 = vld [vmem:[%s247 + $0x140] sm:$0xff]
      %v310 = vld [vmem:[%s247 + $0x148] sm:$0xff]
      %v311 = vld [vmem:[%s247 + $0x150] sm:$0xff]
      %v312 = vld [vmem:[%s247 + $0x158] sm:$0xff]
      %v313 = vld [vmem:[%s247 + $0x160] sm:$0xff]
      %v314 = vld [vmem:[%s247 + $0x168] sm:$0xff]
      %v315 = vld [vmem:[%s247 + $0x170] sm:$0xff]
      %v316 = vld [vmem:[%s247 + $0x178] sm:$0xff]
      %v317 = vld [vmem:[%s247 + $0x180] sm:$0xff]
      %v318 = vld [vmem:[%s247 + $0x188] sm:$0xff]
      %v319 = vld [vmem:[%s247 + $0x190] sm:$0xff]
      %v320 = vld [vmem:[%s247 + $0x198] sm:$0xff]
      %v321 = vld [vmem:[%s247 + $0x1a0] sm:$0xff]
      %v322 = vld [vmem:[%s247 + $0x1a8] sm:$0xff]
      %v323 = vld [vmem:[%s247 + $0x1b0] sm:$0xff]
      %v324 = vld [vmem:[%s247 + $0x1b8] sm:$0xff]
      %v325 = vld [vmem:[%s247 + $0x1c0] sm:$0xff]
      %v326 = vld [vmem:[%s247 + $0x1c8] sm:$0xff]
      %v327 = vld [vmem:[%s247 + $0x1d0] sm:$0xff]
      %v328 = vld [vmem:[%s247 + $0x1d8] sm:$0xff]
      %v329 = vld [vmem:[%s247 + $0x1e0] sm:$0xff]
      %v330 = vld [vmem:[%s247 + $0x1e8] sm:$0xff]
      %v331 = vld [vmem:[%s247 + $0x1f0] sm:$0xff]
      %v332 = vld [vmem:[%s247 + $0x1f8] sm:$0xff]
      %333 = vmatpush.msra.mxu0 %v284
      %334 = vmatpush.msra.mxu0 %v283
      %335 = vmatpush.msra.mxu0 %v282
      %336 = vmatpush.msra.mxu0 %v281
      %337 = vmatpush.msra.mxu0 %v280
      %338 = vmatpush.msra.mxu0 %v279
      %339 = vmatpush.msra.mxu0 %v278
      %340 = vmatpush.msra.mxu0 %v277
      %341 = vmatpush.msra.mxu0 %v276
      %342 = vmatpush.msra.mxu0 %v275
      %343 = vmatpush.msra.mxu0 %v274
      %344 = vmatpush.msra.mxu0 %v273
      %345 = vmatpush.msra.mxu0 %v272
      %346 = vmatpush.msra.mxu0 %v271
      %347 = vmatpush.msra.mxu0 %v270
      %348 = vmatpush.msra.mxu0 %v269
      %349 = vmatmul.f32.gmra.mxu0 %v265
      %v350 = vpop.f32.mrf.mxu0
      %v351 = vadd.f32 0.0, %v350
      %352 = vdwg.mxu0
      %353 = vmatpush.msra.mxu0 %v300
      %354 = vmatpush.msra.mxu0 %v299
      %355 = vmatpush.msra.mxu0 %v298
      %356 = vmatpush.msra.mxu0 %v297
      %357 = vmatpush.msra.mxu0 %v296
      %358 = vmatpush.msra.mxu0 %v295
      %359 = vmatpush.msra.mxu0 %v294
      %360 = vmatpush.msra.mxu0 %v293
      %361 = vmatpush.msra.mxu0 %v292
      %362 = vmatpush.msra.mxu0 %v291
      %363 = vmatpush.msra.mxu0 %v290
      %364 = vmatpush.msra.mxu0 %v289
      %365 = vmatpush.msra.mxu0 %v288
      %366 = vmatpush.msra.mxu0 %v287
      %367 = vmatpush.msra.mxu0 %v286
      %368 = vmatpush.msra.mxu0 %v285
      %369 = vmatmul.f32.gmra.mxu0 %v266
      %v370 = vpop.f32.mrf.mxu0
      %v371 = vadd.f32 %v351, %v370
      %372 = vdwg.mxu0
      %373 = vmatpush.msra.mxu0 %v316
      %374 = vmatpush.msra.mxu0 %v315
      %375 = vmatpush.msra.mxu0 %v314
      %376 = vmatpush.msra.mxu0 %v313
      %377 = vmatpush.msra.mxu0 %v312
      %378 = vmatpush.msra.mxu0 %v311
      %379 = vmatpush.msra.mxu0 %v310
      %380 = vmatpush.msra.mxu0 %v309
      %381 = vmatpush.msra.mxu0 %v308
      %382 = vmatpush.msra.mxu0 %v307
      %383 = vmatpush.msra.mxu0 %v306
      %384 = vmatpush.msra.mxu0 %v305
      %385 = vmatpush.msra.mxu0 %v304
      %386 = vmatpush.msra.mxu0 %v303
      %387 = vmatpush.msra.mxu0 %v302
      %388 = vmatpush.msra.mxu0 %v301
      %389 = vmatmul.f32.gmra.mxu0 %v267
      %v390 = vpop.f32.mrf.mxu0
      %v391 = vadd.f32 %v371, %v390
      %392 = vdwg.mxu0
      %393 = vmatpush.msra.mxu0 %v332
      %394 = vmatpush.msra.mxu0 %v331
      %395 = vmatpush.msra.mxu0 %v330
      %396 = vmatpush.msra.mxu0 %v329
      %397 = vmatpush.msra.mxu0 %v328
      %398 = vmatpush.msra.mxu0 %v327
      %399 = vmatpush.msra.mxu0 %v326
      %400 = vmatpush.msra.mxu0 %v325
      %401 = vmatpush.msra.mxu0 %v324
      %402 = vmatpush.msra.mxu0 %v323
      %403 = vmatpush.msra.mxu0 %v322
      %404 = vmatpush.msra.mxu0 %v321
      %405 = vmatpush.msra.mxu0 %v320
      %406 = vmatpush.msra.mxu0 %v319
      %407 = vmatpush.msra.mxu0 %v318
      %408 = vmatpush.msra.mxu0 %v317
      %409 = vmatmul.f32.gmra.mxu0 %v268
      %v410 = vpop.f32.mrf.mxu0
      %v411 = vadd.f32 %v391, %v410
      %412 = vdwg.mxu0
      %v413 = vadd.f32 %v264, %v411
      %414 = vst [vmem:[#allocation2] sm:$0xff] %v413
      %p415 = scmp.eq.s32.totalorder %s21, 1
      // Predicated region
      $region37: #{_lambda_.15} parent=31 // pred_check
        %p416 = pneg %p415
      $region38: #{_lambda_.15} parent=31 // pred_check_branch
        %418 = sbr.rel (%p416) target = $region40
      $region39: #{_lambda_.15} parent=31 // pred_region
        %v419 = vld [vmem:[#allocation2] sm:$0xff]
        %v420 = vld [vmem:[%s251] sm:$0x1]
        %v422 = vperm.slane %v420, 0
        %v424 = vadd.f32 %v419, %v422
        %425 = vst [vmem:[%s258] sm:$0xff] %v424
      $region40: #{_lambda_.15} parent=31 // pred_fallthru
        _
      %p426 = scmp.lt.s32.totalorder %s19, 0
      %s427 = scalar_select %p426, %s19, 0
      %p428 = scmp.lt.s32.totalorder %s20, 0
      %s429 = scalar_select %p428, %s20, 0
      %s430 = sadd.s32 %s429, %s427
      %s431 = smul.addr %s430, 8
      %s432 = scalar_lea.vmem %s3, %s431
      // Predicated region
      $region41: #{_lambda_.15} parent=31 // pred_check
        %p433 = pneg %p135
      $region42: #{_lambda_.15} parent=31 // pred_check_branch
        %435 = sbr.rel (%p433) target = $region44
      $region43: #{_lambda_.15} parent=31 // pred_region
        _
      $region44: #{_lambda_.15} parent=31 // pred_fallthru
        _
      // Predicated region
      $region45: #{_lambda_.15} parent=31 // pred_check
        %p436 = pneg %p135
      $region46: #{_lambda_.15} parent=31 // pred_check_branch
        %438 = sbr.rel (%p436) target = $region48
      $region47: #{_lambda_.15} parent=31 // pred_region
        %p439 = scmp.lt.s32.totalorder %s19, 0
        %s440 = scalar_select %p439, %s19, 0
        %p441 = scmp.lt.s32.totalorder %s20, 0
        %s442 = scalar_select %p441, %s20, 0
        %s443 = sadd.s32 %s442, %s440
        %s444 = smul.addr %s443, 8
        %s445 = scalar_lea.vmem %s3, %s444
      $region48: #{_lambda_.15} parent=31 // pred_fallthru
        _
    $region32: #{_lambda_.15} parent=5 // pred_fallthru
      _
    %p446 = scmp.le.s32.totalorder 2, %s9
    // Predicated region
    $region49: #{_lambda_.15} parent=5 // pred_check
      %p447 = pneg %p446
    $region50: #{_lambda_.15} parent=5 // pred_check_branch
      %449 = sbr.rel (%p447) target = $region52
    $region51: #{_lambda_.15} parent=5 // pred_region
      %s450 = ssub.s32 %s9, 2
    $region52: #{_lambda_.15} parent=5 // pred_fallthru
      _
  $region6: #{_lambda_.15} parent=0 // loop_footer
    %s13 = sadd.s32 1, %s9
  $region7: #{_lambda_.15} parent=0 // loop_footer_branch
    %8 = sbr.rel target = $region3
  $region8: #{_lambda_.15} parent=0 // loop_exit
    _

</llo_original>
